<compile_context>
chip_gen: v5e
topology: v5e:2x2
jax: 0.10.0
libtpu: 0.0.40
codegen_flags: <defaults>
</compile_context>

<pallas_src>
import jax
import jax.numpy as jnp
from jax.experimental import pallas as pl
from jax.experimental.pallas import tpu as pltpu


# ------------------------------ Pallas kernel ------------------------------ #

def _fused_forward_kernel(
    x_ref,      # (1, 28, 28) f32   current image
    a1_ref,     # (5, 28, 288) bf16 conv1 width-banded weights (one per kernel row)
    b1_ref,     # (1, 288) f32      conv1 bias tiled over output width
    r1_ref,     # (2, 12, 24) f32   pool1 row (even/odd) selection
    c1_ref,     # (2, 288, 144) f32 pool1 lane (even/odd) selection
    a2_ref,     # (5, 144, 224) bf16 conv2 width-banded weights
    b2_ref,     # (1, 224) f32      conv2 bias tiled over output width
    r2_ref,     # (2, 4, 8) f32     pool2 row selection
    c2_ref,     # (2, 224, 112) f32 pool2 lane selection
    w1_ref,     # (4, 112, 128) bf16 fc1 weight blocks (flatten order folded in)
    fb1_ref,    # (1, 128) f32
    w2_ref,     # (128, 128) bf16
    fb2_ref,    # (1, 128) f32
    w3_ref,     # (128, 128) bf16
    fb3_ref,    # (1, 128) f32
    o_ref,      # (1, 1, 128) f32
):
    f32 = jnp.float32
    bf16 = jnp.bfloat16

    x = x_ref[0]                                                   # (28, 28)

    # ---- conv1 (1->12, 5x5): 5 shifted banded matmuls, lanes = (wo, co) ----
    y1 = jnp.dot(x[0:24, :].astype(bf16), a1_ref[0], preferred_element_type=f32)
    for ki in range(1, 5):
        y1 = y1 + jnp.dot(x[ki:ki + 24, :].astype(bf16), a1_ref[ki],
                          preferred_element_type=f32)
    y1 = jnp.maximum(y1 + b1_ref[...], 0.0)                        # (24, 288)

    # ---- maxpool 2x2 via exact 0/1 selection matmuls + elementwise max ----
    t1 = jnp.maximum(jnp.dot(r1_ref[0], y1, preferred_element_type=f32),
                     jnp.dot(r1_ref[1], y1, preferred_element_type=f32))   # (12, 288)
    p1 = jnp.maximum(jnp.dot(t1, c1_ref[0], preferred_element_type=f32),
                     jnp.dot(t1, c1_ref[1], preferred_element_type=f32))   # (12, 144)

    # ---- conv2 (12->28, 5x5): 5 shifted banded matmuls, lanes = (wo, co) ----
    y2 = jnp.dot(p1[0:8, :].astype(bf16), a2_ref[0], preferred_element_type=f32)
    for ki in range(1, 5):
        y2 = y2 + jnp.dot(p1[ki:ki + 8, :].astype(bf16), a2_ref[ki],
                          preferred_element_type=f32)
    y2 = jnp.maximum(y2 + b2_ref[...], 0.0)                        # (8, 224)

    # ---- maxpool 2x2 ----
    t2 = jnp.maximum(jnp.dot(r2_ref[0], y2, preferred_element_type=f32),
                     jnp.dot(r2_ref[1], y2, preferred_element_type=f32))   # (4, 224)
    p2 = jnp.maximum(jnp.dot(t2, c2_ref[0], preferred_element_type=f32),
                     jnp.dot(t2, c2_ref[1], preferred_element_type=f32))   # (4, 112)

    # ---- fc1 (PyTorch flatten order folded into per-row blocks), fc2, fc3 ----
    h = jnp.dot(p2[0:1, :].astype(bf16), w1_ref[0], preferred_element_type=f32)
    for r in range(1, 4):
        h = h + jnp.dot(p2[r:r + 1, :].astype(bf16), w1_ref[r],
                        preferred_element_type=f32)
    h = jnp.maximum(h + fb1_ref[...], 0.0)                         # (1, 128)

    h = jnp.maximum(jnp.dot(h.astype(bf16), w2_ref[...],
                            preferred_element_type=f32) + fb2_ref[...], 0.0)
    out = jnp.dot(h.astype(bf16), w3_ref[...],
                  preferred_element_type=f32) + fb3_ref[...]       # (1, 128)
    o_ref[0] = out


# -------------------- weight preparation (plain JAX, tiny) ------------------ #

def _prepare_constants(params):
    """Reshape PyTorch-layout weights into kernel-friendly, lane-dense blocks."""
    w1, b1, w2, b2, fw1, fb1, fw2, fb2, fw3, fb3 = params
    f32, bf16 = jnp.float32, jnp.bfloat16

    kj = jnp.arange(5)

    # conv1: A1[ki][wi, wo*12+co] = w1[co, 0, ki, wi-wo]   (0 <= wi-wo < 5)
    wi = jnp.arange(28)
    wo = jnp.arange(24)
    band1 = (wi[None, :, None] == wo[None, None, :] + kj[:, None, None]).astype(f32)
    a1 = jnp.einsum('jab,cij->iabc', band1, w1[:, 0].astype(f32))  # (ki, wi, wo, co)
    a1 = a1.reshape(5, 28, 24 * 12).astype(bf16)
    b1t = jnp.tile(b1.astype(f32), 24).reshape(1, 288)

    # conv2: A2[ki][x*12+ci, j*28+co] = w2[co, ci, ki, x-j] (0 <= x-j < 5)
    xi = jnp.arange(12)
    jo = jnp.arange(8)
    band2 = (xi[None, :, None] == jo[None, None, :] + kj[:, None, None]).astype(f32)
    a2 = jnp.einsum('kxj,ocik->ixcjo', band2, w2.astype(f32))      # (ki, x, ci, j, co)
    a2 = a2.reshape(5, 144, 224).astype(bf16)
    b2t = jnp.tile(b2.astype(f32), 8).reshape(1, 224)

    # exact 0/1 pooling selection matrices (f32 so the pick is bit-exact)
    def row_sel(n_out):
        r = jnp.arange(n_out)[:, None]
        c = jnp.arange(2 * n_out)[None, :]
        return jnp.stack([(c == 2 * r).astype(f32), (c == 2 * r + 1).astype(f32)])

    def lane_sel(n_wout, n_c):
        l = jnp.arange(2 * n_wout * n_c)[:, None]
        m = jnp.arange(n_wout * n_c)[None, :]
        q, cc = m // n_c, m % n_c
        return jnp.stack([(l == 2 * q * n_c + cc).astype(f32),
                          (l == (2 * q + 1) * n_c + cc).astype(f32)])

    r1 = row_sel(12)        # (2, 12, 24)
    c1 = lane_sel(12, 12)   # (2, 288, 144)
    r2 = row_sel(4)         # (2, 4, 8)
    c2 = lane_sel(4, 28)    # (2, 224, 112)

    # fc1: fold PyTorch (C, H, W) flatten order into per-pooled-row blocks,
    # pad all fc widths up to 128 lanes (zero padding is inert through ReLU).
    w1blk = fw1.astype(f32).reshape(120, 28, 4, 4).transpose(2, 3, 1, 0)  # (hp, wp, ci, o)
    w1blk = jnp.pad(w1blk.reshape(4, 112, 120), ((0, 0), (0, 0), (0, 8))).astype(bf16)
    fb1p = jnp.pad(fb1.astype(f32), (0, 8)).reshape(1, 128)
    w2p = jnp.pad(fw2.astype(f32).T, ((0, 8), (0, 44))).astype(bf16)      # (128, 128)
    fb2p = jnp.pad(fb2.astype(f32), (0, 44)).reshape(1, 128)
    w3p = jnp.pad(fw3.astype(f32).T, ((0, 44), (0, 118))).astype(bf16)    # (128, 128)
    fb3p = jnp.pad(fb3.astype(f32), (0, 118)).reshape(1, 128)

    return (a1, b1t, r1, c1, a2, b2t, r2, c2, w1blk, fb1p, w2p, fb2p, w3p, fb3p)


# --------------------------------- forward --------------------------------- #

def neuralnet_forward(x, params):
    """Matches NeuralNet.forward for NCHW input (N, 1, 28, 28)."""
    N, C, H, W = x.shape
    assert (C, H, W) == (1, 28, 28)
    consts = _prepare_constants(params)
    x2 = x.reshape(N, 28, 28).astype(jnp.float32)

    def const_spec(a):
        zeros = (0,) * a.ndim
        return pl.BlockSpec(a.shape, lambda i, z=zeros: z)   # VMEM-resident block

    flops_per_img = 2 * (5 * 24 * 28 * 288 + 2 * 12 * 24 * 288 + 2 * 12 * 288 * 144
                         + 5 * 8 * 144 * 224 + 2 * 4 * 8 * 224 + 2 * 4 * 224 * 112
                         + 4 * 112 * 128 + 2 * 128 * 128)
    const_bytes = sum(int(a.size) * a.dtype.itemsize for a in consts)
    cost = pl.CostEstimate(flops=N * flops_per_img, transcendentals=0,
                           bytes_accessed=N * (28 * 28 + 128) * 4 + const_bytes)

    out = pl.pallas_call(
        _fused_forward_kernel,
        out_shape=jax.ShapeDtypeStruct((N, 1, 128), jnp.float32),
        grid=(N,),
        in_specs=[pl.BlockSpec((1, 28, 28), lambda i: (i, 0, 0))]
                 + [const_spec(a) for a in consts],
        out_specs=pl.BlockSpec((1, 1, 128), lambda i: (i, 0, 0)),
        compiler_params=pltpu.CompilerParams(dimension_semantics=("parallel",)),
        cost_estimate=cost,
    )(x2, *consts)
    return out[:, 0, :10]


# ------------------------------ pure-JAX reference -------------------------- #

def reference_forward(x, params):
    w1, b1, w2, b2, fw1, fb1, fw2, fb2, fw3, fb3 = params

    def conv(z, w, b):
        y = jax.lax.conv_general_dilated(
            z, w, (1, 1), 'VALID', dimension_numbers=('NCHW', 'OIHW', 'NCHW'))
        return jax.nn.relu(y + b[None, :, None, None])

    def pool(z):
        return jax.lax.reduce_window(z, -jnp.inf, jax.lax.max,
                                     (1, 1, 2, 2), (1, 1, 2, 2), 'VALID')

    y = pool(conv(x, w1, b1))
    y = pool(conv(y, w2, b2))
    f = y.reshape(y.shape[0], -1)
    h = jax.nn.relu(f @ fw1.T + fb1)
    h = jax.nn.relu(h @ fw2.T + fb2)
    return h @ fw3.T + fb3


def init_params(key):
    """Deterministic PyTorch-style (kaiming-uniform-ish) initialization."""
    def uniform(k, shape, fan_in):
        bound = 1.0 / (fan_in ** 0.5)
        return jax.random.uniform(k, shape, jnp.float32, -bound, bound)

    ks = jax.random.split(key, 10)
    w1 = uniform(ks[0], (12, 1, 5, 5), 1 * 5 * 5)
    b1 = uniform(ks[1], (12,), 1 * 5 * 5)
    w2 = uniform(ks[2], (28, 12, 5, 5), 12 * 5 * 5)
    b2 = uniform(ks[3], (28,), 12 * 5 * 5)
    fw1 = uniform(ks[4], (120, 448), 448)
    fb1 = uniform(ks[5], (120,), 448)
    fw2 = uniform(ks[6], (84, 120), 120)
    fb2 = uniform(ks[7], (84,), 120)
    fw3 = uniform(ks[8], (10, 84), 84)
    fb3 = uniform(ks[9], (10,), 84)
    return (w1, b1, w2, b2, fw1, fb1, fw2, fb2, fw3, fb3)


if __name__ == "__main__":
    key = jax.random.PRNGKey(0)
    pkey, xkey = jax.random.split(key)
    params = init_params(pkey)
    x = jax.random.normal(xkey, (2, 1, 28, 28), jnp.float32)   # MNIST-like NCHW

    out = jax.jit(neuralnet_forward)(x, params)
    out = jax.block_until_ready(out)
    assert out.shape == (2, 10)

    ref = reference_forward(x, params)
    max_diff = float(jnp.max(jnp.abs(out - ref)))
    if not jnp.allclose(out, ref, atol=5e-2, rtol=5e-2):
        raise AssertionError(f"Pallas output mismatch vs reference, max|diff|={max_diff}")

    print("KERNEL_OK")
</pallas_src>

<mosaic_0001>
module attributes {stable_mosaic.version = 11 : i64} {
  func.func @_fused_forward_kernel(%arg0: i32, %arg1: memref<1x28x28xf32, #tpu.memory_space<vmem>>, %arg2: memref<5x28x288xbf16, #tpu.memory_space<vmem>>, %arg3: memref<1x288xf32, #tpu.memory_space<vmem>>, %arg4: memref<2x12x24xf32, #tpu.memory_space<vmem>>, %arg5: memref<2x288x144xf32, #tpu.memory_space<vmem>>, %arg6: memref<5x144x224xbf16, #tpu.memory_space<vmem>>, %arg7: memref<1x224xf32, #tpu.memory_space<vmem>>, %arg8: memref<2x4x8xf32, #tpu.memory_space<vmem>>, %arg9: memref<2x224x112xf32, #tpu.memory_space<vmem>>, %arg10: memref<4x112x128xbf16, #tpu.memory_space<vmem>>, %arg11: memref<1x128xf32, #tpu.memory_space<vmem>>, %arg12: memref<128x128xbf16, #tpu.memory_space<vmem>>, %arg13: memref<1x128xf32, #tpu.memory_space<vmem>>, %arg14: memref<128x128xbf16, #tpu.memory_space<vmem>>, %arg15: memref<1x128xf32, #tpu.memory_space<vmem>>, %arg16: memref<1x1x128xf32, #tpu.memory_space<vmem>>) attributes {dimension_semantics = [#tpu.dimension_semantics<parallel>], iteration_bounds = array<i64: 2>, scalar_prefetch = 0 : i64, scratch_operands = 0 : i64, tpu.core_type = #tpu.core_type<tc>, window_params = [{transform_indices = @transform_0, window_bounds = array<i64: 1, 28, 28>}, {pipeline_mode = #tpu.pipeline_mode<synchronous>, transform_indices = @transform_1, window_bounds = array<i64: 5, 28, 288>}, {pipeline_mode = #tpu.pipeline_mode<synchronous>, transform_indices = @transform_2, window_bounds = array<i64: 1, 288>}, {pipeline_mode = #tpu.pipeline_mode<synchronous>, transform_indices = @transform_3, window_bounds = array<i64: 2, 12, 24>}, {pipeline_mode = #tpu.pipeline_mode<synchronous>, transform_indices = @transform_4, window_bounds = array<i64: 2, 288, 144>}, {pipeline_mode = #tpu.pipeline_mode<synchronous>, transform_indices = @transform_5, window_bounds = array<i64: 5, 144, 224>}, {pipeline_mode = #tpu.pipeline_mode<synchronous>, transform_indices = @transform_6, window_bounds = array<i64: 1, 224>}, {pipeline_mode = #tpu.pipeline_mode<synchronous>, transform_indices = @transform_7, window_bounds = array<i64: 2, 4, 8>}, {pipeline_mode = #tpu.pipeline_mode<synchronous>, transform_indices = @transform_8, window_bounds = array<i64: 2, 224, 112>}, {pipeline_mode = #tpu.pipeline_mode<synchronous>, transform_indices = @transform_9, window_bounds = array<i64: 4, 112, 128>}, {pipeline_mode = #tpu.pipeline_mode<synchronous>, transform_indices = @transform_10, window_bounds = array<i64: 1, 128>}, {pipeline_mode = #tpu.pipeline_mode<synchronous>, transform_indices = @transform_11, window_bounds = array<i64: 128, 128>}, {pipeline_mode = #tpu.pipeline_mode<synchronous>, transform_indices = @transform_12, window_bounds = array<i64: 1, 128>}, {pipeline_mode = #tpu.pipeline_mode<synchronous>, transform_indices = @transform_13, window_bounds = array<i64: 128, 128>}, {pipeline_mode = #tpu.pipeline_mode<synchronous>, transform_indices = @transform_14, window_bounds = array<i64: 1, 128>}, {transform_indices = @transform_15, window_bounds = array<i64: 1, 1, 128>}]} {
    %c0 = arith.constant 0 : index
    %c0_0 = arith.constant 0 : index
    %c0_1 = arith.constant 0 : index
    %0 = vector.load %arg1[%c0, %c0_0, %c0_1] : memref<1x28x28xf32, #tpu.memory_space<vmem>>, vector<1x28x28xf32>
    %1 = vector.shape_cast %0 : vector<1x28x28xf32> to vector<28x28xf32>
    %2 = vector.extract_strided_slice %1 {offsets = [0, 0], sizes = [24, 28], strides = [1, 1]} : vector<28x28xf32> to vector<24x28xf32>
    %3 = arith.truncf %2 : vector<24x28xf32> to vector<24x28xbf16>
    %c0_2 = arith.constant 0 : index
    %c0_3 = arith.constant 0 : index
    %c0_4 = arith.constant 0 : index
    %4 = vector.load %arg2[%c0_2, %c0_3, %c0_4] : memref<5x28x288xbf16, #tpu.memory_space<vmem>>, vector<1x28x288xbf16>
    %5 = vector.shape_cast %4 : vector<1x28x288xbf16> to vector<28x288xbf16>
    %cst = arith.constant dense<0.000000e+00> : vector<24x288xf32>
    %6 = tpu.matmul %3, %5, %cst {dimension_numbers = #tpu.dot_dimension_numbers<[1], [0], [0], [1], [0, 0, 1, 1], [], []>} : vector<24x28xbf16>, vector<28x288xbf16>, vector<24x288xf32> -> vector<24x288xf32>
    %7 = vector.extract_strided_slice %1 {offsets = [1, 0], sizes = [24, 28], strides = [1, 1]} : vector<28x28xf32> to vector<24x28xf32>
    %8 = arith.truncf %7 : vector<24x28xf32> to vector<24x28xbf16>
    %c1 = arith.constant 1 : index
    %c0_5 = arith.constant 0 : index
    %c0_6 = arith.constant 0 : index
    %9 = vector.load %arg2[%c1, %c0_5, %c0_6] : memref<5x28x288xbf16, #tpu.memory_space<vmem>>, vector<1x28x288xbf16>
    %10 = vector.shape_cast %9 : vector<1x28x288xbf16> to vector<28x288xbf16>
    %cst_7 = arith.constant dense<0.000000e+00> : vector<24x288xf32>
    %11 = tpu.matmul %8, %10, %cst_7 {dimension_numbers = #tpu.dot_dimension_numbers<[1], [0], [0], [1], [0, 0, 1, 1], [], []>} : vector<24x28xbf16>, vector<28x288xbf16>, vector<24x288xf32> -> vector<24x288xf32>
    %12 = arith.addf %6, %11 : vector<24x288xf32>
    %13 = vector.extract_strided_slice %1 {offsets = [2, 0], sizes = [24, 28], strides = [1, 1]} : vector<28x28xf32> to vector<24x28xf32>
    %14 = arith.truncf %13 : vector<24x28xf32> to vector<24x28xbf16>
    %c2 = arith.constant 2 : index
    %c0_8 = arith.constant 0 : index
    %c0_9 = arith.constant 0 : index
    %15 = vector.load %arg2[%c2, %c0_8, %c0_9] : memref<5x28x288xbf16, #tpu.memory_space<vmem>>, vector<1x28x288xbf16>
    %16 = vector.shape_cast %15 : vector<1x28x288xbf16> to vector<28x288xbf16>
    %cst_10 = arith.constant dense<0.000000e+00> : vector<24x288xf32>
    %17 = tpu.matmul %14, %16, %cst_10 {dimension_numbers = #tpu.dot_dimension_numbers<[1], [0], [0], [1], [0, 0, 1, 1], [], []>} : vector<24x28xbf16>, vector<28x288xbf16>, vector<24x288xf32> -> vector<24x288xf32>
    %18 = arith.addf %12, %17 : vector<24x288xf32>
    %19 = vector.extract_strided_slice %1 {offsets = [3, 0], sizes = [24, 28], strides = [1, 1]} : vector<28x28xf32> to vector<24x28xf32>
    %20 = arith.truncf %19 : vector<24x28xf32> to vector<24x28xbf16>
    %c3 = arith.constant 3 : index
    %c0_11 = arith.constant 0 : index
    %c0_12 = arith.constant 0 : index
    %21 = vector.load %arg2[%c3, %c0_11, %c0_12] : memref<5x28x288xbf16, #tpu.memory_space<vmem>>, vector<1x28x288xbf16>
    %22 = vector.shape_cast %21 : vector<1x28x288xbf16> to vector<28x288xbf16>
    %cst_13 = arith.constant dense<0.000000e+00> : vector<24x288xf32>
    %23 = tpu.matmul %20, %22, %cst_13 {dimension_numbers = #tpu.dot_dimension_numbers<[1], [0], [0], [1], [0, 0, 1, 1], [], []>} : vector<24x28xbf16>, vector<28x288xbf16>, vector<24x288xf32> -> vector<24x288xf32>
    %24 = arith.addf %18, %23 : vector<24x288xf32>
    %25 = vector.extract_strided_slice %1 {offsets = [4, 0], sizes = [24, 28], strides = [1, 1]} : vector<28x28xf32> to vector<24x28xf32>
    %26 = arith.truncf %25 : vector<24x28xf32> to vector<24x28xbf16>
    %c4 = arith.constant 4 : index
    %c0_14 = arith.constant 0 : index
    %c0_15 = arith.constant 0 : index
    %27 = vector.load %arg2[%c4, %c0_14, %c0_15] : memref<5x28x288xbf16, #tpu.memory_space<vmem>>, vector<1x28x288xbf16>
    %28 = vector.shape_cast %27 : vector<1x28x288xbf16> to vector<28x288xbf16>
    %cst_16 = arith.constant dense<0.000000e+00> : vector<24x288xf32>
    %29 = tpu.matmul %26, %28, %cst_16 {dimension_numbers = #tpu.dot_dimension_numbers<[1], [0], [0], [1], [0, 0, 1, 1], [], []>} : vector<24x28xbf16>, vector<28x288xbf16>, vector<24x288xf32> -> vector<24x288xf32>
    %30 = arith.addf %24, %29 : vector<24x288xf32>
    %c0_17 = arith.constant 0 : index
    %c0_18 = arith.constant 0 : index
    %31 = vector.load %arg3[%c0_17, %c0_18] : memref<1x288xf32, #tpu.memory_space<vmem>>, vector<1x288xf32>
    %32 = vector.broadcast %31 : vector<1x288xf32> to vector<24x288xf32>
    %33 = arith.addf %30, %32 : vector<24x288xf32>
    %cst_19 = arith.constant 0.000000e+00 : f32
    %34 = vector.broadcast %cst_19 : f32 to vector<24x288xf32>
    %35 = arith.maximumf %33, %34 : vector<24x288xf32>
    %c0_20 = arith.constant 0 : index
    %c0_21 = arith.constant 0 : index
    %c0_22 = arith.constant 0 : index
    %36 = vector.load %arg4[%c0_20, %c0_21, %c0_22] : memref<2x12x24xf32, #tpu.memory_space<vmem>>, vector<1x12x24xf32>
    %37 = vector.shape_cast %36 : vector<1x12x24xf32> to vector<12x24xf32>
    %cst_23 = arith.constant dense<0.000000e+00> : vector<12x288xf32>
    %38 = tpu.matmul %37, %35, %cst_23 {dimension_numbers = #tpu.dot_dimension_numbers<[1], [0], [0], [1], [0, 0, 1, 1], [], []>} : vector<12x24xf32>, vector<24x288xf32>, vector<12x288xf32> -> vector<12x288xf32>
    %c1_24 = arith.constant 1 : index
    %c0_25 = arith.constant 0 : index
    %c0_26 = arith.constant 0 : index
    %39 = vector.load %arg4[%c1_24, %c0_25, %c0_26] : memref<2x12x24xf32, #tpu.memory_space<vmem>>, vector<1x12x24xf32>
    %40 = vector.shape_cast %39 : vector<1x12x24xf32> to vector<12x24xf32>
    %cst_27 = arith.constant dense<0.000000e+00> : vector<12x288xf32>
    %41 = tpu.matmul %40, %35, %cst_27 {dimension_numbers = #tpu.dot_dimension_numbers<[1], [0], [0], [1], [0, 0, 1, 1], [], []>} : vector<12x24xf32>, vector<24x288xf32>, vector<12x288xf32> -> vector<12x288xf32>
    %42 = arith.maximumf %38, %41 : vector<12x288xf32>
    %c0_28 = arith.constant 0 : index
    %c0_29 = arith.constant 0 : index
    %c0_30 = arith.constant 0 : index
    %43 = vector.load %arg5[%c0_28, %c0_29, %c0_30] : memref<2x288x144xf32, #tpu.memory_space<vmem>>, vector<1x288x144xf32>
    %44 = vector.shape_cast %43 : vector<1x288x144xf32> to vector<288x144xf32>
    %cst_31 = arith.constant dense<0.000000e+00> : vector<12x144xf32>
    %45 = tpu.matmul %42, %44, %cst_31 {dimension_numbers = #tpu.dot_dimension_numbers<[1], [0], [0], [1], [0, 0, 1, 1], [], []>} : vector<12x288xf32>, vector<288x144xf32>, vector<12x144xf32> -> vector<12x144xf32>
    %c1_32 = arith.constant 1 : index
    %c0_33 = arith.constant 0 : index
    %c0_34 = arith.constant 0 : index
    %46 = vector.load %arg5[%c1_32, %c0_33, %c0_34] : memref<2x288x144xf32, #tpu.memory_space<vmem>>, vector<1x288x144xf32>
    %47 = vector.shape_cast %46 : vector<1x288x144xf32> to vector<288x144xf32>
    %cst_35 = arith.constant dense<0.000000e+00> : vector<12x144xf32>
    %48 = tpu.matmul %42, %47, %cst_35 {dimension_numbers = #tpu.dot_dimension_numbers<[1], [0], [0], [1], [0, 0, 1, 1], [], []>} : vector<12x288xf32>, vector<288x144xf32>, vector<12x144xf32> -> vector<12x144xf32>
    %49 = arith.maximumf %45, %48 : vector<12x144xf32>
    %50 = vector.extract_strided_slice %49 {offsets = [0, 0], sizes = [8, 144], strides = [1, 1]} : vector<12x144xf32> to vector<8x144xf32>
    %51 = arith.truncf %50 : vector<8x144xf32> to vector<8x144xbf16>
    %c0_36 = arith.constant 0 : index
    %c0_37 = arith.constant 0 : index
    %c0_38 = arith.constant 0 : index
    %52 = vector.load %arg6[%c0_36, %c0_37, %c0_38] : memref<5x144x224xbf16, #tpu.memory_space<vmem>>, vector<1x144x224xbf16>
    %53 = vector.shape_cast %52 : vector<1x144x224xbf16> to vector<144x224xbf16>
    %cst_39 = arith.constant dense<0.000000e+00> : vector<8x224xf32>
    %54 = tpu.matmul %51, %53, %cst_39 {dimension_numbers = #tpu.dot_dimension_numbers<[1], [0], [0], [1], [0, 0, 1, 1], [], []>} : vector<8x144xbf16>, vector<144x224xbf16>, vector<8x224xf32> -> vector<8x224xf32>
    %55 = vector.extract_strided_slice %49 {offsets = [1, 0], sizes = [8, 144], strides = [1, 1]} : vector<12x144xf32> to vector<8x144xf32>
    %56 = arith.truncf %55 : vector<8x144xf32> to vector<8x144xbf16>
    %c1_40 = arith.constant 1 : index
    %c0_41 = arith.constant 0 : index
    %c0_42 = arith.constant 0 : index
    %57 = vector.load %arg6[%c1_40, %c0_41, %c0_42] : memref<5x144x224xbf16, #tpu.memory_space<vmem>>, vector<1x144x224xbf16>
    %58 = vector.shape_cast %57 : vector<1x144x224xbf16> to vector<144x224xbf16>
    %cst_43 = arith.constant dense<0.000000e+00> : vector<8x224xf32>
    %59 = tpu.matmul %56, %58, %cst_43 {dimension_numbers = #tpu.dot_dimension_numbers<[1], [0], [0], [1], [0, 0, 1, 1], [], []>} : vector<8x144xbf16>, vector<144x224xbf16>, vector<8x224xf32> -> vector<8x224xf32>
    %60 = arith.addf %54, %59 : vector<8x224xf32>
    %61 = vector.extract_strided_slice %49 {offsets = [2, 0], sizes = [8, 144], strides = [1, 1]} : vector<12x144xf32> to vector<8x144xf32>
    %62 = arith.truncf %61 : vector<8x144xf32> to vector<8x144xbf16>
    %c2_44 = arith.constant 2 : index
    %c0_45 = arith.constant 0 : index
    %c0_46 = arith.constant 0 : index
    %63 = vector.load %arg6[%c2_44, %c0_45, %c0_46] : memref<5x144x224xbf16, #tpu.memory_space<vmem>>, vector<1x144x224xbf16>
    %64 = vector.shape_cast %63 : vector<1x144x224xbf16> to vector<144x224xbf16>
    %cst_47 = arith.constant dense<0.000000e+00> : vector<8x224xf32>
    %65 = tpu.matmul %62, %64, %cst_47 {dimension_numbers = #tpu.dot_dimension_numbers<[1], [0], [0], [1], [0, 0, 1, 1], [], []>} : vector<8x144xbf16>, vector<144x224xbf16>, vector<8x224xf32> -> vector<8x224xf32>
    %66 = arith.addf %60, %65 : vector<8x224xf32>
    %67 = vector.extract_strided_slice %49 {offsets = [3, 0], sizes = [8, 144], strides = [1, 1]} : vector<12x144xf32> to vector<8x144xf32>
    %68 = arith.truncf %67 : vector<8x144xf32> to vector<8x144xbf16>
    %c3_48 = arith.constant 3 : index
    %c0_49 = arith.constant 0 : index
    %c0_50 = arith.constant 0 : index
    %69 = vector.load %arg6[%c3_48, %c0_49, %c0_50] : memref<5x144x224xbf16, #tpu.memory_space<vmem>>, vector<1x144x224xbf16>
    %70 = vector.shape_cast %69 : vector<1x144x224xbf16> to vector<144x224xbf16>
    %cst_51 = arith.constant dense<0.000000e+00> : vector<8x224xf32>
    %71 = tpu.matmul %68, %70, %cst_51 {dimension_numbers = #tpu.dot_dimension_numbers<[1], [0], [0], [1], [0, 0, 1, 1], [], []>} : vector<8x144xbf16>, vector<144x224xbf16>, vector<8x224xf32> -> vector<8x224xf32>
    %72 = arith.addf %66, %71 : vector<8x224xf32>
    %73 = vector.extract_strided_slice %49 {offsets = [4, 0], sizes = [8, 144], strides = [1, 1]} : vector<12x144xf32> to vector<8x144xf32>
    %74 = arith.truncf %73 : vector<8x144xf32> to vector<8x144xbf16>
    %c4_52 = arith.constant 4 : index
    %c0_53 = arith.constant 0 : index
    %c0_54 = arith.constant 0 : index
    %75 = vector.load %arg6[%c4_52, %c0_53, %c0_54] : memref<5x144x224xbf16, #tpu.memory_space<vmem>>, vector<1x144x224xbf16>
    %76 = vector.shape_cast %75 : vector<1x144x224xbf16> to vector<144x224xbf16>
    %cst_55 = arith.constant dense<0.000000e+00> : vector<8x224xf32>
    %77 = tpu.matmul %74, %76, %cst_55 {dimension_numbers = #tpu.dot_dimension_numbers<[1], [0], [0], [1], [0, 0, 1, 1], [], []>} : vector<8x144xbf16>, vector<144x224xbf16>, vector<8x224xf32> -> vector<8x224xf32>
    %78 = arith.addf %72, %77 : vector<8x224xf32>
    %c0_56 = arith.constant 0 : index
    %c0_57 = arith.constant 0 : index
    %79 = vector.load %arg7[%c0_56, %c0_57] : memref<1x224xf32, #tpu.memory_space<vmem>>, vector<1x224xf32>
    %80 = vector.broadcast %79 : vector<1x224xf32> to vector<8x224xf32>
    %81 = arith.addf %78, %80 : vector<8x224xf32>
    %cst_58 = arith.constant 0.000000e+00 : f32
    %82 = vector.broadcast %cst_58 : f32 to vector<8x224xf32>
    %83 = arith.maximumf %81, %82 : vector<8x224xf32>
    %c0_59 = arith.constant 0 : index
    %c0_60 = arith.constant 0 : index
    %c0_61 = arith.constant 0 : index
    %84 = vector.load %arg8[%c0_59, %c0_60, %c0_61] : memref<2x4x8xf32, #tpu.memory_space<vmem>>, vector<1x4x8xf32>
    %85 = vector.shape_cast %84 : vector<1x4x8xf32> to vector<4x8xf32>
    %cst_62 = arith.constant dense<0.000000e+00> : vector<4x224xf32>
    %86 = tpu.matmul %85, %83, %cst_62 {dimension_numbers = #tpu.dot_dimension_numbers<[1], [0], [0], [1], [0, 0, 1, 1], [], []>} : vector<4x8xf32>, vector<8x224xf32>, vector<4x224xf32> -> vector<4x224xf32>
    %c1_63 = arith.constant 1 : index
    %c0_64 = arith.constant 0 : index
    %c0_65 = arith.constant 0 : index
    %87 = vector.load %arg8[%c1_63, %c0_64, %c0_65] : memref<2x4x8xf32, #tpu.memory_space<vmem>>, vector<1x4x8xf32>
    %88 = vector.shape_cast %87 : vector<1x4x8xf32> to vector<4x8xf32>
    %cst_66 = arith.constant dense<0.000000e+00> : vector<4x224xf32>
    %89 = tpu.matmul %88, %83, %cst_66 {dimension_numbers = #tpu.dot_dimension_numbers<[1], [0], [0], [1], [0, 0, 1, 1], [], []>} : vector<4x8xf32>, vector<8x224xf32>, vector<4x224xf32> -> vector<4x224xf32>
    %90 = arith.maximumf %86, %89 : vector<4x224xf32>
    %c0_67 = arith.constant 0 : index
    %c0_68 = arith.constant 0 : index
    %c0_69 = arith.constant 0 : index
    %91 = vector.load %arg9[%c0_67, %c0_68, %c0_69] : memref<2x224x112xf32, #tpu.memory_space<vmem>>, vector<1x224x112xf32>
    %92 = vector.shape_cast %91 : vector<1x224x112xf32> to vector<224x112xf32>
    %cst_70 = arith.constant dense<0.000000e+00> : vector<4x112xf32>
    %93 = tpu.matmul %90, %92, %cst_70 {dimension_numbers = #tpu.dot_dimension_numbers<[1], [0], [0], [1], [0, 0, 1, 1], [], []>} : vector<4x224xf32>, vector<224x112xf32>, vector<4x112xf32> -> vector<4x112xf32>
    %c1_71 = arith.constant 1 : index
    %c0_72 = arith.constant 0 : index
    %c0_73 = arith.constant 0 : index
    %94 = vector.load %arg9[%c1_71, %c0_72, %c0_73] : memref<2x224x112xf32, #tpu.memory_space<vmem>>, vector<1x224x112xf32>
    %95 = vector.shape_cast %94 : vector<1x224x112xf32> to vector<224x112xf32>
    %cst_74 = arith.constant dense<0.000000e+00> : vector<4x112xf32>
    %96 = tpu.matmul %90, %95, %cst_74 {dimension_numbers = #tpu.dot_dimension_numbers<[1], [0], [0], [1], [0, 0, 1, 1], [], []>} : vector<4x224xf32>, vector<224x112xf32>, vector<4x112xf32> -> vector<4x112xf32>
    %97 = arith.maximumf %93, %96 : vector<4x112xf32>
    %98 = vector.extract_strided_slice %97 {offsets = [0, 0], sizes = [1, 112], strides = [1, 1]} : vector<4x112xf32> to vector<1x112xf32>
    %99 = arith.truncf %98 : vector<1x112xf32> to vector<1x112xbf16>
    %c0_75 = arith.constant 0 : index
    %c0_76 = arith.constant 0 : index
    %c0_77 = arith.constant 0 : index
    %100 = vector.load %arg10[%c0_75, %c0_76, %c0_77] : memref<4x112x128xbf16, #tpu.memory_space<vmem>>, vector<1x112x128xbf16>
    %101 = vector.shape_cast %100 : vector<1x112x128xbf16> to vector<112x128xbf16>
    %cst_78 = arith.constant dense<0.000000e+00> : vector<1x128xf32>
    %102 = tpu.matmul %99, %101, %cst_78 {dimension_numbers = #tpu.dot_dimension_numbers<[1], [0], [0], [1], [0, 0, 1, 1], [], []>} : vector<1x112xbf16>, vector<112x128xbf16>, vector<1x128xf32> -> vector<1x128xf32>
    %103 = vector.extract_strided_slice %97 {offsets = [1, 0], sizes = [1, 112], strides = [1, 1]} : vector<4x112xf32> to vector<1x112xf32>
    %104 = arith.truncf %103 : vector<1x112xf32> to vector<1x112xbf16>
    %c1_79 = arith.constant 1 : index
    %c0_80 = arith.constant 0 : index
    %c0_81 = arith.constant 0 : index
    %105 = vector.load %arg10[%c1_79, %c0_80, %c0_81] : memref<4x112x128xbf16, #tpu.memory_space<vmem>>, vector<1x112x128xbf16>
    %106 = vector.shape_cast %105 : vector<1x112x128xbf16> to vector<112x128xbf16>
    %cst_82 = arith.constant dense<0.000000e+00> : vector<1x128xf32>
    %107 = tpu.matmul %104, %106, %cst_82 {dimension_numbers = #tpu.dot_dimension_numbers<[1], [0], [0], [1], [0, 0, 1, 1], [], []>} : vector<1x112xbf16>, vector<112x128xbf16>, vector<1x128xf32> -> vector<1x128xf32>
    %108 = arith.addf %102, %107 : vector<1x128xf32>
    %109 = vector.extract_strided_slice %97 {offsets = [2, 0], sizes = [1, 112], strides = [1, 1]} : vector<4x112xf32> to vector<1x112xf32>
    %110 = arith.truncf %109 : vector<1x112xf32> to vector<1x112xbf16>
    %c2_83 = arith.constant 2 : index
    %c0_84 = arith.constant 0 : index
    %c0_85 = arith.constant 0 : index
    %111 = vector.load %arg10[%c2_83, %c0_84, %c0_85] : memref<4x112x128xbf16, #tpu.memory_space<vmem>>, vector<1x112x128xbf16>
    %112 = vector.shape_cast %111 : vector<1x112x128xbf16> to vector<112x128xbf16>
    %cst_86 = arith.constant dense<0.000000e+00> : vector<1x128xf32>
    %113 = tpu.matmul %110, %112, %cst_86 {dimension_numbers = #tpu.dot_dimension_numbers<[1], [0], [0], [1], [0, 0, 1, 1], [], []>} : vector<1x112xbf16>, vector<112x128xbf16>, vector<1x128xf32> -> vector<1x128xf32>
    %114 = arith.addf %108, %113 : vector<1x128xf32>
    %115 = vector.extract_strided_slice %97 {offsets = [3, 0], sizes = [1, 112], strides = [1, 1]} : vector<4x112xf32> to vector<1x112xf32>
    %116 = arith.truncf %115 : vector<1x112xf32> to vector<1x112xbf16>
    %c3_87 = arith.constant 3 : index
    %c0_88 = arith.constant 0 : index
    %c0_89 = arith.constant 0 : index
    %117 = vector.load %arg10[%c3_87, %c0_88, %c0_89] : memref<4x112x128xbf16, #tpu.memory_space<vmem>>, vector<1x112x128xbf16>
    %118 = vector.shape_cast %117 : vector<1x112x128xbf16> to vector<112x128xbf16>
    %cst_90 = arith.constant dense<0.000000e+00> : vector<1x128xf32>
    %119 = tpu.matmul %116, %118, %cst_90 {dimension_numbers = #tpu.dot_dimension_numbers<[1], [0], [0], [1], [0, 0, 1, 1], [], []>} : vector<1x112xbf16>, vector<112x128xbf16>, vector<1x128xf32> -> vector<1x128xf32>
    %120 = arith.addf %114, %119 : vector<1x128xf32>
    %c0_91 = arith.constant 0 : index
    %c0_92 = arith.constant 0 : index
    %121 = vector.load %arg11[%c0_91, %c0_92] : memref<1x128xf32, #tpu.memory_space<vmem>>, vector<1x128xf32>
    %122 = arith.addf %120, %121 : vector<1x128xf32>
    %cst_93 = arith.constant 0.000000e+00 : f32
    %123 = vector.broadcast %cst_93 : f32 to vector<1x128xf32>
    %124 = arith.maximumf %122, %123 : vector<1x128xf32>
    %125 = arith.truncf %124 : vector<1x128xf32> to vector<1x128xbf16>
    %c0_94 = arith.constant 0 : index
    %c0_95 = arith.constant 0 : index
    %126 = vector.load %arg12[%c0_94, %c0_95] : memref<128x128xbf16, #tpu.memory_space<vmem>>, vector<128x128xbf16>
    %cst_96 = arith.constant dense<0.000000e+00> : vector<1x128xf32>
    %127 = tpu.matmul %125, %126, %cst_96 {dimension_numbers = #tpu.dot_dimension_numbers<[1], [0], [0], [1], [0, 0, 1, 1], [], []>} : vector<1x128xbf16>, vector<128x128xbf16>, vector<1x128xf32> -> vector<1x128xf32>
    %c0_97 = arith.constant 0 : index
    %c0_98 = arith.constant 0 : index
    %128 = vector.load %arg13[%c0_97, %c0_98] : memref<1x128xf32, #tpu.memory_space<vmem>>, vector<1x128xf32>
    %129 = arith.addf %127, %128 : vector<1x128xf32>
    %cst_99 = arith.constant 0.000000e+00 : f32
    %130 = vector.broadcast %cst_99 : f32 to vector<1x128xf32>
    %131 = arith.maximumf %129, %130 : vector<1x128xf32>
    %132 = arith.truncf %131 : vector<1x128xf32> to vector<1x128xbf16>
    %c0_100 = arith.constant 0 : index
    %c0_101 = arith.constant 0 : index
    %133 = vector.load %arg14[%c0_100, %c0_101] : memref<128x128xbf16, #tpu.memory_space<vmem>>, vector<128x128xbf16>
    %cst_102 = arith.constant dense<0.000000e+00> : vector<1x128xf32>
    %134 = tpu.matmul %132, %133, %cst_102 {dimension_numbers = #tpu.dot_dimension_numbers<[1], [0], [0], [1], [0, 0, 1, 1], [], []>} : vector<1x128xbf16>, vector<128x128xbf16>, vector<1x128xf32> -> vector<1x128xf32>
    %c0_103 = arith.constant 0 : index
    %c0_104 = arith.constant 0 : index
    %135 = vector.load %arg15[%c0_103, %c0_104] : memref<1x128xf32, #tpu.memory_space<vmem>>, vector<1x128xf32>
    %136 = arith.addf %134, %135 : vector<1x128xf32>
    %c0_105 = arith.constant 0 : index
    %c0_106 = arith.constant 0 : index
    %c0_107 = arith.constant 0 : index
    %137 = vector.load %arg16[%c0_105, %c0_106, %c0_107] : memref<1x1x128xf32, #tpu.memory_space<vmem>>, vector<1x1x128xf32>
    %138 = vector.shape_cast %137 : vector<1x1x128xf32> to vector<1x128xf32>
    %139 = vector.shape_cast %136 : vector<1x128xf32> to vector<1x1x128xf32>
    tpu.vector_store %arg16[%c0_105, %c0_106, %c0_107], %139 {strides = array<i32>} : memref<1x1x128xf32, #tpu.memory_space<vmem>>, vector<1x1x128xf32>,
    return
  }
  func.func @transform_0(%arg0: i32) -> (i32, i32, i32) {
    %c0_i32 = arith.constant 0 : i32
    %c0_i32_0 = arith.constant 0 : i32
    %c0_i32_1 = arith.constant 0 : i32
    return %arg0, %c0_i32, %c0_i32_0 : i32, i32, i32
  }
  func.func @transform_1(%arg0: i32) -> (i32, i32, i32) {
    %c0_i32 = arith.constant 0 : i32
    %c0_i32_0 = arith.constant 0 : i32
    %c0_i32_1 = arith.constant 0 : i32
    %c0_i32_2 = arith.constant 0 : i32
    return %c0_i32, %c0_i32_0, %c0_i32_1 : i32, i32, i32
  }
  func.func @transform_2(%arg0: i32) -> (i32, i32) {
    %c0_i32 = arith.constant 0 : i32
    %c0_i32_0 = arith.constant 0 : i32
    %c0_i32_1 = arith.constant 0 : i32
    return %c0_i32, %c0_i32_0 : i32, i32
  }
  func.func @transform_3(%arg0: i32) -> (i32, i32, i32) {
    %c0_i32 = arith.constant 0 : i32
    %c0_i32_0 = arith.constant 0 : i32
    %c0_i32_1 = arith.constant 0 : i32
    %c0_i32_2 = arith.constant 0 : i32
    return %c0_i32, %c0_i32_0, %c0_i32_1 : i32, i32, i32
  }
  func.func @transform_4(%arg0: i32) -> (i32, i32, i32) {
    %c0_i32 = arith.constant 0 : i32
    %c0_i32_0 = arith.constant 0 : i32
    %c0_i32_1 = arith.constant 0 : i32
    %c0_i32_2 = arith.constant 0 : i32
    return %c0_i32, %c0_i32_0, %c0_i32_1 : i32, i32, i32
  }
  func.func @transform_5(%arg0: i32) -> (i32, i32, i32) {
    %c0_i32 = arith.constant 0 : i32
    %c0_i32_0 = arith.constant 0 : i32
    %c0_i32_1 = arith.constant 0 : i32
    %c0_i32_2 = arith.constant 0 : i32
    return %c0_i32, %c0_i32_0, %c0_i32_1 : i32, i32, i32
  }
  func.func @transform_6(%arg0: i32) -> (i32, i32) {
    %c0_i32 = arith.constant 0 : i32
    %c0_i32_0 = arith.constant 0 : i32
    %c0_i32_1 = arith.constant 0 : i32
    return %c0_i32, %c0_i32_0 : i32, i32
  }
  func.func @transform_7(%arg0: i32) -> (i32, i32, i32) {
    %c0_i32 = arith.constant 0 : i32
    %c0_i32_0 = arith.constant 0 : i32
    %c0_i32_1 = arith.constant 0 : i32
    %c0_i32_2 = arith.constant 0 : i32
    return %c0_i32, %c0_i32_0, %c0_i32_1 : i32, i32, i32
  }
  func.func @transform_8(%arg0: i32) -> (i32, i32, i32) {
    %c0_i32 = arith.constant 0 : i32
    %c0_i32_0 = arith.constant 0 : i32
    %c0_i32_1 = arith.constant 0 : i32
    %c0_i32_2 = arith.constant 0 : i32
    return %c0_i32, %c0_i32_0, %c0_i32_1 : i32, i32, i32
  }
  func.func @transform_9(%arg0: i32) -> (i32, i32, i32) {
    %c0_i32 = arith.constant 0 : i32
    %c0_i32_0 = arith.constant 0 : i32
    %c0_i32_1 = arith.constant 0 : i32
    %c0_i32_2 = arith.constant 0 : i32
    return %c0_i32, %c0_i32_0, %c0_i32_1 : i32, i32, i32
  }
  func.func @transform_10(%arg0: i32) -> (i32, i32) {
    %c0_i32 = arith.constant 0 : i32
    %c0_i32_0 = arith.constant 0 : i32
    %c0_i32_1 = arith.constant 0 : i32
    return %c0_i32, %c0_i32_0 : i32, i32
  }
  func.func @transform_11(%arg0: i32) -> (i32, i32) {
    %c0_i32 = arith.constant 0 : i32
    %c0_i32_0 = arith.constant 0 : i32
    %c0_i32_1 = arith.constant 0 : i32
    return %c0_i32, %c0_i32_0 : i32, i32
  }
  func.func @transform_12(%arg0: i32) -> (i32, i32) {
    %c0_i32 = arith.constant 0 : i32
    %c0_i32_0 = arith.constant 0 : i32
    %c0_i32_1 = arith.constant 0 : i32
    return %c0_i32, %c0_i32_0 : i32, i32
  }
  func.func @transform_13(%arg0: i32) -> (i32, i32) {
    %c0_i32 = arith.constant 0 : i32
    %c0_i32_0 = arith.constant 0 : i32
    %c0_i32_1 = arith.constant 0 : i32
    return %c0_i32, %c0_i32_0 : i32, i32
  }
  func.func @transform_14(%arg0: i32) -> (i32, i32) {
    %c0_i32 = arith.constant 0 : i32
    %c0_i32_0 = arith.constant 0 : i32
    %c0_i32_1 = arith.constant 0 : i32
    return %c0_i32, %c0_i32_0 : i32, i32
  }
  func.func @transform_15(%arg0: i32) -> (i32, i32, i32) {
    %c0_i32 = arith.constant 0 : i32
    %c0_i32_0 = arith.constant 0 : i32
    %c0_i32_1 = arith.constant 0 : i32
    return %arg0, %c0_i32, %c0_i32_0 : i32, i32, i32
  }
}

</mosaic_0001>

<llo_original>
// kernel: tile.13
$region0: #{tile.13}
  #allocation0 [shape = 's32[1]{0}', space=sflag, size = 0x4, scoped, tag = 'scoped memory for tile.13']
  %s0 = inlined_call_operand.vmem [shape: f32[12], index: 0, kind: input, shape index: {}]
  %s1 = inlined_call_operand.vmem [shape: f32[24,12], index: 1, kind: output, shape index: {}]
  // Predicated region
  $region2: #{tile.13} parent=0 // pred_check
    _
  $region3: #{tile.13} parent=0 // pred_check_branch
    %3 = sbr.rel (0) target = $region5
  $region4: #{tile.13} parent=0 // pred_region
    _
  $region5: #{tile.13} parent=0 // pred_fallthru
    _
  %v4 = vld [vmem:[%s0] ss:$0 sm:$0xff]
  %5 = vst [vmem:[%s1] sm:$0xff] %v4
  %s6 = scalar_lea.vmem %s1, 8
  %7 = vst [vmem:[%s6] sm:$0xff] %v4
  %s8 = scalar_lea.vmem %s1, 16
  %9 = vst [vmem:[%s8] sm:$0xff] %v4

// kernel: tile.14
$region0: #{tile.14}
  %s0 = inlined_call_operand.vmem [shape: f32[24,12], index: 0, kind: input, shape index: {}]
  %s1 = inlined_call_operand.vmem [shape: f32[1,288], index: 1, kind: output, shape index: {}]
  $region1: #{tile.14} parent=0
    #allocation0 [shape = 'u8[12288]{0}', space=vmem, size = 0x3000, scoped, tag = 'scoped mem for output reshape']
    %v2 = vld [vmem:[%s0] sm:$0x1]
    %vm3 = vcmask 97280
    %4 = vst.msk [vmem:[#allocation0] sm:$0x1] %vm3, %v2
    %s5 = scalar_lea.vmem %s0, 21
    %v6 = vld [vmem:[%s5] sm:$0x1]
    %s7 = scalar_lea.vmem %s0, 21
    %v8 = vld [vmem:[%s7] sm:$0x1]
    %vm9 = vcmask 31744
    %v10 = vsel %vm9, %v8, %v6
    %11 = vrot.lane.b32.xlu0 %v10, 124
    %v12 = vpop.permute.xlu0 %11
    %vm13 = vcmask 64512
    %s14 = scalar_lea.vmem [#allocation0], 16
    %15 = vst.msk [vmem:[%s14] sm:$0x1] %vm13, %v12
    %vm16 = vcmask 1048544
    %s17 = scalar_lea.vmem [#allocation0], 8
    %18 = vst.msk [vmem:[%s17] sm:$0x1] %vm16, %v12
    %s19 = scalar_lea.vmem %s0, 10
    %v20 = vld [vmem:[%s19] sm:$0x1]
    %s21 = scalar_lea.vmem %s0, 10
    %v22 = vld [vmem:[%s21] sm:$0x1]
    %vm23 = vcmask 64512
    %v24 = vsel %vm23, %v22, %v20
    %25 = vrot.lane.b32.xlu0 %v24, 120
    %v26 = vpop.permute.xlu0 %25
    %vm27 = vcmask 31744
    %s28 = scalar_lea.vmem [#allocation0], 8
    %29 = vst.msk [vmem:[%s28] sm:$0x1] %vm27, %v26
    %vm30 = vcmask 1048512
    %31 = vst.msk [vmem:[#allocation0] sm:$0x1] %vm30, %v26
    %s32 = scalar_lea.vmem %s0, 20
    %v33 = vld [vmem:[%s32] sm:$0x1]
    %34 = vrot.lane.b32.xlu0 %v33, 112
    %v35 = vpop.permute.xlu0 %34
    %vm36 = vcmask 1015680
    %s37 = scalar_lea.vmem [#allocation0], 8
    %38 = vst.msk [vmem:[%s37] sm:$0x1] %vm36, %v35
    %s39 = scalar_lea.vmem %s0, 9
    %v40 = vld [vmem:[%s39] sm:$0x1]
    %41 = vrot.lane.b32.xlu0 %v40, 108
    %v42 = vpop.permute.xlu0 %41
    %vm43 = vcmask 982880
    %44 = vst.msk [vmem:[#allocation0] sm:$0x1] %vm43, %v42
    %s45 = scalar_lea.vmem %s0, 19
    %v46 = vld [vmem:[%s45] sm:$0x1]
    %47 = vrot.lane.b32.xlu0 %v46, 100
    %v48 = vpop.permute.xlu0 %47
    %vm49 = vcmask 917280
    %s50 = scalar_lea.vmem [#allocation0], 8
    %51 = vst.msk [vmem:[%s50] sm:$0x1] %vm49, %v48
    %s52 = scalar_lea.vmem %s0, 8
    %v53 = vld [vmem:[%s52] sm:$0x1]
    %54 = vrot.lane.b32.xlu0 %v53, 96
    %v55 = vpop.permute.xlu0 %54
    %vm56 = vcmask 884480
    %57 = vst.msk [vmem:[#allocation0] sm:$0x1] %vm56, %v55
    %s58 = scalar_lea.vmem %s0, 18
    %v59 = vld [vmem:[%s58] sm:$0x1]
    %60 = vrot.lane.b32.xlu0 %v59, 88
    %v61 = vpop.permute.xlu0 %60
    %vm62 = vcmask 818880
    %s63 = scalar_lea.vmem [#allocation0], 8
    %64 = vst.msk [vmem:[%s63] sm:$0x1] %vm62, %v61
    %s65 = scalar_lea.vmem %s0, 7
    %v66 = vld [vmem:[%s65] sm:$0x1]
    %67 = vrot.lane.b32.xlu0 %v66, 84
    %v68 = vpop.permute.xlu0 %67
    %vm69 = vcmask 786080
    %70 = vst.msk [vmem:[#allocation0] sm:$0x1] %vm69, %v68
    %s71 = scalar_lea.vmem %s0, 17
    %v72 = vld [vmem:[%s71] sm:$0x1]
    %73 = vrot.lane.b32.xlu0 %v72, 76
    %v74 = vpop.permute.xlu0 %73
    %vm75 = vcmask 720480
    %s76 = scalar_lea.vmem [#allocation0], 8
    %77 = vst.msk [vmem:[%s76] sm:$0x1] %vm75, %v74
    %s78 = scalar_lea.vmem %s0, 6
    %v79 = vld [vmem:[%s78] sm:$0x1]
    %80 = vrot.lane.b32.xlu0 %v79, 72
    %v81 = vpop.permute.xlu0 %80
    %vm82 = vcmask 687680
    %83 = vst.msk [vmem:[#allocation0] sm:$0x1] %vm82, %v81
    %s84 = scalar_lea.vmem %s0, 16
    %v85 = vld [vmem:[%s84] sm:$0x1]
    %86 = vrot.lane.b32.xlu0 %v85, 64
    %v87 = vpop.permute.xlu0 %86
    %vm88 = vcmask 622080
    %s89 = scalar_lea.vmem [#allocation0], 8
    %90 = vst.msk [vmem:[%s89] sm:$0x1] %vm88, %v87
    %s91 = scalar_lea.vmem %s0, 5
    %v92 = vld [vmem:[%s91] sm:$0x1]
    %93 = vrot.lane.b32.xlu0 %v92, 60
    %v94 = vpop.permute.xlu0 %93
    %vm95 = vcmask 589280
    %96 = vst.msk [vmem:[#allocation0] sm:$0x1] %vm95, %v94
    %s97 = scalar_lea.vmem %s0, 15
    %v98 = vld [vmem:[%s97] sm:$0x1]
    %99 = vrot.lane.b32.xlu0 %v98, 52
    %v100 = vpop.permute.xlu0 %99
    %vm101 = vcmask 523680
    %s102 = scalar_lea.vmem [#allocation0], 8
    %103 = vst.msk [vmem:[%s102] sm:$0x1] %vm101, %v100
    %s104 = scalar_lea.vmem %s0, 4
    %v105 = vld [vmem:[%s104] sm:$0x1]
    %106 = vrot.lane.b32.xlu0 %v105, 48
    %v107 = vpop.permute.xlu0 %106
    %vm108 = vcmask 490880
    %109 = vst.msk [vmem:[#allocation0] sm:$0x1] %vm108, %v107
    %s110 = scalar_lea.vmem %s0, 14
    %v111 = vld [vmem:[%s110] sm:$0x1]
    %112 = vrot.lane.b32.xlu0 %v111, 40
    %v113 = vpop.permute.xlu0 %112
    %vm114 = vcmask 425280
    %s115 = scalar_lea.vmem [#allocation0], 8
    %116 = vst.msk [vmem:[%s115] sm:$0x1] %vm114, %v113
    %s117 = scalar_lea.vmem %s0, 3
    %v118 = vld [vmem:[%s117] sm:$0x1]
    %119 = vrot.lane.b32.xlu0 %v118, 36
    %v120 = vpop.permute.xlu0 %119
    %vm121 = vcmask 392480
    %122 = vst.msk [vmem:[#allocation0] sm:$0x1] %vm121, %v120
    %s123 = scalar_lea.vmem %s0, 13
    %v124 = vld [vmem:[%s123] sm:$0x1]
    %125 = vrot.lane.b32.xlu0 %v124, 28
    %v126 = vpop.permute.xlu0 %125
    %vm127 = vcmask 326880
    %s128 = scalar_lea.vmem [#allocation0], 8
    %129 = vst.msk [vmem:[%s128] sm:$0x1] %vm127, %v126
    %s130 = scalar_lea.vmem %s0, 2
    %v131 = vld [vmem:[%s130] sm:$0x1]
    %132 = vrot.lane.b32.xlu0 %v131, 24
    %v133 = vpop.permute.xlu0 %132
    %vm134 = vcmask 294080
    %135 = vst.msk [vmem:[#allocation0] sm:$0x1] %vm134, %v133
    %s136 = scalar_lea.vmem %s0, 23
    %v137 = vld [vmem:[%s136] sm:$0x1]
    %138 = vrot.lane.b32.xlu0 %v137, 20
    %v139 = vpop.permute.xlu0 %138
    %vm140 = vcmask 261280
    %s141 = scalar_lea.vmem [#allocation0], 16
    %142 = vst.msk [vmem:[%s141] sm:$0x1] %vm140, %v139
    %s143 = scalar_lea.vmem %s0, 12
    %v144 = vld [vmem:[%s143] sm:$0x1]
    %145 = vrot.lane.b32.xlu0 %v144, 16
    %v146 = vpop.permute.xlu0 %145
    %vm147 = vcmask 228480
    %s148 = scalar_lea.vmem [#allocation0], 8
    %149 = vst.msk [vmem:[%s148] sm:$0x1] %vm147, %v146
    %s150 = scalar_lea.vmem %s0, 1
    %v151 = vld [vmem:[%s150] sm:$0x1]
    %152 = vrot.lane.b32.xlu0 %v151, 12
    %v153 = vpop.permute.xlu0 %152
    %vm154 = vcmask 195680
    %155 = vst.msk [vmem:[#allocation0] sm:$0x1] %vm154, %v153
    %s156 = scalar_lea.vmem %s0, 22
    %v157 = vld [vmem:[%s156] sm:$0x1]
    %158 = vrot.lane.b32.xlu0 %v157, 8
    %v159 = vpop.permute.xlu0 %158
    %vm160 = vcmask 162880
    %s161 = scalar_lea.vmem [#allocation0], 16
    %162 = vst.msk [vmem:[%s161] sm:$0x1] %vm160, %v159
    %s163 = scalar_lea.vmem %s0, 11
    %v164 = vld [vmem:[%s163] sm:$0x1]
    %165 = vrot.lane.b32.xlu0 %v164, 4
    %v166 = vpop.permute.xlu0 %165
    %vm167 = vcmask 130080
    %s168 = scalar_lea.vmem [#allocation0], 8
    %169 = vst.msk [vmem:[%s168] sm:$0x1] %vm167, %v166
    %s171 = ssub.s32 2, 1
    %v172 = vld [vmem:[#allocation0] sm:%s171]
    %s174 = ssub.s32 2, 1
    %175 = vst [vmem:[%s1] sm:%s174] %v172
    %s176 = scalar_lea.vmem [#allocation0], 8
    %v177 = vld [vmem:[%s176] sm:%s171]
    %s179 = ssub.s32 2, 1
    %s180 = scalar_lea.vmem %s1, 1
    %181 = vst [vmem:[%s180] sm:%s179] %v177
    %s182 = scalar_lea.vmem [#allocation0], 16
    %v183 = vld [vmem:[%s182] sm:%s171]
    %s185 = ssub.s32 2, 1
    %s186 = scalar_lea.vmem %s1, 2
    %187 = vst [vmem:[%s186] sm:%s185] %v183

// kernel: tile.18
$region0: #{tile.18}
  #allocation0 [shape = 's32[1]{0}', space=sflag, size = 0x4, scoped, tag = 'scoped memory for tile.18']
  %s0 = inlined_call_operand.vmem [shape: f32[28], index: 0, kind: input, shape index: {}]
  %s1 = inlined_call_operand.vmem [shape: f32[8,28], index: 1, kind: output, shape index: {}]
  // Predicated region
  $region2: #{tile.18} parent=0 // pred_check
    _
  $region3: #{tile.18} parent=0 // pred_check_branch
    %3 = sbr.rel (0) target = $region5
  $region4: #{tile.18} parent=0 // pred_region
    _
  $region5: #{tile.18} parent=0 // pred_fallthru
    _
  %v4 = vld [vmem:[%s0] ss:$0 sm:$0xff]
  %5 = vst [vmem:[%s1] sm:$0xff] %v4

// kernel: tile.19
$region0: #{tile.19}
  %s0 = inlined_call_operand.vmem [shape: f32[8,28], index: 0, kind: input, shape index: {}]
  %s1 = inlined_call_operand.vmem [shape: f32[1,224], index: 1, kind: output, shape index: {}]
  $region1: #{tile.19} parent=0
    #allocation0 [shape = 'u8[8192]{0}', space=vmem, size = 0x2000, scoped, tag = 'scoped mem for output reshape']
    %v2 = vld [vmem:[%s0] sm:$0x1]
    %vm3 = vcmask 228352
    %4 = vst.msk [vmem:[#allocation0] sm:$0x1] %vm3, %v2
    %s5 = scalar_lea.vmem %s0, 4
    %v6 = vld [vmem:[%s5] sm:$0x1]
    %s7 = scalar_lea.vmem %s0, 4
    %v8 = vld [vmem:[%s7] sm:$0x1]
    %vm9 = vcmask 130048
    %v10 = vsel %vm9, %v8, %v6
    %11 = vrot.lane.b32.xlu0 %v10, 112
    %v12 = vpop.permute.xlu0 %11
    %vm13 = vcmask 97280
    %s14 = scalar_lea.vmem [#allocation0], 8
    %15 = vst.msk [vmem:[%s14] sm:$0x1] %vm13, %v12
    %vm16 = vcmask 1048448
    %17 = vst.msk [vmem:[#allocation0] sm:$0x1] %vm16, %v12
    %s18 = scalar_lea.vmem %s0, 3
    %v19 = vld [vmem:[%s18] sm:$0x1]
    %20 = vrot.lane.b32.xlu0 %v19, 84
    %v21 = vpop.permute.xlu0 %20
    %vm22 = vcmask 917152
    %23 = vst.msk [vmem:[#allocation0] sm:$0x1] %vm22, %v21
    %s24 = scalar_lea.vmem %s0, 7
    %v25 = vld [vmem:[%s24] sm:$0x1]
    %26 = vrot.lane.b32.xlu0 %v25, 68
    %v27 = vpop.permute.xlu0 %26
    %vm28 = vcmask 785952
    %s29 = scalar_lea.vmem [#allocation0], 8
    %30 = vst.msk [vmem:[%s29] sm:$0x1] %vm28, %v27
    %s31 = scalar_lea.vmem %s0, 2
    %v32 = vld [vmem:[%s31] sm:$0x1]
    %33 = vrot.lane.b32.xlu0 %v32, 56
    %v34 = vpop.permute.xlu0 %33
    %vm35 = vcmask 687552
    %36 = vst.msk [vmem:[#allocation0] sm:$0x1] %vm35, %v34
    %s37 = scalar_lea.vmem %s0, 6
    %v38 = vld [vmem:[%s37] sm:$0x1]
    %39 = vrot.lane.b32.xlu0 %v38, 40
    %v40 = vpop.permute.xlu0 %39
    %vm41 = vcmask 556352
    %s42 = scalar_lea.vmem [#allocation0], 8
    %43 = vst.msk [vmem:[%s42] sm:$0x1] %vm41, %v40
    %s44 = scalar_lea.vmem %s0, 1
    %v45 = vld [vmem:[%s44] sm:$0x1]
    %46 = vrot.lane.b32.xlu0 %v45, 28
    %v47 = vpop.permute.xlu0 %46
    %vm48 = vcmask 457952
    %49 = vst.msk [vmem:[#allocation0] sm:$0x1] %vm48, %v47
    %s50 = scalar_lea.vmem %s0, 5
    %v51 = vld [vmem:[%s50] sm:$0x1]
    %52 = vrot.lane.b32.xlu0 %v51, 12
    %v53 = vpop.permute.xlu0 %52
    %vm54 = vcmask 326752
    %s55 = scalar_lea.vmem [#allocation0], 8
    %56 = vst.msk [vmem:[%s55] sm:$0x1] %vm54, %v53
    %s58 = ssub.s32 2, 1
    %v59 = vld [vmem:[#allocation0] sm:%s58]
    %s61 = ssub.s32 2, 1
    %62 = vst [vmem:[%s1] sm:%s61] %v59
    %s63 = scalar_lea.vmem [#allocation0], 8
    %v64 = vld [vmem:[%s63] sm:%s58]
    %s66 = ssub.s32 2, 1
    %s67 = scalar_lea.vmem %s1, 1
    %68 = vst [vmem:[%s67] sm:%s66] %v64

// kernel: neuralnet_forward.1
$region0: #{neuralnet_forward.1}
  #allocation0 [shape = 'u32[]', space=smem, size = 0x4, offset = 0x4, fixed_abs, tag = 'smem constant byte address 0x4 - core index']
  #allocation1 [shape = 'u32[72,128]{1,0:T(1,128)}', space=vmem, size = 0x9000, scoped, tag = 'internal scratch']
  %s0 = inlined_call_operand.vmem [shape: f32[2,28,28], index: 0, kind: input, shape index: {}]
  %s1 = inlined_call_operand.vmem [shape: bf16[5,28,288], index: 1, kind: input, shape index: {}]
  %s2 = inlined_call_operand.vmem [shape: f32[1,288], index: 2, kind: input, shape index: {}]
  %s3 = inlined_call_operand.vmem [shape: f32[2,12,24], index: 3, kind: input, shape index: {}]
  %s4 = inlined_call_operand.vmem [shape: f32[2,288,144], index: 4, kind: input, shape index: {}]
  %s5 = inlined_call_operand.vmem [shape: bf16[5,144,224], index: 5, kind: input, shape index: {}]
  %s6 = inlined_call_operand.vmem [shape: f32[1,224], index: 6, kind: input, shape index: {}]
  %s7 = inlined_call_operand.vmem [shape: f32[2,4,8], index: 7, kind: input, shape index: {}]
  %s8 = inlined_call_operand.vmem [shape: f32[2,224,112], index: 8, kind: input, shape index: {}]
  %s9 = inlined_call_operand.vmem [shape: bf16[4,112,128], index: 9, kind: input, shape index: {}]
  %s10 = inlined_call_operand.vmem [shape: f32[1,128], index: 10, kind: input, shape index: {}]
  %s11 = inlined_call_operand.vmem [shape: bf16[128,128], index: 11, kind: input, shape index: {}]
  %s12 = inlined_call_operand.vmem [shape: f32[1,128], index: 12, kind: input, shape index: {}]
  %s13 = inlined_call_operand.vmem [shape: bf16[128,128], index: 13, kind: input, shape index: {}]
  %s14 = inlined_call_operand.vmem [shape: f32[1,128], index: 14, kind: input, shape index: {}]
  %s15 = inlined_call_operand.hbm [shape: f32[2,1,128], index: 15, kind: output, shape index: {}]
  %s16 = sld [smem:[#allocation0]]
  $region93: #{neuralnet_forward.1} parent=0
    _
  %s18 = ssub.s32 1, %s16
  %s19 = scalar_select 0, %s18, %s16
  $region1: #{neuralnet_forward.1} parent=0
    #allocation2 [shape = 'u8[1024]{0}', space=vmem, size = 0x400, scoped, tag = 'output window, operand 0']
    #allocation3 [shape = 's32[2]{0}', space=sflag, size = 0x8, scoped, tag = 'scoped memory for neuralnet_forward.1']
    %20 = vsyncpa [#allocation3], 0
    %s21 = scalar_lea.sflag [#allocation3], 1
    %22 = vsyncpa %s21, 0
    loop: start=0, step=1, limit=4
    $region2: #{neuralnet_forward.1} parent=1 // loop_pre_header
      _
    $region3: #{neuralnet_forward.1} parent=1 // loop_header
      %s24 = sphi 0, %s28
      %p25 = scmp.ge.s32.totalorder %s24, 4
      %s34 = sphi 0, %s36
      %s37 = sphi 0, %s34
      %s38 = sphi 0, %s37
      %s54 = sphi 0, %s38
      %s58 = sphi 0, %s58
      %s60 = sphi 0, %s58
      %s61 = sphi 0, %s60
      %s75 = sphi 0, %s61
      %s79 = sphi 0, %s79
      %s81 = sphi 0, %s79
      %s82 = sphi 0, %s81
      %s96 = sphi 0, %s82
      %s100 = sphi 0, %s100
      %s102 = sphi 0, %s100
      %s103 = sphi 0, %s102
      %s117 = sphi 0, %s103
      %s121 = sphi 0, %s121
      %s123 = sphi 0, %s121
      %s124 = sphi 0, %s123
      %s138 = sphi 0, %s124
      %s142 = sphi 0, %s142
      %s144 = sphi 0, %s142
      %s145 = sphi 0, %s144
      %s159 = sphi 0, %s145
      %s163 = sphi 0, %s163
      %s165 = sphi 0, %s163
      %s166 = sphi 0, %s165
      %s180 = sphi 0, %s166
      %s184 = sphi 0, %s184
      %s186 = sphi 0, %s184
      %s187 = sphi 0, %s186
      %s201 = sphi 0, %s187
      %s205 = sphi 0, %s205
      %s207 = sphi 0, %s205
      %s208 = sphi 0, %s207
      %s222 = sphi 0, %s208
      %s226 = sphi 0, %s226
      %s228 = sphi 0, %s226
      %s229 = sphi 0, %s228
      %s243 = sphi 0, %s229
      %s247 = sphi 0, %s247
      %s249 = sphi 0, %s247
      %s250 = sphi 0, %s249
      %s264 = sphi 0, %s250
      %s268 = sphi 0, %s268
      %s270 = sphi 0, %s268
      %s271 = sphi 0, %s270
      %s285 = sphi 0, %s271
      %s289 = sphi 0, %s289
      %s291 = sphi 0, %s289
      %s292 = sphi 0, %s291
      %s306 = sphi 0, %s292
      %s310 = sphi 0, %s310
      %s312 = sphi 0, %s310
      %s313 = sphi 0, %s312
      %s327 = sphi 0, %s313
      %s331 = sphi 0, %s331
      %s333 = sphi 0, %s331
      %s334 = sphi 0, %s333
      %s348 = sphi 0, %s334
      %s354 = sphi 0, %s356
      %s357 = sphi 0, %s354
      %s358 = sphi 0, %s357
      %s374 = sphi 0, %s358
    $region4: #{neuralnet_forward.1} parent=1 // loop_header_branch
      %27 = sbr.rel (%p25) target = $region8
    $region5: #{neuralnet_forward.1} parent=1 // loop_body
      %s29 = ssub.s32 %s24, 1
      %s30 = ssub.s32 %s24, 2
      %s31 = sadd.s32 %s24, 1
      %s32 = ssub.s32 %s24, %s31
      %p33 = scmp.eq.s32.totalorder %s32, 0
      %s35 = sadd.s32 %s34, 1
      %s36 = scalar_select %p33, %s34, %s35
      %p39 = pneg %p33
      %p40 = scmp.eq.s32.totalorder %s24, 1
      %p41 = por %p39, %p40
      %p42 = scmp.ne.s32.totalorder %s34, %s37
      %p43 = scmp.eq.s32.totalorder %s24, 0
      %p44 = por %p42, %p43
      %p45 = scmp.ne.s32.totalorder %s34, %s37
      %p46 = scmp.eq.s32.totalorder %s29, 1
      %p47 = por %p45, %p46
      %p48 = scmp.ne.s32.totalorder %s37, %s38
      %p49 = scmp.eq.s32.totalorder %s29, 0
      %p50 = por %p48, %p49
      %p51 = scmp.ne.s32.totalorder %s37, %s38
      %p52 = scmp.eq.s32.totalorder %s30, 1
      %p53 = por %p51, %p52
      %p55 = scmp.ne.s32.totalorder %s38, %s54
      %p56 = scmp.eq.s32.totalorder %s30, 0
      %p57 = por %p55, %p56
      %s59 = sadd.s32 %s58, 1
      %p62 = scmp.eq.s32.totalorder %s24, 1
      %p63 = scmp.ne.s32.totalorder %s58, %s60
      %p64 = scmp.eq.s32.totalorder %s24, 0
      %p65 = por %p63, %p64
      %p66 = scmp.ne.s32.totalorder %s58, %s60
      %p67 = scmp.eq.s32.totalorder %s29, 1
      %p68 = por %p66, %p67
      %p69 = scmp.ne.s32.totalorder %s60, %s61
      %p70 = scmp.eq.s32.totalorder %s29, 0
      %p71 = por %p69, %p70
      %p72 = scmp.ne.s32.totalorder %s60, %s61
      %p73 = scmp.eq.s32.totalorder %s30, 1
      %p74 = por %p72, %p73
      %p76 = scmp.ne.s32.totalorder %s61, %s75
      %p77 = scmp.eq.s32.totalorder %s30, 0
      %p78 = por %p76, %p77
      %s80 = sadd.s32 %s79, 1
      %p83 = scmp.eq.s32.totalorder %s24, 1
      %p84 = scmp.ne.s32.totalorder %s79, %s81
      %p85 = scmp.eq.s32.totalorder %s24, 0
      %p86 = por %p84, %p85
      %p87 = scmp.ne.s32.totalorder %s79, %s81
      %p88 = scmp.eq.s32.totalorder %s29, 1
      %p89 = por %p87, %p88
      %p90 = scmp.ne.s32.totalorder %s81, %s82
      %p91 = scmp.eq.s32.totalorder %s29, 0
      %p92 = por %p90, %p91
      %p93 = scmp.ne.s32.totalorder %s81, %s82
      %p94 = scmp.eq.s32.totalorder %s30, 1
      %p95 = por %p93, %p94
      %p97 = scmp.ne.s32.totalorder %s82, %s96
      %p98 = scmp.eq.s32.totalorder %s30, 0
      %p99 = por %p97, %p98
      %s101 = sadd.s32 %s100, 1
      %p104 = scmp.eq.s32.totalorder %s24, 1
      %p105 = scmp.ne.s32.totalorder %s100, %s102
      %p106 = scmp.eq.s32.totalorder %s24, 0
      %p107 = por %p105, %p106
      %p108 = scmp.ne.s32.totalorder %s100, %s102
      %p109 = scmp.eq.s32.totalorder %s29, 1
      %p110 = por %p108, %p109
      %p111 = scmp.ne.s32.totalorder %s102, %s103
      %p112 = scmp.eq.s32.totalorder %s29, 0
      %p113 = por %p111, %p112
      %p114 = scmp.ne.s32.totalorder %s102, %s103
      %p115 = scmp.eq.s32.totalorder %s30, 1
      %p116 = por %p114, %p115
      %p118 = scmp.ne.s32.totalorder %s103, %s117
      %p119 = scmp.eq.s32.totalorder %s30, 0
      %p120 = por %p118, %p119
      %s122 = sadd.s32 %s121, 1
      %p125 = scmp.eq.s32.totalorder %s24, 1
      %p126 = scmp.ne.s32.totalorder %s121, %s123
      %p127 = scmp.eq.s32.totalorder %s24, 0
      %p128 = por %p126, %p127
      %p129 = scmp.ne.s32.totalorder %s121, %s123
      %p130 = scmp.eq.s32.totalorder %s29, 1
      %p131 = por %p129, %p130
      %p132 = scmp.ne.s32.totalorder %s123, %s124
      %p133 = scmp.eq.s32.totalorder %s29, 0
      %p134 = por %p132, %p133
      %p135 = scmp.ne.s32.totalorder %s123, %s124
      %p136 = scmp.eq.s32.totalorder %s30, 1
      %p137 = por %p135, %p136
      %p139 = scmp.ne.s32.totalorder %s124, %s138
      %p140 = scmp.eq.s32.totalorder %s30, 0
      %p141 = por %p139, %p140
      %s143 = sadd.s32 %s142, 1
      %p146 = scmp.eq.s32.totalorder %s24, 1
      %p147 = scmp.ne.s32.totalorder %s142, %s144
      %p148 = scmp.eq.s32.totalorder %s24, 0
      %p149 = por %p147, %p148
      %p150 = scmp.ne.s32.totalorder %s142, %s144
      %p151 = scmp.eq.s32.totalorder %s29, 1
      %p152 = por %p150, %p151
      %p153 = scmp.ne.s32.totalorder %s144, %s145
      %p154 = scmp.eq.s32.totalorder %s29, 0
      %p155 = por %p153, %p154
      %p156 = scmp.ne.s32.totalorder %s144, %s145
      %p157 = scmp.eq.s32.totalorder %s30, 1
      %p158 = por %p156, %p157
      %p160 = scmp.ne.s32.totalorder %s145, %s159
      %p161 = scmp.eq.s32.totalorder %s30, 0
      %p162 = por %p160, %p161
      %s164 = sadd.s32 %s163, 1
      %p167 = scmp.eq.s32.totalorder %s24, 1
      %p168 = scmp.ne.s32.totalorder %s163, %s165
      %p169 = scmp.eq.s32.totalorder %s24, 0
      %p170 = por %p168, %p169
      %p171 = scmp.ne.s32.totalorder %s163, %s165
      %p172 = scmp.eq.s32.totalorder %s29, 1
      %p173 = por %p171, %p172
      %p174 = scmp.ne.s32.totalorder %s165, %s166
      %p175 = scmp.eq.s32.totalorder %s29, 0
      %p176 = por %p174, %p175
      %p177 = scmp.ne.s32.totalorder %s165, %s166
      %p178 = scmp.eq.s32.totalorder %s30, 1
      %p179 = por %p177, %p178
      %p181 = scmp.ne.s32.totalorder %s166, %s180
      %p182 = scmp.eq.s32.totalorder %s30, 0
      %p183 = por %p181, %p182
      %s185 = sadd.s32 %s184, 1
      %p188 = scmp.eq.s32.totalorder %s24, 1
      %p189 = scmp.ne.s32.totalorder %s184, %s186
      %p190 = scmp.eq.s32.totalorder %s24, 0
      %p191 = por %p189, %p190
      %p192 = scmp.ne.s32.totalorder %s184, %s186
      %p193 = scmp.eq.s32.totalorder %s29, 1
      %p194 = por %p192, %p193
      %p195 = scmp.ne.s32.totalorder %s186, %s187
      %p196 = scmp.eq.s32.totalorder %s29, 0
      %p197 = por %p195, %p196
      %p198 = scmp.ne.s32.totalorder %s186, %s187
      %p199 = scmp.eq.s32.totalorder %s30, 1
      %p200 = por %p198, %p199
      %p202 = scmp.ne.s32.totalorder %s187, %s201
      %p203 = scmp.eq.s32.totalorder %s30, 0
      %p204 = por %p202, %p203
      %s206 = sadd.s32 %s205, 1
      %p209 = scmp.eq.s32.totalorder %s24, 1
      %p210 = scmp.ne.s32.totalorder %s205, %s207
      %p211 = scmp.eq.s32.totalorder %s24, 0
      %p212 = por %p210, %p211
      %p213 = scmp.ne.s32.totalorder %s205, %s207
      %p214 = scmp.eq.s32.totalorder %s29, 1
      %p215 = por %p213, %p214
      %p216 = scmp.ne.s32.totalorder %s207, %s208
      %p217 = scmp.eq.s32.totalorder %s29, 0
      %p218 = por %p216, %p217
      %p219 = scmp.ne.s32.totalorder %s207, %s208
      %p220 = scmp.eq.s32.totalorder %s30, 1
      %p221 = por %p219, %p220
      %p223 = scmp.ne.s32.totalorder %s208, %s222
      %p224 = scmp.eq.s32.totalorder %s30, 0
      %p225 = por %p223, %p224
      %s227 = sadd.s32 %s226, 1
      %p230 = scmp.eq.s32.totalorder %s24, 1
      %p231 = scmp.ne.s32.totalorder %s226, %s228
      %p232 = scmp.eq.s32.totalorder %s24, 0
      %p233 = por %p231, %p232
      %p234 = scmp.ne.s32.totalorder %s226, %s228
      %p235 = scmp.eq.s32.totalorder %s29, 1
      %p236 = por %p234, %p235
      %p237 = scmp.ne.s32.totalorder %s228, %s229
      %p238 = scmp.eq.s32.totalorder %s29, 0
      %p239 = por %p237, %p238
      %p240 = scmp.ne.s32.totalorder %s228, %s229
      %p241 = scmp.eq.s32.totalorder %s30, 1
      %p242 = por %p240, %p241
      %p244 = scmp.ne.s32.totalorder %s229, %s243
      %p245 = scmp.eq.s32.totalorder %s30, 0
      %p246 = por %p244, %p245
      %s248 = sadd.s32 %s247, 1
      %p251 = scmp.eq.s32.totalorder %s24, 1
      %p252 = scmp.ne.s32.totalorder %s247, %s249
      %p253 = scmp.eq.s32.totalorder %s24, 0
      %p254 = por %p252, %p253
      %p255 = scmp.ne.s32.totalorder %s247, %s249
      %p256 = scmp.eq.s32.totalorder %s29, 1
      %p257 = por %p255, %p256
      %p258 = scmp.ne.s32.totalorder %s249, %s250
      %p259 = scmp.eq.s32.totalorder %s29, 0
      %p260 = por %p258, %p259
      %p261 = scmp.ne.s32.totalorder %s249, %s250
      %p262 = scmp.eq.s32.totalorder %s30, 1
      %p263 = por %p261, %p262
      %p265 = scmp.ne.s32.totalorder %s250, %s264
      %p266 = scmp.eq.s32.totalorder %s30, 0
      %p267 = por %p265, %p266
      %s269 = sadd.s32 %s268, 1
      %p272 = scmp.eq.s32.totalorder %s24, 1
      %p273 = scmp.ne.s32.totalorder %s268, %s270
      %p274 = scmp.eq.s32.totalorder %s24, 0
      %p275 = por %p273, %p274
      %p276 = scmp.ne.s32.totalorder %s268, %s270
      %p277 = scmp.eq.s32.totalorder %s29, 1
      %p278 = por %p276, %p277
      %p279 = scmp.ne.s32.totalorder %s270, %s271
      %p280 = scmp.eq.s32.totalorder %s29, 0
      %p281 = por %p279, %p280
      %p282 = scmp.ne.s32.totalorder %s270, %s271
      %p283 = scmp.eq.s32.totalorder %s30, 1
      %p284 = por %p282, %p283
      %p286 = scmp.ne.s32.totalorder %s271, %s285
      %p287 = scmp.eq.s32.totalorder %s30, 0
      %p288 = por %p286, %p287
      %s290 = sadd.s32 %s289, 1
      %p293 = scmp.eq.s32.totalorder %s24, 1
      %p294 = scmp.ne.s32.totalorder %s289, %s291
      %p295 = scmp.eq.s32.totalorder %s24, 0
      %p296 = por %p294, %p295
      %p297 = scmp.ne.s32.totalorder %s289, %s291
      %p298 = scmp.eq.s32.totalorder %s29, 1
      %p299 = por %p297, %p298
      %p300 = scmp.ne.s32.totalorder %s291, %s292
      %p301 = scmp.eq.s32.totalorder %s29, 0
      %p302 = por %p300, %p301
      %p303 = scmp.ne.s32.totalorder %s291, %s292
      %p304 = scmp.eq.s32.totalorder %s30, 1
      %p305 = por %p303, %p304
      %p307 = scmp.ne.s32.totalorder %s292, %s306
      %p308 = scmp.eq.s32.totalorder %s30, 0
      %p309 = por %p307, %p308
      %s311 = sadd.s32 %s310, 1
      %p314 = scmp.eq.s32.totalorder %s24, 1
      %p315 = scmp.ne.s32.totalorder %s310, %s312
      %p316 = scmp.eq.s32.totalorder %s24, 0
      %p317 = por %p315, %p316
      %p318 = scmp.ne.s32.totalorder %s310, %s312
      %p319 = scmp.eq.s32.totalorder %s29, 1
      %p320 = por %p318, %p319
      %p321 = scmp.ne.s32.totalorder %s312, %s313
      %p322 = scmp.eq.s32.totalorder %s29, 0
      %p323 = por %p321, %p322
      %p324 = scmp.ne.s32.totalorder %s312, %s313
      %p325 = scmp.eq.s32.totalorder %s30, 1
      %p326 = por %p324, %p325
      %p328 = scmp.ne.s32.totalorder %s313, %s327
      %p329 = scmp.eq.s32.totalorder %s30, 0
      %p330 = por %p328, %p329
      %s332 = sadd.s32 %s331, 1
      %p335 = scmp.eq.s32.totalorder %s24, 1
      %p336 = scmp.ne.s32.totalorder %s331, %s333
      %p337 = scmp.eq.s32.totalorder %s24, 0
      %p338 = por %p336, %p337
      %p339 = scmp.ne.s32.totalorder %s331, %s333
      %p340 = scmp.eq.s32.totalorder %s29, 1
      %p341 = por %p339, %p340
      %p342 = scmp.ne.s32.totalorder %s333, %s334
      %p343 = scmp.eq.s32.totalorder %s29, 0
      %p344 = por %p342, %p343
      %p345 = scmp.ne.s32.totalorder %s333, %s334
      %p346 = scmp.eq.s32.totalorder %s30, 1
      %p347 = por %p345, %p346
      %p349 = scmp.ne.s32.totalorder %s334, %s348
      %p350 = scmp.eq.s32.totalorder %s30, 0
      %p351 = por %p349, %p350
      %s352 = ssub.s32 %s24, %s31
      %p353 = scmp.eq.s32.totalorder %s352, 0
      %s355 = sadd.s32 %s354, 1
      %s356 = scalar_select %p353, %s354, %s355
      %p359 = pneg %p353
      %p360 = scmp.eq.s32.totalorder %s24, 1
      %p361 = por %p359, %p360
      %p362 = scmp.ne.s32.totalorder %s354, %s357
      %p363 = scmp.eq.s32.totalorder %s24, 0
      %p364 = por %p362, %p363
      %p365 = scmp.ne.s32.totalorder %s354, %s357
      %p366 = scmp.eq.s32.totalorder %s29, 1
      %p367 = por %p365, %p366
      %p368 = scmp.ne.s32.totalorder %s357, %s358
      %p369 = scmp.eq.s32.totalorder %s29, 0
      %p370 = por %p368, %p369
      %p371 = scmp.ne.s32.totalorder %s357, %s358
      %p372 = scmp.eq.s32.totalorder %s30, 1
      %p373 = por %p371, %p372
      %p375 = scmp.ne.s32.totalorder %s358, %s374
      %p376 = scmp.eq.s32.totalorder %s30, 0
      %p377 = por %p375, %p376
      %p378 = scmp.le.s32.totalorder 1, %s24
      %p379 = scmp.lt.s32.totalorder %s24, 3
      %p380 = pnand %p378, %p379
      %p381 = pneg %p380
      // Predicated region
      $region9: #{neuralnet_forward.1} parent=5 // pred_check
        _
      $region10: #{neuralnet_forward.1} parent=5 // pred_check_branch
        %383 = sbr.rel (%p380) target = $region12
      $region11: #{neuralnet_forward.1} parent=5 // pred_region
        %s384 = ssub.s32 %s24, 1
        // Predicated region
        $region13: #{neuralnet_forward.1} parent=11 // pred_check
          %p385 = pneg %p71
        $region14: #{neuralnet_forward.1} parent=11 // pred_check_branch
          %387 = sbr.rel (%p385) target = $region16
        $region15: #{neuralnet_forward.1} parent=11 // pred_region
          _
        $region16: #{neuralnet_forward.1} parent=11 // pred_fallthru
          _
        // Predicated region
        $region17: #{neuralnet_forward.1} parent=11 // pred_check
          %p388 = pneg %p92
        $region18: #{neuralnet_forward.1} parent=11 // pred_check_branch
          %390 = sbr.rel (%p388) target = $region20
        $region19: #{neuralnet_forward.1} parent=11 // pred_region
          _
        $region20: #{neuralnet_forward.1} parent=11 // pred_fallthru
          _
        // Predicated region
        $region21: #{neuralnet_forward.1} parent=11 // pred_check
          %p391 = pneg %p113
        $region22: #{neuralnet_forward.1} parent=11 // pred_check_branch
          %393 = sbr.rel (%p391) target = $region24
        $region23: #{neuralnet_forward.1} parent=11 // pred_region
          _
        $region24: #{neuralnet_forward.1} parent=11 // pred_fallthru
          _
        // Predicated region
        $region25: #{neuralnet_forward.1} parent=11 // pred_check
          %p394 = pneg %p134
        $region26: #{neuralnet_forward.1} parent=11 // pred_check_branch
          %396 = sbr.rel (%p394) target = $region28
        $region27: #{neuralnet_forward.1} parent=11 // pred_region
          _
        $region28: #{neuralnet_forward.1} parent=11 // pred_fallthru
          _
        // Predicated region
        $region29: #{neuralnet_forward.1} parent=11 // pred_check
          %p397 = pneg %p155
        $region30: #{neuralnet_forward.1} parent=11 // pred_check_branch
          %399 = sbr.rel (%p397) target = $region32
        $region31: #{neuralnet_forward.1} parent=11 // pred_region
          _
        $region32: #{neuralnet_forward.1} parent=11 // pred_fallthru
          _
        // Predicated region
        $region33: #{neuralnet_forward.1} parent=11 // pred_check
          %p400 = pneg %p176
        $region34: #{neuralnet_forward.1} parent=11 // pred_check_branch
          %402 = sbr.rel (%p400) target = $region36
        $region35: #{neuralnet_forward.1} parent=11 // pred_region
          _
        $region36: #{neuralnet_forward.1} parent=11 // pred_fallthru
          _
        // Predicated region
        $region37: #{neuralnet_forward.1} parent=11 // pred_check
          %p403 = pneg %p197
        $region38: #{neuralnet_forward.1} parent=11 // pred_check_branch
          %405 = sbr.rel (%p403) target = $region40
        $region39: #{neuralnet_forward.1} parent=11 // pred_region
          _
        $region40: #{neuralnet_forward.1} parent=11 // pred_fallthru
          _
        // Predicated region
        $region41: #{neuralnet_forward.1} parent=11 // pred_check
          %p406 = pneg %p218
        $region42: #{neuralnet_forward.1} parent=11 // pred_check_branch
          %408 = sbr.rel (%p406) target = $region44
        $region43: #{neuralnet_forward.1} parent=11 // pred_region
          _
        $region44: #{neuralnet_forward.1} parent=11 // pred_fallthru
          _
        // Predicated region
        $region45: #{neuralnet_forward.1} parent=11 // pred_check
          %p409 = pneg %p239
        $region46: #{neuralnet_forward.1} parent=11 // pred_check_branch
          %411 = sbr.rel (%p409) target = $region48
        $region47: #{neuralnet_forward.1} parent=11 // pred_region
          _
        $region48: #{neuralnet_forward.1} parent=11 // pred_fallthru
          _
        // Predicated region
        $region49: #{neuralnet_forward.1} parent=11 // pred_check
          %p412 = pneg %p260
        $region50: #{neuralnet_forward.1} parent=11 // pred_check_branch
          %414 = sbr.rel (%p412) target = $region52
        $region51: #{neuralnet_forward.1} parent=11 // pred_region
          _
        $region52: #{neuralnet_forward.1} parent=11 // pred_fallthru
          _
        // Predicated region
        $region53: #{neuralnet_forward.1} parent=11 // pred_check
          %p415 = pneg %p281
        $region54: #{neuralnet_forward.1} parent=11 // pred_check_branch
          %417 = sbr.rel (%p415) target = $region56
        $region55: #{neuralnet_forward.1} parent=11 // pred_region
          _
        $region56: #{neuralnet_forward.1} parent=11 // pred_fallthru
          _
        // Predicated region
        $region57: #{neuralnet_forward.1} parent=11 // pred_check
          %p418 = pneg %p302
        $region58: #{neuralnet_forward.1} parent=11 // pred_check_branch
          %420 = sbr.rel (%p418) target = $region60
        $region59: #{neuralnet_forward.1} parent=11 // pred_region
          _
        $region60: #{neuralnet_forward.1} parent=11 // pred_fallthru
          _
        // Predicated region
        $region61: #{neuralnet_forward.1} parent=11 // pred_check
          %p421 = pneg %p323
        $region62: #{neuralnet_forward.1} parent=11 // pred_check_branch
          %423 = sbr.rel (%p421) target = $region64
        $region63: #{neuralnet_forward.1} parent=11 // pred_region
          _
        $region64: #{neuralnet_forward.1} parent=11 // pred_fallthru
          _
        // Predicated region
        $region65: #{neuralnet_forward.1} parent=11 // pred_check
          %p424 = pneg %p344
        $region66: #{neuralnet_forward.1} parent=11 // pred_check_branch
          %426 = sbr.rel (%p424) target = $region68
        $region67: #{neuralnet_forward.1} parent=11 // pred_region
          _
        $region68: #{neuralnet_forward.1} parent=11 // pred_fallthru
          _
      $region12: #{neuralnet_forward.1} parent=5 // pred_fallthru
        _
      %p427 = scmp.lt.s32.totalorder %s24, 2
      // Predicated region
      $region69: #{neuralnet_forward.1} parent=5 // pred_check
        %p428 = pneg %p427
      $region70: #{neuralnet_forward.1} parent=5 // pred_check_branch
        %430 = sbr.rel (%p428) target = $region72
      $region71: #{neuralnet_forward.1} parent=5 // pred_region
        // Predicated region
        $region73: #{neuralnet_forward.1} parent=71 // pred_check
          %p431 = pneg %p44
        $region74: #{neuralnet_forward.1} parent=71 // pred_check_branch
          %433 = sbr.rel (%p431) target = $region76
        $region75: #{neuralnet_forward.1} parent=71 // pred_region
          %p434 = scmp.lt.s32.totalorder %s24, 1
          %s435 = scalar_select %p434, %s24, 1
          %s436 = smul.addr %s435, 4
          %s437 = smul.addr %s436, 8
          %s438 = scalar_lea.vmem %s0, %s437
        $region76: #{neuralnet_forward.1} parent=71 // pred_fallthru
          _
      $region72: #{neuralnet_forward.1} parent=5 // pred_fallthru
        _
      %p439 = scmp.le.s32.totalorder 1, %s24
      %p440 = scmp.lt.s32.totalorder %s24, 3
      %p441 = pnand %p439, %p440
      %p442 = pneg %p441
      // Predicated region
      $region77: #{neuralnet_forward.1} parent=5 // pred_check
        _
      $region78: #{neuralnet_forward.1} parent=5 // pred_check_branch
        %444 = sbr.rel (%p441) target = $region80
      $region79: #{neuralnet_forward.1} parent=5 // pred_region
        %s445 = ssub.s32 %s24, 1
        %p446 = scmp.lt.s32.totalorder %s29, 1
        %s447 = scalar_select %p446, %s29, 1
        %s448 = smul.addr %s447, 4
        %s449 = smul.addr %s448, 8
        %s450 = scalar_lea.vmem %s0, %s449
        %p451 = pneg %p50
        %p452 = pneg %p47
        %p453 = pneg %p71
        %p454 = pneg %p68
        %p455 = pneg %p92
        %p456 = pneg %p89
        %p457 = pneg %p113
        %p458 = pneg %p110
        %p459 = pneg %p134
        %p460 = pneg %p131
        %p461 = pneg %p155
        %p462 = pneg %p152
        %p463 = pneg %p176
        %p464 = pneg %p173
        %p465 = pneg %p197
        %p466 = pneg %p194
        %p467 = pneg %p218
        %p468 = pneg %p215
        %p469 = pneg %p239
        %p470 = pneg %p236
        %p471 = pneg %p260
        %p472 = pneg %p257
        %p473 = pneg %p281
        %p474 = pneg %p278
        %p475 = pneg %p302
        %p476 = pneg %p299
        %p477 = pneg %p323
        %p478 = pneg %p320
        %p479 = pneg %p344
        %p480 = pneg %p341
        %p481 = pneg %p370
        %p482 = pneg %p367
        %s483 = sand.u32 %s357, 1
        %s484 = scalar_lea.sflag [#allocation3], %s483
        %s485 = sand.u32 %s357, 1
        %s486 = scalar_lea.vmem [#allocation2], %s485
        %p487 = scmp.lt.s32.totalorder %s29, 1
        %s488 = scalar_select %p487, %s29, 1
        %s489 = smul.addr %s488, 4
        %s490 = smul.addr %s489, 8
        %s491 = scalar_lea.vmem %s0, %s490
        %v493 = vld [vmem:[%s491] sm:$0xff]
        %v494 = vld [vmem:[%s491 + $0x8] sm:$0xff]
        %v495 = vld [vmem:[%s491 + $0x10] sm:$0xff]
        %v496 = vld [vmem:[%s491 + $0x18] sm:$0xf]
        %v497 = vpack.c.bf16 %v494, %v493
        %v498 = vpack.c.bf16 %v495, %v495
        %v499 = vld [vmem:[%s1] sm:$0xff]
        %v500 = vld [vmem:[%s1 + $0x8] sm:$0xf]
        %v501 = vld [vmem:[%s1 + $0xc] sm:$0xff]
        %v502 = vld [vmem:[%s1 + $0x14] sm:$0xf]
        %v503 = vld [vmem:[%s1 + $0x18] sm:$0xff]
        %v504 = vld [vmem:[%s1 + $0x20] sm:$0xf]
        %v505 = vld [vmem:[%s1 + $0x24] sm:$0x33]
        %v506 = vld [vmem:[%s1 + $0x2c] sm:$0x3]
        %v507 = vpack.c.bf16 %v496, %v495
        %s508 = scalar_lea.vmem %s1, 48
        %v509 = vld [vmem:[%s508] sm:$0xff]
        %v510 = vld [vmem:[%s508 + $0x8] sm:$0xf]
        %v511 = vld [vmem:[%s508 + $0xc] sm:$0xff]
        %v512 = vld [vmem:[%s508 + $0x14] sm:$0xf]
        %v513 = vld [vmem:[%s508 + $0x18] sm:$0xff]
        %v514 = vld [vmem:[%s508 + $0x20] sm:$0xf]
        %v515 = vld [vmem:[%s508 + $0x24] sm:$0x33]
        %v516 = vld [vmem:[%s508 + $0x2c] sm:$0x3]
        %vm517 = vsmask.f32 7424
        %v519 = vshrl.u32 %v497, 16
        %v521 = vshll.u32 %v497, 16
        %v523 = vrot.slane %v521, 1
        %v524 = vor.u32 %v519, %v523
        %v526 = vshll.u32 %v507, 16
        %v528 = vrot.slane %v526, 1
        %v529 = vsel %vm517, %v524, %v528
        %v530 = vshrl.u32 %v507, 16
        %v532 = vor.u32 %v530, %v528
        %v541 = vunpack.c.l.b16 %v509
        %v542 = vunpack.c.h.b16 %v509
        %v543 = vunpack.c.l.b16 %v510
        %v544 = vunpack.c.l.b16 %v511
        %v545 = vunpack.c.h.b16 %v511
        %v546 = vunpack.c.l.b16 %v512
        %v547 = vunpack.c.l.b16 %v513
        %v548 = vunpack.c.h.b16 %v513
        %v549 = vunpack.c.l.b16 %v514
        %v550 = vunpack.c.l.b16 %v515
        %v551 = vunpack.c.h.b16 %v515
        %v552 = vunpack.c.l.b16 %v516
        %v553 = vpack.c.b16 %v544, %v541
        %v554 = vpack.c.b16 %v545, %v542
        %v555 = vpack.c.b16 %v546, %v543
        %v556 = vpack.c.b16 %v550, %v547
        %v557 = vpack.c.b16 %v551, %v548
        %v558 = vpack.c.b16 %v552, %v549
        %vm562 = vcmask 228352
        %v564 = vsel %vm562, %v529, 0
        %v567 = vsel %vm562, %v532, 0
        %vm569 = vcmask 1045504
        %v571 = vsel %vm569, %v556, 0
        %v574 = vsel %vm569, %v557, 0
        %v577 = vsel %vm569, %v558, 0
        %579 = vmatpush.bf16.msra.mxu0 0
        %580 = vmatpush.bf16.msra.mxu0 0
        %581 = vmatpush.bf16.msra.mxu0 0
        %582 = vmatpush.bf16.msra.mxu0 0
        %583 = vmatpush.bf16.msra.mxu0 0
        %584 = vmatpush.bf16.msra.mxu0 0
        %585 = vmatpush.bf16.msra.mxu0 %v571
        %586 = vmatpush.bf16.msra.mxu0 %v553
        %587 = vmatmul.bf16.gmra.mxu0 %v564
        %v588 = vpop.f32.mrf.mxu0
        %v589 = vadd.f32 0.0, %v588
        %v590 = vpop.f32.mrf.mxu0
        %v591 = vadd.f32 0.0, %v590
        %592 = vmatmul.bf16.gmra.mxu0 %v567
        %v593 = vpop.f32.mrf.mxu0
        %v594 = vadd.f32 0.0, %v593
        %v595 = vpop.f32.mrf.mxu0
        %596 = vdwg.mxu0
        %597 = vmatpush.bf16.msra.mxu0 0
        %598 = vmatpush.bf16.msra.mxu0 0
        %599 = vmatpush.bf16.msra.mxu0 0
        %600 = vmatpush.bf16.msra.mxu0 0
        %601 = vmatpush.bf16.msra.mxu0 0
        %602 = vmatpush.bf16.msra.mxu0 0
        %603 = vmatpush.bf16.msra.mxu0 %v574
        %604 = vmatpush.bf16.msra.mxu0 %v554
        %605 = vmatmul.bf16.gmra.mxu0 %v564
        %v606 = vpop.f32.mrf.mxu0
        %v607 = vadd.f32 0.0, %v606
        %v608 = vpop.f32.mrf.mxu0
        %v609 = vadd.f32 0.0, %v608
        %610 = vmatmul.bf16.gmra.mxu0 %v567
        %v611 = vpop.f32.mrf.mxu0
        %v612 = vadd.f32 0.0, %v611
        %v613 = vpop.f32.mrf.mxu0
        %614 = vdwg.mxu0
        %615 = vmatpush.bf16.msra.mxu0 0
        %616 = vmatpush.bf16.msra.mxu0 0
        %617 = vmatpush.bf16.msra.mxu0 0
        %618 = vmatpush.bf16.msra.mxu0 0
        %619 = vmatpush.bf16.msra.mxu0 0
        %620 = vmatpush.bf16.msra.mxu0 0
        %621 = vmatpush.bf16.msra.mxu0 %v577
        %622 = vmatpush.bf16.msra.mxu0 %v555
        %623 = vmatmul.bf16.gmra.mxu0 %v564
        %v624 = vpop.f32.mrf.mxu0
        %v625 = vadd.f32 0.0, %v624
        %v626 = vpop.f32.mrf.mxu0
        %v627 = vadd.f32 0.0, %v626
        %628 = vmatmul.bf16.gmra.mxu0 %v567
        %v629 = vpop.f32.mrf.mxu0
        %v630 = vadd.f32 0.0, %v629
        %v631 = vpop.f32.mrf.mxu0
        %632 = vdwg.mxu0
        %v641 = vunpack.c.l.b16 %v499
        %v642 = vunpack.c.h.b16 %v499
        %v643 = vunpack.c.l.b16 %v500
        %v644 = vunpack.c.l.b16 %v501
        %v645 = vunpack.c.h.b16 %v501
        %v646 = vunpack.c.l.b16 %v502
        %v647 = vunpack.c.l.b16 %v503
        %v648 = vunpack.c.h.b16 %v503
        %v649 = vunpack.c.l.b16 %v504
        %v650 = vunpack.c.l.b16 %v505
        %v651 = vunpack.c.h.b16 %v505
        %v652 = vunpack.c.l.b16 %v506
        %v653 = vpack.c.b16 %v644, %v641
        %v654 = vpack.c.b16 %v645, %v642
        %v655 = vpack.c.b16 %v646, %v643
        %v656 = vpack.c.b16 %v650, %v647
        %v657 = vpack.c.b16 %v651, %v648
        %v658 = vpack.c.b16 %v652, %v649
        %v662 = vsel %vm562, %v497, 0
        %v665 = vsel %vm562, %v498, 0
        %v668 = vsel %vm569, %v656, 0
        %v671 = vsel %vm569, %v657, 0
        %v674 = vsel %vm569, %v658, 0
        %676 = vmatpush.bf16.msra.mxu0 0
        %677 = vmatpush.bf16.msra.mxu0 0
        %678 = vmatpush.bf16.msra.mxu0 0
        %679 = vmatpush.bf16.msra.mxu0 0
        %680 = vmatpush.bf16.msra.mxu0 0
        %681 = vmatpush.bf16.msra.mxu0 0
        %682 = vmatpush.bf16.msra.mxu0 %v668
        %683 = vmatpush.bf16.msra.mxu0 %v653
        %684 = vmatmul.bf16.gmra.mxu0 %v662
        %v685 = vpop.f32.mrf.mxu0
        %v686 = vadd.f32 %v589, %v685
        %v687 = vpop.f32.mrf.mxu0
        %v688 = vadd.f32 %v591, %v687
        %689 = vmatmul.bf16.gmra.mxu0 %v665
        %v690 = vpop.f32.mrf.mxu0
        %v691 = vadd.f32 %v594, %v690
        %v692 = vpop.f32.mrf.mxu0
        %693 = vdwg.mxu0
        %694 = vmatpush.bf16.msra.mxu0 0
        %695 = vmatpush.bf16.msra.mxu0 0
        %696 = vmatpush.bf16.msra.mxu0 0
        %697 = vmatpush.bf16.msra.mxu0 0
        %698 = vmatpush.bf16.msra.mxu0 0
        %699 = vmatpush.bf16.msra.mxu0 0
        %700 = vmatpush.bf16.msra.mxu0 %v671
        %701 = vmatpush.bf16.msra.mxu0 %v654
        %702 = vmatmul.bf16.gmra.mxu0 %v662
        %v703 = vpop.f32.mrf.mxu0
        %v704 = vadd.f32 %v607, %v703
        %v705 = vpop.f32.mrf.mxu0
        %v706 = vadd.f32 %v609, %v705
        %707 = vmatmul.bf16.gmra.mxu0 %v665
        %v708 = vpop.f32.mrf.mxu0
        %v709 = vadd.f32 %v612, %v708
        %v710 = vpop.f32.mrf.mxu0
        %711 = vdwg.mxu0
        %712 = vmatpush.bf16.msra.mxu0 0
        %713 = vmatpush.bf16.msra.mxu0 0
        %714 = vmatpush.bf16.msra.mxu0 0
        %715 = vmatpush.bf16.msra.mxu0 0
        %716 = vmatpush.bf16.msra.mxu0 0
        %717 = vmatpush.bf16.msra.mxu0 0
        %718 = vmatpush.bf16.msra.mxu0 %v674
        %719 = vmatpush.bf16.msra.mxu0 %v655
        %720 = vmatmul.bf16.gmra.mxu0 %v662
        %v721 = vpop.f32.mrf.mxu0
        %v722 = vadd.f32 %v625, %v721
        %v723 = vpop.f32.mrf.mxu0
        %v724 = vadd.f32 %v627, %v723
        %725 = vmatmul.bf16.gmra.mxu0 %v665
        %v726 = vpop.f32.mrf.mxu0
        %v727 = vadd.f32 %v630, %v726
        %v728 = vpop.f32.mrf.mxu0
        %729 = vdwg.mxu0
        %s730 = scalar_lea.vmem %s1, 96
        %v731 = vld [vmem:[%s730] sm:$0xff]
        %v732 = vld [vmem:[%s730 + $0x8] sm:$0xf]
        %v733 = vld [vmem:[%s730 + $0xc] sm:$0xff]
        %v734 = vld [vmem:[%s730 + $0x14] sm:$0xf]
        %v735 = vld [vmem:[%s730 + $0x18] sm:$0xff]
        %v736 = vld [vmem:[%s730 + $0x20] sm:$0xf]
        %v737 = vld [vmem:[%s730 + $0x24] sm:$0x33]
        %v738 = vld [vmem:[%s730 + $0x2c] sm:$0x3]
        %vm741 = vcmask 1046528
        %v742 = vrot.slane %v497, 1
        %v743 = vrot.slane %v507, 1
        %v744 = vsel %vm741, %v742, %v743
        %v753 = vunpack.c.l.b16 %v731
        %v754 = vunpack.c.h.b16 %v731
        %v755 = vunpack.c.l.b16 %v732
        %v756 = vunpack.c.l.b16 %v733
        %v757 = vunpack.c.h.b16 %v733
        %v758 = vunpack.c.l.b16 %v734
        %v759 = vunpack.c.l.b16 %v735
        %v760 = vunpack.c.h.b16 %v735
        %v761 = vunpack.c.l.b16 %v736
        %v762 = vunpack.c.l.b16 %v737
        %v763 = vunpack.c.h.b16 %v737
        %v764 = vunpack.c.l.b16 %v738
        %v765 = vpack.c.b16 %v756, %v753
        %v766 = vpack.c.b16 %v757, %v754
        %v767 = vpack.c.b16 %v758, %v755
        %v768 = vpack.c.b16 %v762, %v759
        %v769 = vpack.c.b16 %v763, %v760
        %v770 = vpack.c.b16 %v764, %v761
        %v775 = vsel %vm562, %v744, 0
        %v778 = vsel %vm562, %v743, 0
        %v781 = vsel %vm569, %v768, 0
        %v784 = vsel %vm569, %v769, 0
        %v787 = vsel %vm569, %v770, 0
        %789 = vmatpush.bf16.msra.mxu0 0
        %790 = vmatpush.bf16.msra.mxu0 0
        %791 = vmatpush.bf16.msra.mxu0 0
        %792 = vmatpush.bf16.msra.mxu0 0
        %793 = vmatpush.bf16.msra.mxu0 0
        %794 = vmatpush.bf16.msra.mxu0 0
        %795 = vmatpush.bf16.msra.mxu0 %v781
        %796 = vmatpush.bf16.msra.mxu0 %v765
        %797 = vmatmul.bf16.gmra.mxu0 %v775
        %v798 = vpop.f32.mrf.mxu0
        %v799 = vadd.f32 0.0, %v798
        %v800 = vpop.f32.mrf.mxu0
        %v801 = vadd.f32 0.0, %v800
        %802 = vmatmul.bf16.gmra.mxu0 %v778
        %v803 = vpop.f32.mrf.mxu0
        %v804 = vadd.f32 0.0, %v803
        %v805 = vpop.f32.mrf.mxu0
        %806 = vdwg.mxu0
        %807 = vmatpush.bf16.msra.mxu0 0
        %808 = vmatpush.bf16.msra.mxu0 0
        %809 = vmatpush.bf16.msra.mxu0 0
        %810 = vmatpush.bf16.msra.mxu0 0
        %811 = vmatpush.bf16.msra.mxu0 0
        %812 = vmatpush.bf16.msra.mxu0 0
        %813 = vmatpush.bf16.msra.mxu0 %v784
        %814 = vmatpush.bf16.msra.mxu0 %v766
        %815 = vmatmul.bf16.gmra.mxu0 %v775
        %v816 = vpop.f32.mrf.mxu0
        %v817 = vadd.f32 0.0, %v816
        %v818 = vpop.f32.mrf.mxu0
        %v819 = vadd.f32 0.0, %v818
        %820 = vmatmul.bf16.gmra.mxu0 %v778
        %v821 = vpop.f32.mrf.mxu0
        %v822 = vadd.f32 0.0, %v821
        %v823 = vpop.f32.mrf.mxu0
        %824 = vdwg.mxu0
        %825 = vmatpush.bf16.msra.mxu0 0
        %826 = vmatpush.bf16.msra.mxu0 0
        %827 = vmatpush.bf16.msra.mxu0 0
        %828 = vmatpush.bf16.msra.mxu0 0
        %829 = vmatpush.bf16.msra.mxu0 0
        %830 = vmatpush.bf16.msra.mxu0 0
        %831 = vmatpush.bf16.msra.mxu0 %v787
        %832 = vmatpush.bf16.msra.mxu0 %v767
        %833 = vmatmul.bf16.gmra.mxu0 %v775
        %v834 = vpop.f32.mrf.mxu0
        %v835 = vadd.f32 0.0, %v834
        %v836 = vpop.f32.mrf.mxu0
        %v837 = vadd.f32 0.0, %v836
        %838 = vmatmul.bf16.gmra.mxu0 %v778
        %v839 = vpop.f32.mrf.mxu0
        %v840 = vadd.f32 0.0, %v839
        %v841 = vpop.f32.mrf.mxu0
        %842 = vdwg.mxu0
        %v843 = vadd.f32 %v686, %v799
        %v844 = vadd.f32 %v704, %v817
        %v845 = vadd.f32 %v722, %v835
        %v846 = vadd.f32 %v688, %v801
        %v847 = vadd.f32 %v706, %v819
        %v848 = vadd.f32 %v724, %v837
        %v849 = vadd.f32 %v691, %v804
        %v850 = vadd.f32 %v709, %v822
        %v851 = vadd.f32 %v727, %v840
        %s852 = scalar_lea.vmem %s1, 144
        %v853 = vld [vmem:[%s852] sm:$0xff]
        %v854 = vld [vmem:[%s852 + $0x8] sm:$0xf]
        %v855 = vld [vmem:[%s852 + $0xc] sm:$0xff]
        %v856 = vld [vmem:[%s852 + $0x14] sm:$0xf]
        %v857 = vld [vmem:[%s852 + $0x18] sm:$0xff]
        %v858 = vld [vmem:[%s852 + $0x20] sm:$0xf]
        %v859 = vld [vmem:[%s852 + $0x24] sm:$0x33]
        %v860 = vld [vmem:[%s852 + $0x2c] sm:$0x3]
        %vm861 = vsmask.f32 6400
        %v862 = vrot.slane %v519, 1
        %v863 = vrot.slane %v521, 2
        %v864 = vor.u32 %v862, %v863
        %v865 = vrot.slane %v530, 1
        %v866 = vrot.slane %v526, 2
        %v867 = vor.u32 %v865, %v866
        %v868 = vsel %vm861, %v864, %v867
        %v877 = vunpack.c.l.b16 %v853
        %v878 = vunpack.c.h.b16 %v853
        %v879 = vunpack.c.l.b16 %v854
        %v880 = vunpack.c.l.b16 %v855
        %v881 = vunpack.c.h.b16 %v855
        %v882 = vunpack.c.l.b16 %v856
        %v883 = vunpack.c.l.b16 %v857
        %v884 = vunpack.c.h.b16 %v857
        %v885 = vunpack.c.l.b16 %v858
        %v886 = vunpack.c.l.b16 %v859
        %v887 = vunpack.c.h.b16 %v859
        %v888 = vunpack.c.l.b16 %v860
        %v889 = vpack.c.b16 %v880, %v877
        %v890 = vpack.c.b16 %v881, %v878
        %v891 = vpack.c.b16 %v882, %v879
        %v892 = vpack.c.b16 %v886, %v883
        %v893 = vpack.c.b16 %v887, %v884
        %v894 = vpack.c.b16 %v888, %v885
        %v899 = vsel %vm562, %v868, 0
        %v902 = vsel %vm562, %v867, 0
        %v905 = vsel %vm569, %v892, 0
        %v908 = vsel %vm569, %v893, 0
        %v911 = vsel %vm569, %v894, 0
        %913 = vmatpush.bf16.msra.mxu0 0
        %914 = vmatpush.bf16.msra.mxu0 0
        %915 = vmatpush.bf16.msra.mxu0 0
        %916 = vmatpush.bf16.msra.mxu0 0
        %917 = vmatpush.bf16.msra.mxu0 0
        %918 = vmatpush.bf16.msra.mxu0 0
        %919 = vmatpush.bf16.msra.mxu0 %v905
        %920 = vmatpush.bf16.msra.mxu0 %v889
        %921 = vmatmul.bf16.gmra.mxu0 %v899
        %v922 = vpop.f32.mrf.mxu0
        %v923 = vadd.f32 0.0, %v922
        %v924 = vpop.f32.mrf.mxu0
        %v925 = vadd.f32 0.0, %v924
        %926 = vmatmul.bf16.gmra.mxu0 %v902
        %v927 = vpop.f32.mrf.mxu0
        %v928 = vadd.f32 0.0, %v927
        %v929 = vpop.f32.mrf.mxu0
        %930 = vdwg.mxu0
        %931 = vmatpush.bf16.msra.mxu0 0
        %932 = vmatpush.bf16.msra.mxu0 0
        %933 = vmatpush.bf16.msra.mxu0 0
        %934 = vmatpush.bf16.msra.mxu0 0
        %935 = vmatpush.bf16.msra.mxu0 0
        %936 = vmatpush.bf16.msra.mxu0 0
        %937 = vmatpush.bf16.msra.mxu0 %v908
        %938 = vmatpush.bf16.msra.mxu0 %v890
        %939 = vmatmul.bf16.gmra.mxu0 %v899
        %v940 = vpop.f32.mrf.mxu0
        %v941 = vadd.f32 0.0, %v940
        %v942 = vpop.f32.mrf.mxu0
        %v943 = vadd.f32 0.0, %v942
        %944 = vmatmul.bf16.gmra.mxu0 %v902
        %v945 = vpop.f32.mrf.mxu0
        %v946 = vadd.f32 0.0, %v945
        %v947 = vpop.f32.mrf.mxu0
        %948 = vdwg.mxu0
        %949 = vmatpush.bf16.msra.mxu0 0
        %950 = vmatpush.bf16.msra.mxu0 0
        %951 = vmatpush.bf16.msra.mxu0 0
        %952 = vmatpush.bf16.msra.mxu0 0
        %953 = vmatpush.bf16.msra.mxu0 0
        %954 = vmatpush.bf16.msra.mxu0 0
        %955 = vmatpush.bf16.msra.mxu0 %v911
        %956 = vmatpush.bf16.msra.mxu0 %v891
        %957 = vmatmul.bf16.gmra.mxu0 %v899
        %v958 = vpop.f32.mrf.mxu0
        %v959 = vadd.f32 0.0, %v958
        %v960 = vpop.f32.mrf.mxu0
        %v961 = vadd.f32 0.0, %v960
        %962 = vmatmul.bf16.gmra.mxu0 %v902
        %v963 = vpop.f32.mrf.mxu0
        %v964 = vadd.f32 0.0, %v963
        %v965 = vpop.f32.mrf.mxu0
        %966 = vdwg.mxu0
        %v967 = vadd.f32 %v843, %v923
        %v968 = vadd.f32 %v844, %v941
        %v969 = vadd.f32 %v845, %v959
        %v970 = vadd.f32 %v846, %v925
        %v971 = vadd.f32 %v847, %v943
        %v972 = vadd.f32 %v848, %v961
        %v973 = vadd.f32 %v849, %v928
        %v974 = vadd.f32 %v850, %v946
        %v975 = vadd.f32 %v851, %v964
        %s976 = scalar_lea.vmem %s1, 192
        %v977 = vld [vmem:[%s976] sm:$0xff]
        %v978 = vld [vmem:[%s976 + $0x8] sm:$0xf]
        %v979 = vld [vmem:[%s976 + $0xc] sm:$0xff]
        %v980 = vld [vmem:[%s976 + $0x14] sm:$0xf]
        %v981 = vld [vmem:[%s976 + $0x18] sm:$0xff]
        %v982 = vld [vmem:[%s976 + $0x20] sm:$0xf]
        %v983 = vld [vmem:[%s976 + $0x24] sm:$0x33]
        %v984 = vld [vmem:[%s976 + $0x2c] sm:$0x3]
        %vm985 = vcmask 1045504
        %v986 = vrot.slane %v497, 2
        %v987 = vrot.slane %v507, 2
        %v988 = vsel %vm985, %v986, %v987
        %v997 = vunpack.c.l.b16 %v977
        %v998 = vunpack.c.h.b16 %v977
        %v999 = vunpack.c.l.b16 %v978
        %v1000 = vunpack.c.l.b16 %v979
        %v1001 = vunpack.c.h.b16 %v979
        %v1002 = vunpack.c.l.b16 %v980
        %v1003 = vunpack.c.l.b16 %v981
        %v1004 = vunpack.c.h.b16 %v981
        %v1005 = vunpack.c.l.b16 %v982
        %v1006 = vunpack.c.l.b16 %v983
        %v1007 = vunpack.c.h.b16 %v983
        %v1008 = vunpack.c.l.b16 %v984
        %v1009 = vpack.c.b16 %v1000, %v997
        %v1010 = vpack.c.b16 %v1001, %v998
        %v1011 = vpack.c.b16 %v1002, %v999
        %v1012 = vpack.c.b16 %v1006, %v1003
        %v1013 = vpack.c.b16 %v1007, %v1004
        %v1014 = vpack.c.b16 %v1008, %v1005
        %v1019 = vsel %vm562, %v988, 0
        %v1022 = vsel %vm562, %v987, 0
        %v1025 = vsel %vm569, %v1012, 0
        %v1028 = vsel %vm569, %v1013, 0
        %v1031 = vsel %vm569, %v1014, 0
        %1033 = vmatpush.bf16.msra.mxu0 0
        %1034 = vmatpush.bf16.msra.mxu0 0
        %1035 = vmatpush.bf16.msra.mxu0 0
        %1036 = vmatpush.bf16.msra.mxu0 0
        %1037 = vmatpush.bf16.msra.mxu0 0
        %1038 = vmatpush.bf16.msra.mxu0 0
        %1039 = vmatpush.bf16.msra.mxu0 %v1025
        %1040 = vmatpush.bf16.msra.mxu0 %v1009
        %1041 = vmatmul.bf16.gmra.mxu0 %v1019
        %v1042 = vpop.f32.mrf.mxu0
        %v1043 = vadd.f32 0.0, %v1042
        %v1044 = vpop.f32.mrf.mxu0
        %v1045 = vadd.f32 0.0, %v1044
        %1046 = vmatmul.bf16.gmra.mxu0 %v1022
        %v1047 = vpop.f32.mrf.mxu0
        %v1048 = vadd.f32 0.0, %v1047
        %v1049 = vpop.f32.mrf.mxu0
        %1050 = vdwg.mxu0
        %1051 = vmatpush.bf16.msra.mxu0 0
        %1052 = vmatpush.bf16.msra.mxu0 0
        %1053 = vmatpush.bf16.msra.mxu0 0
        %1054 = vmatpush.bf16.msra.mxu0 0
        %1055 = vmatpush.bf16.msra.mxu0 0
        %1056 = vmatpush.bf16.msra.mxu0 0
        %1057 = vmatpush.bf16.msra.mxu0 %v1028
        %1058 = vmatpush.bf16.msra.mxu0 %v1010
        %1059 = vmatmul.bf16.gmra.mxu0 %v1019
        %v1060 = vpop.f32.mrf.mxu0
        %v1061 = vadd.f32 0.0, %v1060
        %v1062 = vpop.f32.mrf.mxu0
        %v1063 = vadd.f32 0.0, %v1062
        %1064 = vmatmul.bf16.gmra.mxu0 %v1022
        %v1065 = vpop.f32.mrf.mxu0
        %v1066 = vadd.f32 0.0, %v1065
        %v1067 = vpop.f32.mrf.mxu0
        %1068 = vdwg.mxu0
        %1069 = vmatpush.bf16.msra.mxu0 0
        %1070 = vmatpush.bf16.msra.mxu0 0
        %1071 = vmatpush.bf16.msra.mxu0 0
        %1072 = vmatpush.bf16.msra.mxu0 0
        %1073 = vmatpush.bf16.msra.mxu0 0
        %1074 = vmatpush.bf16.msra.mxu0 0
        %1075 = vmatpush.bf16.msra.mxu0 %v1031
        %1076 = vmatpush.bf16.msra.mxu0 %v1011
        %1077 = vmatmul.bf16.gmra.mxu0 %v1019
        %v1078 = vpop.f32.mrf.mxu0
        %v1079 = vadd.f32 0.0, %v1078
        %v1080 = vpop.f32.mrf.mxu0
        %v1081 = vadd.f32 0.0, %v1080
        %1082 = vmatmul.bf16.gmra.mxu0 %v1022
        %v1083 = vpop.f32.mrf.mxu0
        %v1084 = vadd.f32 0.0, %v1083
        %v1085 = vpop.f32.mrf.mxu0
        %1086 = vdwg.mxu0
        %v1087 = vadd.f32 %v967, %v1043
        %v1088 = vadd.f32 %v968, %v1061
        %v1089 = vadd.f32 %v969, %v1079
        %v1090 = vadd.f32 %v970, %v1045
        %v1091 = vadd.f32 %v971, %v1063
        %v1092 = vadd.f32 %v972, %v1081
        %v1093 = vadd.f32 %v973, %v1048
        %v1094 = vadd.f32 %v974, %v1066
        %v1095 = vadd.f32 %v975, %v1084
        %v1096 = vld [vmem:[%s2] sm:$0x7]
        %v1098 = vperm.slane %v1096, 0
        %v1099 = vperm.slane %v1096, 1
        %v1100 = vperm.slane %v1096, 2
        %v1104 = vadd.f32 %v1087, %v1098
        %v1105 = vadd.f32 %v1088, %v1099
        %v1106 = vadd.f32 %v1089, %v1100
        %v1107 = vadd.f32 %v1090, %v1098
        %v1108 = vadd.f32 %v1091, %v1099
        %v1109 = vadd.f32 %v1092, %v1100
        %v1110 = vadd.f32 %v1093, %v1098
        %v1111 = vadd.f32 %v1094, %v1099
        %v1112 = vadd.f32 %v1095, %v1100
        %v1113 = vmax.f32 %v1104, 0.0
        %v1114 = vmax.f32 %v1105, 0.0
        %v1115 = vmax.f32 %v1106, 0.0
        %v1116 = vmax.f32 %v1107, 0.0
        %v1117 = vmax.f32 %v1108, 0.0
        %v1118 = vmax.f32 %v1109, 0.0
        %v1119 = vmax.f32 %v1110, 0.0
        %v1120 = vmax.f32 %v1111, 0.0
        %v1121 = vmax.f32 %v1112, 0.0
        %v1122 = vld [vmem:[%s3] sm:$0xff]
        %v1123 = vld [vmem:[%s3 + $0x8] sm:$0xf]
        %vm1124 = vcmask 195584
        %v1126 = vsel %vm1124, %v1122, 0
        %v1129 = vsel %vm1124, %v1123, 0
        %1131 = vmatpush.msra.mxu0 0.0
        %1132 = vmatpush.msra.mxu0 0.0
        %1133 = vmatpush.msra.mxu0 0.0
        %1134 = vmatpush.msra.mxu0 0.0
        %1135 = vmatpush.msra.mxu0 0.0
        %1136 = vmatpush.msra.mxu0 0.0
        %1137 = vmatpush.msra.mxu0 0.0
        %1138 = vmatpush.msra.mxu0 0.0
        %1139 = vmatpush.msra.mxu0 0.0
        %1140 = vmatpush.msra.mxu0 0.0
        %1141 = vmatpush.msra.mxu0 0.0
        %1142 = vmatpush.msra.mxu0 0.0
        %1143 = vmatpush.msra.mxu0 0.0
        %1144 = vmatpush.msra.mxu0 %v1119
        %1145 = vmatpush.msra.mxu0 %v1116
        %1146 = vmatpush.msra.mxu0 %v1113
        %1147 = vmatmul.f32.gmra.mxu0 %v1126
        %v1148 = vpop.f32.mrf.mxu0
        %v1149 = vadd.f32 0.0, %v1148
        %1150 = vmatmul.f32.gmra.mxu0 %v1129
        %v1151 = vpop.f32.mrf.mxu0
        %v1152 = vadd.f32 0.0, %v1151
        %1153 = vdwg.mxu0
        %1154 = vmatpush.msra.mxu0 0.0
        %1155 = vmatpush.msra.mxu0 0.0
        %1156 = vmatpush.msra.mxu0 0.0
        %1157 = vmatpush.msra.mxu0 0.0
        %1158 = vmatpush.msra.mxu0 0.0
        %1159 = vmatpush.msra.mxu0 0.0
        %1160 = vmatpush.msra.mxu0 0.0
        %1161 = vmatpush.msra.mxu0 0.0
        %1162 = vmatpush.msra.mxu0 0.0
        %1163 = vmatpush.msra.mxu0 0.0
        %1164 = vmatpush.msra.mxu0 0.0
        %1165 = vmatpush.msra.mxu0 0.0
        %1166 = vmatpush.msra.mxu0 0.0
        %1167 = vmatpush.msra.mxu0 %v1120
        %1168 = vmatpush.msra.mxu0 %v1117
        %1169 = vmatpush.msra.mxu0 %v1114
        %1170 = vmatmul.f32.gmra.mxu0 %v1126
        %v1171 = vpop.f32.mrf.mxu0
        %v1172 = vadd.f32 0.0, %v1171
        %1173 = vmatmul.f32.gmra.mxu0 %v1129
        %v1174 = vpop.f32.mrf.mxu0
        %v1175 = vadd.f32 0.0, %v1174
        %1176 = vdwg.mxu0
        %1177 = vmatpush.msra.mxu0 0.0
        %1178 = vmatpush.msra.mxu0 0.0
        %1179 = vmatpush.msra.mxu0 0.0
        %1180 = vmatpush.msra.mxu0 0.0
        %1181 = vmatpush.msra.mxu0 0.0
        %1182 = vmatpush.msra.mxu0 0.0
        %1183 = vmatpush.msra.mxu0 0.0
        %1184 = vmatpush.msra.mxu0 0.0
        %1185 = vmatpush.msra.mxu0 0.0
        %1186 = vmatpush.msra.mxu0 0.0
        %1187 = vmatpush.msra.mxu0 0.0
        %1188 = vmatpush.msra.mxu0 0.0
        %1189 = vmatpush.msra.mxu0 0.0
        %1190 = vmatpush.msra.mxu0 %v1121
        %1191 = vmatpush.msra.mxu0 %v1118
        %1192 = vmatpush.msra.mxu0 %v1115
        %1193 = vmatmul.f32.gmra.mxu0 %v1126
        %v1194 = vpop.f32.mrf.mxu0
        %v1195 = vadd.f32 0.0, %v1194
        %1196 = vmatmul.f32.gmra.mxu0 %v1129
        %v1197 = vpop.f32.mrf.mxu0
        %v1198 = vadd.f32 0.0, %v1197
        %1199 = vdwg.mxu0
        %s1200 = scalar_lea.vmem %s3, 16
        %v1201 = vld [vmem:[%s1200] sm:$0xff]
        %v1202 = vld [vmem:[%s1200 + $0x8] sm:$0xf]
        %v1204 = vsel %vm1124, %v1201, 0
        %v1207 = vsel %vm1124, %v1202, 0
        %1209 = vmatpush.msra.mxu0 0.0
        %1210 = vmatpush.msra.mxu0 0.0
        %1211 = vmatpush.msra.mxu0 0.0
        %1212 = vmatpush.msra.mxu0 0.0
        %1213 = vmatpush.msra.mxu0 0.0
        %1214 = vmatpush.msra.mxu0 0.0
        %1215 = vmatpush.msra.mxu0 0.0
        %1216 = vmatpush.msra.mxu0 0.0
        %1217 = vmatpush.msra.mxu0 0.0
        %1218 = vmatpush.msra.mxu0 0.0
        %1219 = vmatpush.msra.mxu0 0.0
        %1220 = vmatpush.msra.mxu0 0.0
        %1221 = vmatpush.msra.mxu0 0.0
        %1222 = vmatpush.msra.mxu0 %v1119
        %1223 = vmatpush.msra.mxu0 %v1116
        %1224 = vmatpush.msra.mxu0 %v1113
        %1225 = vmatmul.f32.gmra.mxu0 %v1204
        %v1226 = vpop.f32.mrf.mxu0
        %v1227 = vadd.f32 0.0, %v1226
        %1228 = vmatmul.f32.gmra.mxu0 %v1207
        %v1229 = vpop.f32.mrf.mxu0
        %v1230 = vadd.f32 0.0, %v1229
        %1231 = vdwg.mxu0
        %1232 = vmatpush.msra.mxu0 0.0
        %1233 = vmatpush.msra.mxu0 0.0
        %1234 = vmatpush.msra.mxu0 0.0
        %1235 = vmatpush.msra.mxu0 0.0
        %1236 = vmatpush.msra.mxu0 0.0
        %1237 = vmatpush.msra.mxu0 0.0
        %1238 = vmatpush.msra.mxu0 0.0
        %1239 = vmatpush.msra.mxu0 0.0
        %1240 = vmatpush.msra.mxu0 0.0
        %1241 = vmatpush.msra.mxu0 0.0
        %1242 = vmatpush.msra.mxu0 0.0
        %1243 = vmatpush.msra.mxu0 0.0
        %1244 = vmatpush.msra.mxu0 0.0
        %1245 = vmatpush.msra.mxu0 %v1120
        %1246 = vmatpush.msra.mxu0 %v1117
        %1247 = vmatpush.msra.mxu0 %v1114
        %1248 = vmatmul.f32.gmra.mxu0 %v1204
        %v1249 = vpop.f32.mrf.mxu0
        %v1250 = vadd.f32 0.0, %v1249
        %1251 = vmatmul.f32.gmra.mxu0 %v1207
        %v1252 = vpop.f32.mrf.mxu0
        %v1253 = vadd.f32 0.0, %v1252
        %1254 = vdwg.mxu0
        %1255 = vmatpush.msra.mxu0 0.0
        %1256 = vmatpush.msra.mxu0 0.0
        %1257 = vmatpush.msra.mxu0 0.0
        %1258 = vmatpush.msra.mxu0 0.0
        %1259 = vmatpush.msra.mxu0 0.0
        %1260 = vmatpush.msra.mxu0 0.0
        %1261 = vmatpush.msra.mxu0 0.0
        %1262 = vmatpush.msra.mxu0 0.0
        %1263 = vmatpush.msra.mxu0 0.0
        %1264 = vmatpush.msra.mxu0 0.0
        %1265 = vmatpush.msra.mxu0 0.0
        %1266 = vmatpush.msra.mxu0 0.0
        %1267 = vmatpush.msra.mxu0 0.0
        %1268 = vmatpush.msra.mxu0 %v1121
        %1269 = vmatpush.msra.mxu0 %v1118
        %1270 = vmatpush.msra.mxu0 %v1115
        %1271 = vmatmul.f32.gmra.mxu0 %v1204
        %v1272 = vpop.f32.mrf.mxu0
        %v1273 = vadd.f32 0.0, %v1272
        %1274 = vmatmul.f32.gmra.mxu0 %v1207
        %v1275 = vpop.f32.mrf.mxu0
        %v1276 = vadd.f32 0.0, %v1275
        %1277 = vdwg.mxu0
        %v1278 = vmax.f32 %v1149, %v1227
        %v1279 = vmax.f32 %v1172, %v1250
        %v1280 = vmax.f32 %v1195, %v1273
        %v1281 = vmax.f32 %v1152, %v1230
        %v1282 = vmax.f32 %v1175, %v1253
        %v1283 = vmax.f32 %v1198, %v1276
        %v1284 = vld [vmem:[%s4] sm:$0xff]
        %v1285 = vld [vmem:[%s4 + $0x8] sm:$0xff]
        %v1286 = vld [vmem:[%s4 + $0x10] sm:$0xff]
        %v1287 = vld [vmem:[%s4 + $0x18] sm:$0xff]
        %v1288 = vld [vmem:[%s4 + $0x20] sm:$0xff]
        %v1289 = vld [vmem:[%s4 + $0x28] sm:$0xff]
        %v1290 = vld [vmem:[%s4 + $0x30] sm:$0xff]
        %v1291 = vld [vmem:[%s4 + $0x38] sm:$0xff]
        %v1292 = vld [vmem:[%s4 + $0x40] sm:$0xff]
        %v1293 = vld [vmem:[%s4 + $0x48] sm:$0xff]
        %v1294 = vld [vmem:[%s4 + $0x50] sm:$0xff]
        %v1295 = vld [vmem:[%s4 + $0x58] sm:$0xff]
        %v1296 = vld [vmem:[%s4 + $0x60] sm:$0xff]
        %v1297 = vld [vmem:[%s4 + $0x68] sm:$0xff]
        %v1298 = vld [vmem:[%s4 + $0x70] sm:$0xff]
        %v1299 = vld [vmem:[%s4 + $0x78] sm:$0xff]
        %v1300 = vld [vmem:[%s4 + $0x80] sm:$0xff]
        %v1301 = vld [vmem:[%s4 + $0x88] sm:$0xff]
        %v1302 = vld [vmem:[%s4 + $0x90] sm:$0xff]
        %v1303 = vld [vmem:[%s4 + $0x98] sm:$0xff]
        %v1304 = vld [vmem:[%s4 + $0xa0] sm:$0xff]
        %v1305 = vld [vmem:[%s4 + $0xa8] sm:$0xff]
        %v1306 = vld [vmem:[%s4 + $0xb0] sm:$0xff]
        %v1307 = vld [vmem:[%s4 + $0xb8] sm:$0xff]
        %v1308 = vld [vmem:[%s4 + $0xc0] sm:$0xff]
        %v1309 = vld [vmem:[%s4 + $0xc8] sm:$0xff]
        %v1310 = vld [vmem:[%s4 + $0xd0] sm:$0xff]
        %v1311 = vld [vmem:[%s4 + $0xd8] sm:$0xff]
        %v1312 = vld [vmem:[%s4 + $0xe0] sm:$0xff]
        %v1313 = vld [vmem:[%s4 + $0xe8] sm:$0xff]
        %v1314 = vld [vmem:[%s4 + $0xf0] sm:$0xff]
        %v1315 = vld [vmem:[%s4 + $0xf8] sm:$0xff]
        %v1316 = vld [vmem:[%s4 + $0x100] sm:$0xff]
        %v1317 = vld [vmem:[%s4 + $0x108] sm:$0xff]
        %v1318 = vld [vmem:[%s4 + $0x110] sm:$0xff]
        %v1319 = vld [vmem:[%s4 + $0x118] sm:$0xff]
        %v1320 = vld [vmem:[%s4 + $0x120] sm:$0xff]
        %v1321 = vld [vmem:[%s4 + $0x128] sm:$0xff]
        %v1322 = vld [vmem:[%s4 + $0x130] sm:$0xff]
        %v1323 = vld [vmem:[%s4 + $0x138] sm:$0xff]
        %v1324 = vld [vmem:[%s4 + $0x140] sm:$0xff]
        %v1325 = vld [vmem:[%s4 + $0x148] sm:$0xff]
        %v1326 = vld [vmem:[%s4 + $0x150] sm:$0xff]
        %v1327 = vld [vmem:[%s4 + $0x158] sm:$0xff]
        %v1328 = vld [vmem:[%s4 + $0x160] sm:$0xff]
        %v1329 = vld [vmem:[%s4 + $0x168] sm:$0xff]
        %v1330 = vld [vmem:[%s4 + $0x170] sm:$0xff]
        %v1331 = vld [vmem:[%s4 + $0x178] sm:$0xff]
        %v1332 = vld [vmem:[%s4 + $0x180] sm:$0xff]
        %v1333 = vld [vmem:[%s4 + $0x188] sm:$0xff]
        %v1334 = vld [vmem:[%s4 + $0x190] sm:$0xff]
        %v1335 = vld [vmem:[%s4 + $0x198] sm:$0xff]
        %v1336 = vld [vmem:[%s4 + $0x1a0] sm:$0xff]
        %v1337 = vld [vmem:[%s4 + $0x1a8] sm:$0xff]
        %v1338 = vld [vmem:[%s4 + $0x1b0] sm:$0xff]
        %v1339 = vld [vmem:[%s4 + $0x1b8] sm:$0xff]
        %v1340 = vld [vmem:[%s4 + $0x1c0] sm:$0xff]
        %v1341 = vld [vmem:[%s4 + $0x1c8] sm:$0xff]
        %v1342 = vld [vmem:[%s4 + $0x1d0] sm:$0xff]
        %v1343 = vld [vmem:[%s4 + $0x1d8] sm:$0xff]
        %v1344 = vld [vmem:[%s4 + $0x1e0] sm:$0xff]
        %v1345 = vld [vmem:[%s4 + $0x1e8] sm:$0xff]
        %v1346 = vld [vmem:[%s4 + $0x1f0] sm:$0xff]
        %v1347 = vld [vmem:[%s4 + $0x1f8] sm:$0xff]
        %v1348 = vld [vmem:[%s4 + $0x200] sm:$0xff]
        %v1349 = vld [vmem:[%s4 + $0x208] sm:$0xff]
        %v1350 = vld [vmem:[%s4 + $0x210] sm:$0xff]
        %v1351 = vld [vmem:[%s4 + $0x218] sm:$0xff]
        %v1352 = vld [vmem:[%s4 + $0x220] sm:$0xff]
        %v1353 = vld [vmem:[%s4 + $0x228] sm:$0xff]
        %v1354 = vld [vmem:[%s4 + $0x230] sm:$0xff]
        %v1355 = vld [vmem:[%s4 + $0x238] sm:$0xff]
        %vm1356 = vcmask 261120
        %v1358 = vsel %vm1356, %v1280, 0
        %v1361 = vsel %vm1356, %v1283, 0
        %1363 = vmatpush.msra.mxu0 %v1314
        %1364 = vmatpush.msra.mxu0 %v1312
        %1365 = vmatpush.msra.mxu0 %v1310
        %1366 = vmatpush.msra.mxu0 %v1308
        %1367 = vmatpush.msra.mxu0 %v1306
        %1368 = vmatpush.msra.mxu0 %v1304
        %1369 = vmatpush.msra.mxu0 %v1302
        %1370 = vmatpush.msra.mxu0 %v1300
        %1371 = vmatpush.msra.mxu0 %v1298
        %1372 = vmatpush.msra.mxu0 %v1296
        %1373 = vmatpush.msra.mxu0 %v1294
        %1374 = vmatpush.msra.mxu0 %v1292
        %1375 = vmatpush.msra.mxu0 %v1290
        %1376 = vmatpush.msra.mxu0 %v1288
        %1377 = vmatpush.msra.mxu0 %v1286
        %1378 = vmatpush.msra.mxu0 %v1284
        %1379 = vmatmul.f32.gmra.mxu0 %v1278
        %v1380 = vpop.f32.mrf.mxu0
        %v1381 = vadd.f32 0.0, %v1380
        %1382 = vmatmul.f32.gmra.mxu0 %v1281
        %v1383 = vpop.f32.mrf.mxu0
        %v1384 = vadd.f32 0.0, %v1383
        %1385 = vdwg.mxu0
        %1386 = vmatpush.msra.mxu0 %v1346
        %1387 = vmatpush.msra.mxu0 %v1344
        %1388 = vmatpush.msra.mxu0 %v1342
        %1389 = vmatpush.msra.mxu0 %v1340
        %1390 = vmatpush.msra.mxu0 %v1338
        %1391 = vmatpush.msra.mxu0 %v1336
        %1392 = vmatpush.msra.mxu0 %v1334
        %1393 = vmatpush.msra.mxu0 %v1332
        %1394 = vmatpush.msra.mxu0 %v1330
        %1395 = vmatpush.msra.mxu0 %v1328
        %1396 = vmatpush.msra.mxu0 %v1326
        %1397 = vmatpush.msra.mxu0 %v1324
        %1398 = vmatpush.msra.mxu0 %v1322
        %1399 = vmatpush.msra.mxu0 %v1320
        %1400 = vmatpush.msra.mxu0 %v1318
        %1401 = vmatpush.msra.mxu0 %v1316
        %1402 = vmatmul.f32.gmra.mxu0 %v1279
        %v1403 = vpop.f32.mrf.mxu0
        %v1404 = vadd.f32 %v1381, %v1403
        %1405 = vmatmul.f32.gmra.mxu0 %v1282
        %v1406 = vpop.f32.mrf.mxu0
        %v1407 = vadd.f32 %v1384, %v1406
        %1408 = vdwg.mxu0
        %1409 = vmatpush.msra.mxu0 0.0
        %1410 = vmatpush.msra.mxu0 0.0
        %1411 = vmatpush.msra.mxu0 0.0
        %1412 = vmatpush.msra.mxu0 0.0
        %1413 = vmatpush.msra.mxu0 0.0
        %1414 = vmatpush.msra.mxu0 0.0
        %1415 = vmatpush.msra.mxu0 0.0
        %1416 = vmatpush.msra.mxu0 0.0
        %1417 = vmatpush.msra.mxu0 0.0
        %1418 = vmatpush.msra.mxu0 0.0
        %1419 = vmatpush.msra.mxu0 0.0
        %1420 = vmatpush.msra.mxu0 0.0
        %1421 = vmatpush.msra.mxu0 %v1354
        %1422 = vmatpush.msra.mxu0 %v1352
        %1423 = vmatpush.msra.mxu0 %v1350
        %1424 = vmatpush.msra.mxu0 %v1348
        %1425 = vmatmul.f32.gmra.mxu0 %v1358
        %v1426 = vpop.f32.mrf.mxu0
        %v1427 = vadd.f32 %v1404, %v1426
        %1428 = vmatmul.f32.gmra.mxu0 %v1361
        %v1429 = vpop.f32.mrf.mxu0
        %v1430 = vadd.f32 %v1407, %v1429
        %1431 = vdwg.mxu0
        %1432 = vmatpush.msra.mxu0 %v1315
        %1433 = vmatpush.msra.mxu0 %v1313
        %1434 = vmatpush.msra.mxu0 %v1311
        %1435 = vmatpush.msra.mxu0 %v1309
        %1436 = vmatpush.msra.mxu0 %v1307
        %1437 = vmatpush.msra.mxu0 %v1305
        %1438 = vmatpush.msra.mxu0 %v1303
        %1439 = vmatpush.msra.mxu0 %v1301
        %1440 = vmatpush.msra.mxu0 %v1299
        %1441 = vmatpush.msra.mxu0 %v1297
        %1442 = vmatpush.msra.mxu0 %v1295
        %1443 = vmatpush.msra.mxu0 %v1293
        %1444 = vmatpush.msra.mxu0 %v1291
        %1445 = vmatpush.msra.mxu0 %v1289
        %1446 = vmatpush.msra.mxu0 %v1287
        %1447 = vmatpush.msra.mxu0 %v1285
        %1448 = vmatmul.f32.gmra.mxu0 %v1278
        %v1449 = vpop.f32.mrf.mxu0
        %v1450 = vadd.f32 0.0, %v1449
        %1451 = vmatmul.f32.gmra.mxu0 %v1281
        %v1452 = vpop.f32.mrf.mxu0
        %v1453 = vadd.f32 0.0, %v1452
        %1454 = vdwg.mxu0
        %1455 = vmatpush.msra.mxu0 %v1347
        %1456 = vmatpush.msra.mxu0 %v1345
        %1457 = vmatpush.msra.mxu0 %v1343
        %1458 = vmatpush.msra.mxu0 %v1341
        %1459 = vmatpush.msra.mxu0 %v1339
        %1460 = vmatpush.msra.mxu0 %v1337
        %1461 = vmatpush.msra.mxu0 %v1335
        %1462 = vmatpush.msra.mxu0 %v1333
        %1463 = vmatpush.msra.mxu0 %v1331
        %1464 = vmatpush.msra.mxu0 %v1329
        %1465 = vmatpush.msra.mxu0 %v1327
        %1466 = vmatpush.msra.mxu0 %v1325
        %1467 = vmatpush.msra.mxu0 %v1323
        %1468 = vmatpush.msra.mxu0 %v1321
        %1469 = vmatpush.msra.mxu0 %v1319
        %1470 = vmatpush.msra.mxu0 %v1317
        %1471 = vmatmul.f32.gmra.mxu0 %v1279
        %v1472 = vpop.f32.mrf.mxu0
        %v1473 = vadd.f32 %v1450, %v1472
        %1474 = vmatmul.f32.gmra.mxu0 %v1282
        %v1475 = vpop.f32.mrf.mxu0
        %v1476 = vadd.f32 %v1453, %v1475
        %1477 = vdwg.mxu0
        %1478 = vmatpush.msra.mxu0 0.0
        %1479 = vmatpush.msra.mxu0 0.0
        %1480 = vmatpush.msra.mxu0 0.0
        %1481 = vmatpush.msra.mxu0 0.0
        %1482 = vmatpush.msra.mxu0 0.0
        %1483 = vmatpush.msra.mxu0 0.0
        %1484 = vmatpush.msra.mxu0 0.0
        %1485 = vmatpush.msra.mxu0 0.0
        %1486 = vmatpush.msra.mxu0 0.0
        %1487 = vmatpush.msra.mxu0 0.0
        %1488 = vmatpush.msra.mxu0 0.0
        %1489 = vmatpush.msra.mxu0 0.0
        %1490 = vmatpush.msra.mxu0 %v1355
        %1491 = vmatpush.msra.mxu0 %v1353
        %1492 = vmatpush.msra.mxu0 %v1351
        %1493 = vmatpush.msra.mxu0 %v1349
        %1494 = vmatmul.f32.gmra.mxu0 %v1358
        %v1495 = vpop.f32.mrf.mxu0
        %v1496 = vadd.f32 %v1473, %v1495
        %1497 = vmatmul.f32.gmra.mxu0 %v1361
        %v1498 = vpop.f32.mrf.mxu0
        %v1499 = vadd.f32 %v1476, %v1498
        %1500 = vdwg.mxu0
        %s1501 = scalar_lea.vmem %s4, 576
        %v1502 = vld [vmem:[%s1501] sm:$0xff]
        %v1503 = vld [vmem:[%s1501 + $0x8] sm:$0xff]
        %v1504 = vld [vmem:[%s1501 + $0x10] sm:$0xff]
        %v1505 = vld [vmem:[%s1501 + $0x18] sm:$0xff]
        %v1506 = vld [vmem:[%s1501 + $0x20] sm:$0xff]
        %v1507 = vld [vmem:[%s1501 + $0x28] sm:$0xff]
        %v1508 = vld [vmem:[%s1501 + $0x30] sm:$0xff]
        %v1509 = vld [vmem:[%s1501 + $0x38] sm:$0xff]
        %v1510 = vld [vmem:[%s1501 + $0x40] sm:$0xff]
        %v1511 = vld [vmem:[%s1501 + $0x48] sm:$0xff]
        %v1512 = vld [vmem:[%s1501 + $0x50] sm:$0xff]
        %v1513 = vld [vmem:[%s1501 + $0x58] sm:$0xff]
        %v1514 = vld [vmem:[%s1501 + $0x60] sm:$0xff]
        %v1515 = vld [vmem:[%s1501 + $0x68] sm:$0xff]
        %v1516 = vld [vmem:[%s1501 + $0x70] sm:$0xff]
        %v1517 = vld [vmem:[%s1501 + $0x78] sm:$0xff]
        %v1518 = vld [vmem:[%s1501 + $0x80] sm:$0xff]
        %v1519 = vld [vmem:[%s1501 + $0x88] sm:$0xff]
        %v1520 = vld [vmem:[%s1501 + $0x90] sm:$0xff]
        %v1521 = vld [vmem:[%s1501 + $0x98] sm:$0xff]
        %v1522 = vld [vmem:[%s1501 + $0xa0] sm:$0xff]
        %v1523 = vld [vmem:[%s1501 + $0xa8] sm:$0xff]
        %v1524 = vld [vmem:[%s1501 + $0xb0] sm:$0xff]
        %v1525 = vld [vmem:[%s1501 + $0xb8] sm:$0xff]
        %v1526 = vld [vmem:[%s1501 + $0xc0] sm:$0xff]
        %v1527 = vld [vmem:[%s1501 + $0xc8] sm:$0xff]
        %v1528 = vld [vmem:[%s1501 + $0xd0] sm:$0xff]
        %v1529 = vld [vmem:[%s1501 + $0xd8] sm:$0xff]
        %v1530 = vld [vmem:[%s1501 + $0xe0] sm:$0xff]
        %v1531 = vld [vmem:[%s1501 + $0xe8] sm:$0xff]
        %v1532 = vld [vmem:[%s1501 + $0xf0] sm:$0xff]
        %v1533 = vld [vmem:[%s1501 + $0xf8] sm:$0xff]
        %v1534 = vld [vmem:[%s1501 + $0x100] sm:$0xff]
        %v1535 = vld [vmem:[%s1501 + $0x108] sm:$0xff]
        %v1536 = vld [vmem:[%s1501 + $0x110] sm:$0xff]
        %v1537 = vld [vmem:[%s1501 + $0x118] sm:$0xff]
        %v1538 = vld [vmem:[%s1501 + $0x120] sm:$0xff]
        %v1539 = vld [vmem:[%s1501 + $0x128] sm:$0xff]
        %v1540 = vld [vmem:[%s1501 + $0x130] sm:$0xff]
        %v1541 = vld [vmem:[%s1501 + $0x138] sm:$0xff]
        %v1542 = vld [vmem:[%s1501 + $0x140] sm:$0xff]
        %v1543 = vld [vmem:[%s1501 + $0x148] sm:$0xff]
        %v1544 = vld [vmem:[%s1501 + $0x150] sm:$0xff]
        %v1545 = vld [vmem:[%s1501 + $0x158] sm:$0xff]
        %v1546 = vld [vmem:[%s1501 + $0x160] sm:$0xff]
        %v1547 = vld [vmem:[%s1501 + $0x168] sm:$0xff]
        %v1548 = vld [vmem:[%s1501 + $0x170] sm:$0xff]
        %v1549 = vld [vmem:[%s1501 + $0x178] sm:$0xff]
        %v1550 = vld [vmem:[%s1501 + $0x180] sm:$0xff]
        %v1551 = vld [vmem:[%s1501 + $0x188] sm:$0xff]
        %v1552 = vld [vmem:[%s1501 + $0x190] sm:$0xff]
        %v1553 = vld [vmem:[%s1501 + $0x198] sm:$0xff]
        %v1554 = vld [vmem:[%s1501 + $0x1a0] sm:$0xff]
        %v1555 = vld [vmem:[%s1501 + $0x1a8] sm:$0xff]
        %v1556 = vld [vmem:[%s1501 + $0x1b0] sm:$0xff]
        %v1557 = vld [vmem:[%s1501 + $0x1b8] sm:$0xff]
        %v1558 = vld [vmem:[%s1501 + $0x1c0] sm:$0xff]
        %v1559 = vld [vmem:[%s1501 + $0x1c8] sm:$0xff]
        %v1560 = vld [vmem:[%s1501 + $0x1d0] sm:$0xff]
        %v1561 = vld [vmem:[%s1501 + $0x1d8] sm:$0xff]
        %v1562 = vld [vmem:[%s1501 + $0x1e0] sm:$0xff]
        %v1563 = vld [vmem:[%s1501 + $0x1e8] sm:$0xff]
        %v1564 = vld [vmem:[%s1501 + $0x1f0] sm:$0xff]
        %v1565 = vld [vmem:[%s1501 + $0x1f8] sm:$0xff]
        %v1566 = vld [vmem:[%s1501 + $0x200] sm:$0xff]
        %v1567 = vld [vmem:[%s1501 + $0x208] sm:$0xff]
        %v1568 = vld [vmem:[%s1501 + $0x210] sm:$0xff]
        %v1569 = vld [vmem:[%s1501 + $0x218] sm:$0xff]
        %v1570 = vld [vmem:[%s1501 + $0x220] sm:$0xff]
        %v1571 = vld [vmem:[%s1501 + $0x228] sm:$0xff]
        %v1572 = vld [vmem:[%s1501 + $0x230] sm:$0xff]
        %v1573 = vld [vmem:[%s1501 + $0x238] sm:$0xff]
        %1574 = vmatpush.msra.mxu0 %v1532
        %1575 = vmatpush.msra.mxu0 %v1530
        %1576 = vmatpush.msra.mxu0 %v1528
        %1577 = vmatpush.msra.mxu0 %v1526
        %1578 = vmatpush.msra.mxu0 %v1524
        %1579 = vmatpush.msra.mxu0 %v1522
        %1580 = vmatpush.msra.mxu0 %v1520
        %1581 = vmatpush.msra.mxu0 %v1518
        %1582 = vmatpush.msra.mxu0 %v1516
        %1583 = vmatpush.msra.mxu0 %v1514
        %1584 = vmatpush.msra.mxu0 %v1512
        %1585 = vmatpush.msra.mxu0 %v1510
        %1586 = vmatpush.msra.mxu0 %v1508
        %1587 = vmatpush.msra.mxu0 %v1506
        %1588 = vmatpush.msra.mxu0 %v1504
        %1589 = vmatpush.msra.mxu0 %v1502
        %1590 = vmatmul.f32.gmra.mxu0 %v1278
        %v1591 = vpop.f32.mrf.mxu0
        %v1592 = vadd.f32 0.0, %v1591
        %1593 = vmatmul.f32.gmra.mxu0 %v1281
        %v1594 = vpop.f32.mrf.mxu0
        %v1595 = vadd.f32 0.0, %v1594
        %1596 = vdwg.mxu0
        %1597 = vmatpush.msra.mxu0 %v1564
        %1598 = vmatpush.msra.mxu0 %v1562
        %1599 = vmatpush.msra.mxu0 %v1560
        %1600 = vmatpush.msra.mxu0 %v1558
        %1601 = vmatpush.msra.mxu0 %v1556
        %1602 = vmatpush.msra.mxu0 %v1554
        %1603 = vmatpush.msra.mxu0 %v1552
        %1604 = vmatpush.msra.mxu0 %v1550
        %1605 = vmatpush.msra.mxu0 %v1548
        %1606 = vmatpush.msra.mxu0 %v1546
        %1607 = vmatpush.msra.mxu0 %v1544
        %1608 = vmatpush.msra.mxu0 %v1542
        %1609 = vmatpush.msra.mxu0 %v1540
        %1610 = vmatpush.msra.mxu0 %v1538
        %1611 = vmatpush.msra.mxu0 %v1536
        %1612 = vmatpush.msra.mxu0 %v1534
        %1613 = vmatmul.f32.gmra.mxu0 %v1279
        %v1614 = vpop.f32.mrf.mxu0
        %v1615 = vadd.f32 %v1592, %v1614
        %1616 = vmatmul.f32.gmra.mxu0 %v1282
        %v1617 = vpop.f32.mrf.mxu0
        %v1618 = vadd.f32 %v1595, %v1617
        %1619 = vdwg.mxu0
        %1620 = vmatpush.msra.mxu0 0.0
        %1621 = vmatpush.msra.mxu0 0.0
        %1622 = vmatpush.msra.mxu0 0.0
        %1623 = vmatpush.msra.mxu0 0.0
        %1624 = vmatpush.msra.mxu0 0.0
        %1625 = vmatpush.msra.mxu0 0.0
        %1626 = vmatpush.msra.mxu0 0.0
        %1627 = vmatpush.msra.mxu0 0.0
        %1628 = vmatpush.msra.mxu0 0.0
        %1629 = vmatpush.msra.mxu0 0.0
        %1630 = vmatpush.msra.mxu0 0.0
        %1631 = vmatpush.msra.mxu0 0.0
        %1632 = vmatpush.msra.mxu0 %v1572
        %1633 = vmatpush.msra.mxu0 %v1570
        %1634 = vmatpush.msra.mxu0 %v1568
        %1635 = vmatpush.msra.mxu0 %v1566
        %1636 = vmatmul.f32.gmra.mxu0 %v1358
        %v1637 = vpop.f32.mrf.mxu0
        %v1638 = vadd.f32 %v1615, %v1637
        %1639 = vmatmul.f32.gmra.mxu0 %v1361
        %v1640 = vpop.f32.mrf.mxu0
        %v1641 = vadd.f32 %v1618, %v1640
        %1642 = vdwg.mxu0
        %1643 = vmatpush.msra.mxu0 %v1533
        %1644 = vmatpush.msra.mxu0 %v1531
        %1645 = vmatpush.msra.mxu0 %v1529
        %1646 = vmatpush.msra.mxu0 %v1527
        %1647 = vmatpush.msra.mxu0 %v1525
        %1648 = vmatpush.msra.mxu0 %v1523
        %1649 = vmatpush.msra.mxu0 %v1521
        %1650 = vmatpush.msra.mxu0 %v1519
        %1651 = vmatpush.msra.mxu0 %v1517
        %1652 = vmatpush.msra.mxu0 %v1515
        %1653 = vmatpush.msra.mxu0 %v1513
        %1654 = vmatpush.msra.mxu0 %v1511
        %1655 = vmatpush.msra.mxu0 %v1509
        %1656 = vmatpush.msra.mxu0 %v1507
        %1657 = vmatpush.msra.mxu0 %v1505
        %1658 = vmatpush.msra.mxu0 %v1503
        %1659 = vmatmul.f32.gmra.mxu0 %v1278
        %v1660 = vpop.f32.mrf.mxu0
        %v1661 = vadd.f32 0.0, %v1660
        %1662 = vmatmul.f32.gmra.mxu0 %v1281
        %v1663 = vpop.f32.mrf.mxu0
        %v1664 = vadd.f32 0.0, %v1663
        %1665 = vdwg.mxu0
        %1666 = vmatpush.msra.mxu0 %v1565
        %1667 = vmatpush.msra.mxu0 %v1563
        %1668 = vmatpush.msra.mxu0 %v1561
        %1669 = vmatpush.msra.mxu0 %v1559
        %1670 = vmatpush.msra.mxu0 %v1557
        %1671 = vmatpush.msra.mxu0 %v1555
        %1672 = vmatpush.msra.mxu0 %v1553
        %1673 = vmatpush.msra.mxu0 %v1551
        %1674 = vmatpush.msra.mxu0 %v1549
        %1675 = vmatpush.msra.mxu0 %v1547
        %1676 = vmatpush.msra.mxu0 %v1545
        %1677 = vmatpush.msra.mxu0 %v1543
        %1678 = vmatpush.msra.mxu0 %v1541
        %1679 = vmatpush.msra.mxu0 %v1539
        %1680 = vmatpush.msra.mxu0 %v1537
        %1681 = vmatpush.msra.mxu0 %v1535
        %1682 = vmatmul.f32.gmra.mxu0 %v1279
        %v1683 = vpop.f32.mrf.mxu0
        %v1684 = vadd.f32 %v1661, %v1683
        %1685 = vmatmul.f32.gmra.mxu0 %v1282
        %v1686 = vpop.f32.mrf.mxu0
        %v1687 = vadd.f32 %v1664, %v1686
        %1688 = vdwg.mxu0
        %1689 = vmatpush.msra.mxu0 0.0
        %1690 = vmatpush.msra.mxu0 0.0
        %1691 = vmatpush.msra.mxu0 0.0
        %1692 = vmatpush.msra.mxu0 0.0
        %1693 = vmatpush.msra.mxu0 0.0
        %1694 = vmatpush.msra.mxu0 0.0
        %1695 = vmatpush.msra.mxu0 0.0
        %1696 = vmatpush.msra.mxu0 0.0
        %1697 = vmatpush.msra.mxu0 0.0
        %1698 = vmatpush.msra.mxu0 0.0
        %1699 = vmatpush.msra.mxu0 0.0
        %1700 = vmatpush.msra.mxu0 0.0
        %1701 = vmatpush.msra.mxu0 %v1573
        %1702 = vmatpush.msra.mxu0 %v1571
        %1703 = vmatpush.msra.mxu0 %v1569
        %1704 = vmatpush.msra.mxu0 %v1567
        %1705 = vmatmul.f32.gmra.mxu0 %v1358
        %v1706 = vpop.f32.mrf.mxu0
        %v1707 = vadd.f32 %v1684, %v1706
        %1708 = vmatmul.f32.gmra.mxu0 %v1361
        %v1709 = vpop.f32.mrf.mxu0
        %v1710 = vadd.f32 %v1687, %v1709
        %1711 = vdwg.mxu0
        %v1712 = vmax.f32 %v1427, %v1638
        %v1713 = vmax.f32 %v1496, %v1707
        %v1714 = vmax.f32 %v1430, %v1641
        %v1715 = vmax.f32 %v1499, %v1710
        %v1716 = vpack.c.bf16 %v1712, %v1712
        %v1717 = vpack.c.bf16 %v1713, %v1713
        %v1718 = vld [vmem:[%s5] sm:$0xff]
        %v1719 = vld [vmem:[%s5 + $0x8] sm:$0xff]
        %v1720 = vld [vmem:[%s5 + $0x10] sm:$0xff]
        %v1721 = vld [vmem:[%s5 + $0x18] sm:$0xff]
        %v1722 = vld [vmem:[%s5 + $0x20] sm:$0xff]
        %v1723 = vld [vmem:[%s5 + $0x28] sm:$0xff]
        %v1724 = vld [vmem:[%s5 + $0x30] sm:$0xff]
        %v1725 = vld [vmem:[%s5 + $0x38] sm:$0xff]
        %v1726 = vld [vmem:[%s5 + $0x40] sm:$0xff]
        %v1727 = vld [vmem:[%s5 + $0x48] sm:$0xff]
        %v1728 = vld [vmem:[%s5 + $0x50] sm:$0xff]
        %v1729 = vld [vmem:[%s5 + $0x58] sm:$0xff]
        %v1730 = vld [vmem:[%s5 + $0x60] sm:$0xff]
        %v1731 = vld [vmem:[%s5 + $0x68] sm:$0xff]
        %v1732 = vld [vmem:[%s5 + $0x70] sm:$0xff]
        %v1733 = vld [vmem:[%s5 + $0x78] sm:$0xff]
        %v1734 = vld [vmem:[%s5 + $0x80] sm:$0xff]
        %v1735 = vld [vmem:[%s5 + $0x88] sm:$0xff]
        %v1736 = vpack.c.bf16 %v1714, %v1712
        %v1737 = vpack.c.bf16 %v1715, %v1713
        %s1738 = scalar_lea.vmem %s5, 144
        %v1739 = vld [vmem:[%s1738] sm:$0xff]
        %v1740 = vld [vmem:[%s1738 + $0x8] sm:$0xff]
        %v1741 = vld [vmem:[%s1738 + $0x10] sm:$0xff]
        %v1742 = vld [vmem:[%s1738 + $0x18] sm:$0xff]
        %v1743 = vld [vmem:[%s1738 + $0x20] sm:$0xff]
        %v1744 = vld [vmem:[%s1738 + $0x28] sm:$0xff]
        %v1745 = vld [vmem:[%s1738 + $0x30] sm:$0xff]
        %v1746 = vld [vmem:[%s1738 + $0x38] sm:$0xff]
        %v1747 = vld [vmem:[%s1738 + $0x40] sm:$0xff]
        %v1748 = vld [vmem:[%s1738 + $0x48] sm:$0xff]
        %v1749 = vld [vmem:[%s1738 + $0x50] sm:$0xff]
        %v1750 = vld [vmem:[%s1738 + $0x58] sm:$0xff]
        %v1751 = vld [vmem:[%s1738 + $0x60] sm:$0xff]
        %v1752 = vld [vmem:[%s1738 + $0x68] sm:$0xff]
        %v1753 = vld [vmem:[%s1738 + $0x70] sm:$0xff]
        %v1754 = vld [vmem:[%s1738 + $0x78] sm:$0xff]
        %v1755 = vld [vmem:[%s1738 + $0x80] sm:$0xff]
        %v1756 = vld [vmem:[%s1738 + $0x88] sm:$0xff]
        %v1758 = vshrl.u32 %v1736, 16
        %v1760 = vshll.u32 %v1736, 16
        %v1762 = vrot.slane %v1760, 1
        %v1763 = vor.u32 %v1758, %v1762
        %v1765 = vshrl.u32 %v1737, 16
        %v1767 = vshll.u32 %v1737, 16
        %v1769 = vrot.slane %v1767, 1
        %v1770 = vor.u32 %v1765, %v1769
        %v1790 = vunpack.c.l.b16 %v1739
        %v1791 = vunpack.c.h.b16 %v1739
        %v1792 = vunpack.c.l.b16 %v1740
        %v1793 = vunpack.c.h.b16 %v1740
        %v1794 = vunpack.c.l.b16 %v1741
        %v1795 = vunpack.c.h.b16 %v1741
        %v1796 = vunpack.c.l.b16 %v1742
        %v1797 = vunpack.c.h.b16 %v1742
        %v1798 = vunpack.c.l.b16 %v1743
        %v1799 = vunpack.c.h.b16 %v1743
        %v1800 = vunpack.c.l.b16 %v1744
        %v1801 = vunpack.c.h.b16 %v1744
        %v1802 = vunpack.c.l.b16 %v1745
        %v1803 = vunpack.c.h.b16 %v1745
        %v1804 = vunpack.c.l.b16 %v1746
        %v1805 = vunpack.c.h.b16 %v1746
        %v1806 = vunpack.c.l.b16 %v1747
        %v1807 = vunpack.c.h.b16 %v1747
        %v1808 = vunpack.c.l.b16 %v1748
        %v1809 = vunpack.c.h.b16 %v1748
        %v1810 = vunpack.c.l.b16 %v1749
        %v1811 = vunpack.c.h.b16 %v1749
        %v1812 = vunpack.c.l.b16 %v1750
        %v1813 = vunpack.c.h.b16 %v1750
        %v1814 = vunpack.c.l.b16 %v1751
        %v1815 = vunpack.c.h.b16 %v1751
        %v1816 = vunpack.c.l.b16 %v1752
        %v1817 = vunpack.c.h.b16 %v1752
        %v1818 = vunpack.c.l.b16 %v1753
        %v1819 = vunpack.c.h.b16 %v1753
        %v1820 = vunpack.c.l.b16 %v1754
        %v1821 = vunpack.c.h.b16 %v1754
        %v1822 = vunpack.c.l.b16 %v1755
        %v1823 = vunpack.c.h.b16 %v1755
        %v1824 = vunpack.c.l.b16 %v1756
        %v1825 = vunpack.c.h.b16 %v1756
        %v1826 = vpack.c.b16 %v1792, %v1790
        %v1827 = vpack.c.b16 %v1793, %v1791
        %v1828 = vpack.c.b16 %v1796, %v1794
        %v1829 = vpack.c.b16 %v1797, %v1795
        %v1830 = vpack.c.b16 %v1800, %v1798
        %v1831 = vpack.c.b16 %v1801, %v1799
        %v1832 = vpack.c.b16 %v1804, %v1802
        %v1833 = vpack.c.b16 %v1805, %v1803
        %v1834 = vpack.c.b16 %v1808, %v1806
        %v1835 = vpack.c.b16 %v1809, %v1807
        %v1836 = vpack.c.b16 %v1812, %v1810
        %v1837 = vpack.c.b16 %v1813, %v1811
        %v1838 = vpack.c.b16 %v1816, %v1814
        %v1839 = vpack.c.b16 %v1817, %v1815
        %v1840 = vpack.c.b16 %v1820, %v1818
        %v1841 = vpack.c.b16 %v1821, %v1819
        %v1842 = vpack.c.b16 %v1824, %v1822
        %v1843 = vpack.c.b16 %v1825, %v1823
        %vm1862 = vcmask 130048
        %v1864 = vsel %vm1862, %v1770, 0
        %1866 = vmatpush.bf16.msra.mxu0 %v1840
        %1867 = vmatpush.bf16.msra.mxu0 %v1838
        %1868 = vmatpush.bf16.msra.mxu0 %v1836
        %1869 = vmatpush.bf16.msra.mxu0 %v1834
        %1870 = vmatpush.bf16.msra.mxu0 %v1832
        %1871 = vmatpush.bf16.msra.mxu0 %v1830
        %1872 = vmatpush.bf16.msra.mxu0 %v1828
        %1873 = vmatpush.bf16.msra.mxu0 %v1826
        %1874 = vmatmul.bf16.gmra.mxu0 %v1763
        %v1875 = vpop.f32.mrf.mxu0
        %v1876 = vadd.f32 0.0, %v1875
        %v1877 = vpop.f32.mrf.mxu0
        %1878 = vdwg.mxu0
        %1879 = vmatpush.bf16.msra.mxu0 0
        %1880 = vmatpush.bf16.msra.mxu0 0
        %1881 = vmatpush.bf16.msra.mxu0 0
        %1882 = vmatpush.bf16.msra.mxu0 0
        %1883 = vmatpush.bf16.msra.mxu0 0
        %1884 = vmatpush.bf16.msra.mxu0 0
        %1885 = vmatpush.bf16.msra.mxu0 0
        %1886 = vmatpush.bf16.msra.mxu0 %v1842
        %1887 = vmatmul.bf16.gmra.mxu0 %v1864
        %v1888 = vpop.f32.mrf.mxu0
        %v1889 = vadd.f32 %v1876, %v1888
        %v1890 = vpop.f32.mrf.mxu0
        %1891 = vdwg.mxu0
        %1892 = vmatpush.bf16.msra.mxu0 %v1841
        %1893 = vmatpush.bf16.msra.mxu0 %v1839
        %1894 = vmatpush.bf16.msra.mxu0 %v1837
        %1895 = vmatpush.bf16.msra.mxu0 %v1835
        %1896 = vmatpush.bf16.msra.mxu0 %v1833
        %1897 = vmatpush.bf16.msra.mxu0 %v1831
        %1898 = vmatpush.bf16.msra.mxu0 %v1829
        %1899 = vmatpush.bf16.msra.mxu0 %v1827
        %1900 = vmatmul.bf16.gmra.mxu0 %v1763
        %v1901 = vpop.f32.mrf.mxu0
        %v1902 = vadd.f32 0.0, %v1901
        %v1903 = vpop.f32.mrf.mxu0
        %1904 = vdwg.mxu0
        %1905 = vmatpush.bf16.msra.mxu0 0
        %1906 = vmatpush.bf16.msra.mxu0 0
        %1907 = vmatpush.bf16.msra.mxu0 0
        %1908 = vmatpush.bf16.msra.mxu0 0
        %1909 = vmatpush.bf16.msra.mxu0 0
        %1910 = vmatpush.bf16.msra.mxu0 0
        %1911 = vmatpush.bf16.msra.mxu0 0
        %1912 = vmatpush.bf16.msra.mxu0 %v1843
        %1913 = vmatmul.bf16.gmra.mxu0 %v1864
        %v1914 = vpop.f32.mrf.mxu0
        %v1915 = vadd.f32 %v1902, %v1914
        %v1916 = vpop.f32.mrf.mxu0
        %1917 = vdwg.mxu0
        %v1936 = vunpack.c.l.b16 %v1718
        %v1937 = vunpack.c.h.b16 %v1718
        %v1938 = vunpack.c.l.b16 %v1719
        %v1939 = vunpack.c.h.b16 %v1719
        %v1940 = vunpack.c.l.b16 %v1720
        %v1941 = vunpack.c.h.b16 %v1720
        %v1942 = vunpack.c.l.b16 %v1721
        %v1943 = vunpack.c.h.b16 %v1721
        %v1944 = vunpack.c.l.b16 %v1722
        %v1945 = vunpack.c.h.b16 %v1722
        %v1946 = vunpack.c.l.b16 %v1723
        %v1947 = vunpack.c.h.b16 %v1723
        %v1948 = vunpack.c.l.b16 %v1724
        %v1949 = vunpack.c.h.b16 %v1724
        %v1950 = vunpack.c.l.b16 %v1725
        %v1951 = vunpack.c.h.b16 %v1725
        %v1952 = vunpack.c.l.b16 %v1726
        %v1953 = vunpack.c.h.b16 %v1726
        %v1954 = vunpack.c.l.b16 %v1727
        %v1955 = vunpack.c.h.b16 %v1727
        %v1956 = vunpack.c.l.b16 %v1728
        %v1957 = vunpack.c.h.b16 %v1728
        %v1958 = vunpack.c.l.b16 %v1729
        %v1959 = vunpack.c.h.b16 %v1729
        %v1960 = vunpack.c.l.b16 %v1730
        %v1961 = vunpack.c.h.b16 %v1730
        %v1962 = vunpack.c.l.b16 %v1731
        %v1963 = vunpack.c.h.b16 %v1731
        %v1964 = vunpack.c.l.b16 %v1732
        %v1965 = vunpack.c.h.b16 %v1732
        %v1966 = vunpack.c.l.b16 %v1733
        %v1967 = vunpack.c.h.b16 %v1733
        %v1968 = vunpack.c.l.b16 %v1734
        %v1969 = vunpack.c.h.b16 %v1734
        %v1970 = vunpack.c.l.b16 %v1735
        %v1971 = vunpack.c.h.b16 %v1735
        %v1972 = vpack.c.b16 %v1938, %v1936
        %v1973 = vpack.c.b16 %v1939, %v1937
        %v1974 = vpack.c.b16 %v1942, %v1940
        %v1975 = vpack.c.b16 %v1943, %v1941
        %v1976 = vpack.c.b16 %v1946, %v1944
        %v1977 = vpack.c.b16 %v1947, %v1945
        %v1978 = vpack.c.b16 %v1950, %v1948
        %v1979 = vpack.c.b16 %v1951, %v1949
        %v1980 = vpack.c.b16 %v1954, %v1952
        %v1981 = vpack.c.b16 %v1955, %v1953
        %v1982 = vpack.c.b16 %v1958, %v1956
        %v1983 = vpack.c.b16 %v1959, %v1957
        %v1984 = vpack.c.b16 %v1962, %v1960
        %v1985 = vpack.c.b16 %v1963, %v1961
        %v1986 = vpack.c.b16 %v1966, %v1964
        %v1987 = vpack.c.b16 %v1967, %v1965
        %v1988 = vpack.c.b16 %v1970, %v1968
        %v1989 = vpack.c.b16 %v1971, %v1969
        %v2009 = vsel %vm1862, %v1717, 0
        %2011 = vmatpush.bf16.msra.mxu0 %v1986
        %2012 = vmatpush.bf16.msra.mxu0 %v1984
        %2013 = vmatpush.bf16.msra.mxu0 %v1982
        %2014 = vmatpush.bf16.msra.mxu0 %v1980
        %2015 = vmatpush.bf16.msra.mxu0 %v1978
        %2016 = vmatpush.bf16.msra.mxu0 %v1976
        %2017 = vmatpush.bf16.msra.mxu0 %v1974
        %2018 = vmatpush.bf16.msra.mxu0 %v1972
        %2019 = vmatmul.bf16.gmra.mxu0 %v1716
        %v2020 = vpop.f32.mrf.mxu0
        %v2021 = vadd.f32 %v1889, %v2020
        %v2022 = vpop.f32.mrf.mxu0
        %2023 = vdwg.mxu0
        %2024 = vmatpush.bf16.msra.mxu0 0
        %2025 = vmatpush.bf16.msra.mxu0 0
        %2026 = vmatpush.bf16.msra.mxu0 0
        %2027 = vmatpush.bf16.msra.mxu0 0
        %2028 = vmatpush.bf16.msra.mxu0 0
        %2029 = vmatpush.bf16.msra.mxu0 0
        %2030 = vmatpush.bf16.msra.mxu0 0
        %2031 = vmatpush.bf16.msra.mxu0 %v1988
        %2032 = vmatmul.bf16.gmra.mxu0 %v2009
        %v2033 = vpop.f32.mrf.mxu0
        %v2034 = vadd.f32 %v2021, %v2033
        %v2035 = vpop.f32.mrf.mxu0
        %2036 = vdwg.mxu0
        %2037 = vmatpush.bf16.msra.mxu0 %v1987
        %2038 = vmatpush.bf16.msra.mxu0 %v1985
        %2039 = vmatpush.bf16.msra.mxu0 %v1983
        %2040 = vmatpush.bf16.msra.mxu0 %v1981
        %2041 = vmatpush.bf16.msra.mxu0 %v1979
        %2042 = vmatpush.bf16.msra.mxu0 %v1977
        %2043 = vmatpush.bf16.msra.mxu0 %v1975
        %2044 = vmatpush.bf16.msra.mxu0 %v1973
        %2045 = vmatmul.bf16.gmra.mxu0 %v1716
        %v2046 = vpop.f32.mrf.mxu0
        %v2047 = vadd.f32 %v1915, %v2046
        %v2048 = vpop.f32.mrf.mxu0
        %2049 = vdwg.mxu0
        %2050 = vmatpush.bf16.msra.mxu0 0
        %2051 = vmatpush.bf16.msra.mxu0 0
        %2052 = vmatpush.bf16.msra.mxu0 0
        %2053 = vmatpush.bf16.msra.mxu0 0
        %2054 = vmatpush.bf16.msra.mxu0 0
        %2055 = vmatpush.bf16.msra.mxu0 0
        %2056 = vmatpush.bf16.msra.mxu0 0
        %2057 = vmatpush.bf16.msra.mxu0 %v1989
        %2058 = vmatmul.bf16.gmra.mxu0 %v2009
        %v2059 = vpop.f32.mrf.mxu0
        %v2060 = vadd.f32 %v2047, %v2059
        %v2061 = vpop.f32.mrf.mxu0
        %2062 = vdwg.mxu0
        %s2063 = scalar_lea.vmem %s5, 288
        %v2064 = vld [vmem:[%s2063] sm:$0xff]
        %v2065 = vld [vmem:[%s2063 + $0x8] sm:$0xff]
        %v2066 = vld [vmem:[%s2063 + $0x10] sm:$0xff]
        %v2067 = vld [vmem:[%s2063 + $0x18] sm:$0xff]
        %v2068 = vld [vmem:[%s2063 + $0x20] sm:$0xff]
        %v2069 = vld [vmem:[%s2063 + $0x28] sm:$0xff]
        %v2070 = vld [vmem:[%s2063 + $0x30] sm:$0xff]
        %v2071 = vld [vmem:[%s2063 + $0x38] sm:$0xff]
        %v2072 = vld [vmem:[%s2063 + $0x40] sm:$0xff]
        %v2073 = vld [vmem:[%s2063 + $0x48] sm:$0xff]
        %v2074 = vld [vmem:[%s2063 + $0x50] sm:$0xff]
        %v2075 = vld [vmem:[%s2063 + $0x58] sm:$0xff]
        %v2076 = vld [vmem:[%s2063 + $0x60] sm:$0xff]
        %v2077 = vld [vmem:[%s2063 + $0x68] sm:$0xff]
        %v2078 = vld [vmem:[%s2063 + $0x70] sm:$0xff]
        %v2079 = vld [vmem:[%s2063 + $0x78] sm:$0xff]
        %v2080 = vld [vmem:[%s2063 + $0x80] sm:$0xff]
        %v2081 = vld [vmem:[%s2063 + $0x88] sm:$0xff]
        %v2084 = vrot.slane %v1736, 1
        %v2085 = vrot.slane %v1737, 1
        %v2105 = vunpack.c.l.b16 %v2064
        %v2106 = vunpack.c.h.b16 %v2064
        %v2107 = vunpack.c.l.b16 %v2065
        %v2108 = vunpack.c.h.b16 %v2065
        %v2109 = vunpack.c.l.b16 %v2066
        %v2110 = vunpack.c.h.b16 %v2066
        %v2111 = vunpack.c.l.b16 %v2067
        %v2112 = vunpack.c.h.b16 %v2067
        %v2113 = vunpack.c.l.b16 %v2068
        %v2114 = vunpack.c.h.b16 %v2068
        %v2115 = vunpack.c.l.b16 %v2069
        %v2116 = vunpack.c.h.b16 %v2069
        %v2117 = vunpack.c.l.b16 %v2070
        %v2118 = vunpack.c.h.b16 %v2070
        %v2119 = vunpack.c.l.b16 %v2071
        %v2120 = vunpack.c.h.b16 %v2071
        %v2121 = vunpack.c.l.b16 %v2072
        %v2122 = vunpack.c.h.b16 %v2072
        %v2123 = vunpack.c.l.b16 %v2073
        %v2124 = vunpack.c.h.b16 %v2073
        %v2125 = vunpack.c.l.b16 %v2074
        %v2126 = vunpack.c.h.b16 %v2074
        %v2127 = vunpack.c.l.b16 %v2075
        %v2128 = vunpack.c.h.b16 %v2075
        %v2129 = vunpack.c.l.b16 %v2076
        %v2130 = vunpack.c.h.b16 %v2076
        %v2131 = vunpack.c.l.b16 %v2077
        %v2132 = vunpack.c.h.b16 %v2077
        %v2133 = vunpack.c.l.b16 %v2078
        %v2134 = vunpack.c.h.b16 %v2078
        %v2135 = vunpack.c.l.b16 %v2079
        %v2136 = vunpack.c.h.b16 %v2079
        %v2137 = vunpack.c.l.b16 %v2080
        %v2138 = vunpack.c.h.b16 %v2080
        %v2139 = vunpack.c.l.b16 %v2081
        %v2140 = vunpack.c.h.b16 %v2081
        %v2141 = vpack.c.b16 %v2107, %v2105
        %v2142 = vpack.c.b16 %v2108, %v2106
        %v2143 = vpack.c.b16 %v2111, %v2109
        %v2144 = vpack.c.b16 %v2112, %v2110
        %v2145 = vpack.c.b16 %v2115, %v2113
        %v2146 = vpack.c.b16 %v2116, %v2114
        %v2147 = vpack.c.b16 %v2119, %v2117
        %v2148 = vpack.c.b16 %v2120, %v2118
        %v2149 = vpack.c.b16 %v2123, %v2121
        %v2150 = vpack.c.b16 %v2124, %v2122
        %v2151 = vpack.c.b16 %v2127, %v2125
        %v2152 = vpack.c.b16 %v2128, %v2126
        %v2153 = vpack.c.b16 %v2131, %v2129
        %v2154 = vpack.c.b16 %v2132, %v2130
        %v2155 = vpack.c.b16 %v2135, %v2133
        %v2156 = vpack.c.b16 %v2136, %v2134
        %v2157 = vpack.c.b16 %v2139, %v2137
        %v2158 = vpack.c.b16 %v2140, %v2138
        %v2178 = vsel %vm1862, %v2085, 0
        %2180 = vmatpush.bf16.msra.mxu0 %v2155
        %2181 = vmatpush.bf16.msra.mxu0 %v2153
        %2182 = vmatpush.bf16.msra.mxu0 %v2151
        %2183 = vmatpush.bf16.msra.mxu0 %v2149
        %2184 = vmatpush.bf16.msra.mxu0 %v2147
        %2185 = vmatpush.bf16.msra.mxu0 %v2145
        %2186 = vmatpush.bf16.msra.mxu0 %v2143
        %2187 = vmatpush.bf16.msra.mxu0 %v2141
        %2188 = vmatmul.bf16.gmra.mxu0 %v2084
        %v2189 = vpop.f32.mrf.mxu0
        %v2190 = vadd.f32 0.0, %v2189
        %v2191 = vpop.f32.mrf.mxu0
        %2192 = vdwg.mxu0
        %2193 = vmatpush.bf16.msra.mxu0 0
        %2194 = vmatpush.bf16.msra.mxu0 0
        %2195 = vmatpush.bf16.msra.mxu0 0
        %2196 = vmatpush.bf16.msra.mxu0 0
        %2197 = vmatpush.bf16.msra.mxu0 0
        %2198 = vmatpush.bf16.msra.mxu0 0
        %2199 = vmatpush.bf16.msra.mxu0 0
        %2200 = vmatpush.bf16.msra.mxu0 %v2157
        %2201 = vmatmul.bf16.gmra.mxu0 %v2178
        %v2202 = vpop.f32.mrf.mxu0
        %v2203 = vadd.f32 %v2190, %v2202
        %v2204 = vpop.f32.mrf.mxu0
        %2205 = vdwg.mxu0
        %2206 = vmatpush.bf16.msra.mxu0 %v2156
        %2207 = vmatpush.bf16.msra.mxu0 %v2154
        %2208 = vmatpush.bf16.msra.mxu0 %v2152
        %2209 = vmatpush.bf16.msra.mxu0 %v2150
        %2210 = vmatpush.bf16.msra.mxu0 %v2148
        %2211 = vmatpush.bf16.msra.mxu0 %v2146
        %2212 = vmatpush.bf16.msra.mxu0 %v2144
        %2213 = vmatpush.bf16.msra.mxu0 %v2142
        %2214 = vmatmul.bf16.gmra.mxu0 %v2084
        %v2215 = vpop.f32.mrf.mxu0
        %v2216 = vadd.f32 0.0, %v2215
        %v2217 = vpop.f32.mrf.mxu0
        %2218 = vdwg.mxu0
        %2219 = vmatpush.bf16.msra.mxu0 0
        %2220 = vmatpush.bf16.msra.mxu0 0
        %2221 = vmatpush.bf16.msra.mxu0 0
        %2222 = vmatpush.bf16.msra.mxu0 0
        %2223 = vmatpush.bf16.msra.mxu0 0
        %2224 = vmatpush.bf16.msra.mxu0 0
        %2225 = vmatpush.bf16.msra.mxu0 0
        %2226 = vmatpush.bf16.msra.mxu0 %v2158
        %2227 = vmatmul.bf16.gmra.mxu0 %v2178
        %v2228 = vpop.f32.mrf.mxu0
        %v2229 = vadd.f32 %v2216, %v2228
        %v2230 = vpop.f32.mrf.mxu0
        %2231 = vdwg.mxu0
        %v2232 = vadd.f32 %v2034, %v2203
        %v2233 = vadd.f32 %v2060, %v2229
        %s2234 = scalar_lea.vmem %s5, 432
        %v2235 = vld [vmem:[%s2234] sm:$0xff]
        %v2236 = vld [vmem:[%s2234 + $0x8] sm:$0xff]
        %v2237 = vld [vmem:[%s2234 + $0x10] sm:$0xff]
        %v2238 = vld [vmem:[%s2234 + $0x18] sm:$0xff]
        %v2239 = vld [vmem:[%s2234 + $0x20] sm:$0xff]
        %v2240 = vld [vmem:[%s2234 + $0x28] sm:$0xff]
        %v2241 = vld [vmem:[%s2234 + $0x30] sm:$0xff]
        %v2242 = vld [vmem:[%s2234 + $0x38] sm:$0xff]
        %v2243 = vld [vmem:[%s2234 + $0x40] sm:$0xff]
        %v2244 = vld [vmem:[%s2234 + $0x48] sm:$0xff]
        %v2245 = vld [vmem:[%s2234 + $0x50] sm:$0xff]
        %v2246 = vld [vmem:[%s2234 + $0x58] sm:$0xff]
        %v2247 = vld [vmem:[%s2234 + $0x60] sm:$0xff]
        %v2248 = vld [vmem:[%s2234 + $0x68] sm:$0xff]
        %v2249 = vld [vmem:[%s2234 + $0x70] sm:$0xff]
        %v2250 = vld [vmem:[%s2234 + $0x78] sm:$0xff]
        %v2251 = vld [vmem:[%s2234 + $0x80] sm:$0xff]
        %v2252 = vld [vmem:[%s2234 + $0x88] sm:$0xff]
        %v2253 = vrot.slane %v1758, 1
        %v2254 = vrot.slane %v1760, 2
        %v2255 = vor.u32 %v2253, %v2254
        %v2256 = vrot.slane %v1765, 1
        %v2257 = vrot.slane %v1767, 2
        %v2258 = vor.u32 %v2256, %v2257
        %v2278 = vunpack.c.l.b16 %v2235
        %v2279 = vunpack.c.h.b16 %v2235
        %v2280 = vunpack.c.l.b16 %v2236
        %v2281 = vunpack.c.h.b16 %v2236
        %v2282 = vunpack.c.l.b16 %v2237
        %v2283 = vunpack.c.h.b16 %v2237
        %v2284 = vunpack.c.l.b16 %v2238
        %v2285 = vunpack.c.h.b16 %v2238
        %v2286 = vunpack.c.l.b16 %v2239
        %v2287 = vunpack.c.h.b16 %v2239
        %v2288 = vunpack.c.l.b16 %v2240
        %v2289 = vunpack.c.h.b16 %v2240
        %v2290 = vunpack.c.l.b16 %v2241
        %v2291 = vunpack.c.h.b16 %v2241
        %v2292 = vunpack.c.l.b16 %v2242
        %v2293 = vunpack.c.h.b16 %v2242
        %v2294 = vunpack.c.l.b16 %v2243
        %v2295 = vunpack.c.h.b16 %v2243
        %v2296 = vunpack.c.l.b16 %v2244
        %v2297 = vunpack.c.h.b16 %v2244
        %v2298 = vunpack.c.l.b16 %v2245
        %v2299 = vunpack.c.h.b16 %v2245
        %v2300 = vunpack.c.l.b16 %v2246
        %v2301 = vunpack.c.h.b16 %v2246
        %v2302 = vunpack.c.l.b16 %v2247
        %v2303 = vunpack.c.h.b16 %v2247
        %v2304 = vunpack.c.l.b16 %v2248
        %v2305 = vunpack.c.h.b16 %v2248
        %v2306 = vunpack.c.l.b16 %v2249
        %v2307 = vunpack.c.h.b16 %v2249
        %v2308 = vunpack.c.l.b16 %v2250
        %v2309 = vunpack.c.h.b16 %v2250
        %v2310 = vunpack.c.l.b16 %v2251
        %v2311 = vunpack.c.h.b16 %v2251
        %v2312 = vunpack.c.l.b16 %v2252
        %v2313 = vunpack.c.h.b16 %v2252
        %v2314 = vpack.c.b16 %v2280, %v2278
        %v2315 = vpack.c.b16 %v2281, %v2279
        %v2316 = vpack.c.b16 %v2284, %v2282
        %v2317 = vpack.c.b16 %v2285, %v2283
        %v2318 = vpack.c.b16 %v2288, %v2286
        %v2319 = vpack.c.b16 %v2289, %v2287
        %v2320 = vpack.c.b16 %v2292, %v2290
        %v2321 = vpack.c.b16 %v2293, %v2291
        %v2322 = vpack.c.b16 %v2296, %v2294
        %v2323 = vpack.c.b16 %v2297, %v2295
        %v2324 = vpack.c.b16 %v2300, %v2298
        %v2325 = vpack.c.b16 %v2301, %v2299
        %v2326 = vpack.c.b16 %v2304, %v2302
        %v2327 = vpack.c.b16 %v2305, %v2303
        %v2328 = vpack.c.b16 %v2308, %v2306
        %v2329 = vpack.c.b16 %v2309, %v2307
        %v2330 = vpack.c.b16 %v2312, %v2310
        %v2331 = vpack.c.b16 %v2313, %v2311
        %v2351 = vsel %vm1862, %v2258, 0
        %2353 = vmatpush.bf16.msra.mxu0 %v2328
        %2354 = vmatpush.bf16.msra.mxu0 %v2326
        %2355 = vmatpush.bf16.msra.mxu0 %v2324
        %2356 = vmatpush.bf16.msra.mxu0 %v2322
        %2357 = vmatpush.bf16.msra.mxu0 %v2320
        %2358 = vmatpush.bf16.msra.mxu0 %v2318
        %2359 = vmatpush.bf16.msra.mxu0 %v2316
        %2360 = vmatpush.bf16.msra.mxu0 %v2314
        %2361 = vmatmul.bf16.gmra.mxu0 %v2255
        %v2362 = vpop.f32.mrf.mxu0
        %v2363 = vadd.f32 0.0, %v2362
        %v2364 = vpop.f32.mrf.mxu0
        %2365 = vdwg.mxu0
        %2366 = vmatpush.bf16.msra.mxu0 0
        %2367 = vmatpush.bf16.msra.mxu0 0
        %2368 = vmatpush.bf16.msra.mxu0 0
        %2369 = vmatpush.bf16.msra.mxu0 0
        %2370 = vmatpush.bf16.msra.mxu0 0
        %2371 = vmatpush.bf16.msra.mxu0 0
        %2372 = vmatpush.bf16.msra.mxu0 0
        %2373 = vmatpush.bf16.msra.mxu0 %v2330
        %2374 = vmatmul.bf16.gmra.mxu0 %v2351
        %v2375 = vpop.f32.mrf.mxu0
        %v2376 = vadd.f32 %v2363, %v2375
        %v2377 = vpop.f32.mrf.mxu0
        %2378 = vdwg.mxu0
        %2379 = vmatpush.bf16.msra.mxu0 %v2329
        %2380 = vmatpush.bf16.msra.mxu0 %v2327
        %2381 = vmatpush.bf16.msra.mxu0 %v2325
        %2382 = vmatpush.bf16.msra.mxu0 %v2323
        %2383 = vmatpush.bf16.msra.mxu0 %v2321
        %2384 = vmatpush.bf16.msra.mxu0 %v2319
        %2385 = vmatpush.bf16.msra.mxu0 %v2317
        %2386 = vmatpush.bf16.msra.mxu0 %v2315
        %2387 = vmatmul.bf16.gmra.mxu0 %v2255
        %v2388 = vpop.f32.mrf.mxu0
        %v2389 = vadd.f32 0.0, %v2388
        %v2390 = vpop.f32.mrf.mxu0
        %2391 = vdwg.mxu0
        %2392 = vmatpush.bf16.msra.mxu0 0
        %2393 = vmatpush.bf16.msra.mxu0 0
        %2394 = vmatpush.bf16.msra.mxu0 0
        %2395 = vmatpush.bf16.msra.mxu0 0
        %2396 = vmatpush.bf16.msra.mxu0 0
        %2397 = vmatpush.bf16.msra.mxu0 0
        %2398 = vmatpush.bf16.msra.mxu0 0
        %2399 = vmatpush.bf16.msra.mxu0 %v2331
        %2400 = vmatmul.bf16.gmra.mxu0 %v2351
        %v2401 = vpop.f32.mrf.mxu0
        %v2402 = vadd.f32 %v2389, %v2401
        %v2403 = vpop.f32.mrf.mxu0
        %2404 = vdwg.mxu0
        %v2405 = vadd.f32 %v2232, %v2376
        %v2406 = vadd.f32 %v2233, %v2402
        %s2407 = scalar_lea.vmem %s5, 576
        %v2408 = vld [vmem:[%s2407] sm:$0xff]
        %v2409 = vld [vmem:[%s2407 + $0x8] sm:$0xff]
        %v2410 = vld [vmem:[%s2407 + $0x10] sm:$0xff]
        %v2411 = vld [vmem:[%s2407 + $0x18] sm:$0xff]
        %v2412 = vld [vmem:[%s2407 + $0x20] sm:$0xff]
        %v2413 = vld [vmem:[%s2407 + $0x28] sm:$0xff]
        %v2414 = vld [vmem:[%s2407 + $0x30] sm:$0xff]
        %v2415 = vld [vmem:[%s2407 + $0x38] sm:$0xff]
        %v2416 = vld [vmem:[%s2407 + $0x40] sm:$0xff]
        %v2417 = vld [vmem:[%s2407 + $0x48] sm:$0xff]
        %v2418 = vld [vmem:[%s2407 + $0x50] sm:$0xff]
        %v2419 = vld [vmem:[%s2407 + $0x58] sm:$0xff]
        %v2420 = vld [vmem:[%s2407 + $0x60] sm:$0xff]
        %v2421 = vld [vmem:[%s2407 + $0x68] sm:$0xff]
        %v2422 = vld [vmem:[%s2407 + $0x70] sm:$0xff]
        %v2423 = vld [vmem:[%s2407 + $0x78] sm:$0xff]
        %v2424 = vld [vmem:[%s2407 + $0x80] sm:$0xff]
        %v2425 = vld [vmem:[%s2407 + $0x88] sm:$0xff]
        %v2426 = vrot.slane %v1736, 2
        %v2427 = vrot.slane %v1737, 2
        %v2447 = vunpack.c.l.b16 %v2408
        %v2448 = vunpack.c.h.b16 %v2408
        %v2449 = vunpack.c.l.b16 %v2409
        %v2450 = vunpack.c.h.b16 %v2409
        %v2451 = vunpack.c.l.b16 %v2410
        %v2452 = vunpack.c.h.b16 %v2410
        %v2453 = vunpack.c.l.b16 %v2411
        %v2454 = vunpack.c.h.b16 %v2411
        %v2455 = vunpack.c.l.b16 %v2412
        %v2456 = vunpack.c.h.b16 %v2412
        %v2457 = vunpack.c.l.b16 %v2413
        %v2458 = vunpack.c.h.b16 %v2413
        %v2459 = vunpack.c.l.b16 %v2414
        %v2460 = vunpack.c.h.b16 %v2414
        %v2461 = vunpack.c.l.b16 %v2415
        %v2462 = vunpack.c.h.b16 %v2415
        %v2463 = vunpack.c.l.b16 %v2416
        %v2464 = vunpack.c.h.b16 %v2416
        %v2465 = vunpack.c.l.b16 %v2417
        %v2466 = vunpack.c.h.b16 %v2417
        %v2467 = vunpack.c.l.b16 %v2418
        %v2468 = vunpack.c.h.b16 %v2418
        %v2469 = vunpack.c.l.b16 %v2419
        %v2470 = vunpack.c.h.b16 %v2419
        %v2471 = vunpack.c.l.b16 %v2420
        %v2472 = vunpack.c.h.b16 %v2420
        %v2473 = vunpack.c.l.b16 %v2421
        %v2474 = vunpack.c.h.b16 %v2421
        %v2475 = vunpack.c.l.b16 %v2422
        %v2476 = vunpack.c.h.b16 %v2422
        %v2477 = vunpack.c.l.b16 %v2423
        %v2478 = vunpack.c.h.b16 %v2423
        %v2479 = vunpack.c.l.b16 %v2424
        %v2480 = vunpack.c.h.b16 %v2424
        %v2481 = vunpack.c.l.b16 %v2425
        %v2482 = vunpack.c.h.b16 %v2425
        %v2483 = vpack.c.b16 %v2449, %v2447
        %v2484 = vpack.c.b16 %v2450, %v2448
        %v2485 = vpack.c.b16 %v2453, %v2451
        %v2486 = vpack.c.b16 %v2454, %v2452
        %v2487 = vpack.c.b16 %v2457, %v2455
        %v2488 = vpack.c.b16 %v2458, %v2456
        %v2489 = vpack.c.b16 %v2461, %v2459
        %v2490 = vpack.c.b16 %v2462, %v2460
        %v2491 = vpack.c.b16 %v2465, %v2463
        %v2492 = vpack.c.b16 %v2466, %v2464
        %v2493 = vpack.c.b16 %v2469, %v2467
        %v2494 = vpack.c.b16 %v2470, %v2468
        %v2495 = vpack.c.b16 %v2473, %v2471
        %v2496 = vpack.c.b16 %v2474, %v2472
        %v2497 = vpack.c.b16 %v2477, %v2475
        %v2498 = vpack.c.b16 %v2478, %v2476
        %v2499 = vpack.c.b16 %v2481, %v2479
        %v2500 = vpack.c.b16 %v2482, %v2480
        %v2520 = vsel %vm1862, %v2427, 0
        %2522 = vmatpush.bf16.msra.mxu0 %v2497
        %2523 = vmatpush.bf16.msra.mxu0 %v2495
        %2524 = vmatpush.bf16.msra.mxu0 %v2493
        %2525 = vmatpush.bf16.msra.mxu0 %v2491
        %2526 = vmatpush.bf16.msra.mxu0 %v2489
        %2527 = vmatpush.bf16.msra.mxu0 %v2487
        %2528 = vmatpush.bf16.msra.mxu0 %v2485
        %2529 = vmatpush.bf16.msra.mxu0 %v2483
        %2530 = vmatmul.bf16.gmra.mxu0 %v2426
        %v2531 = vpop.f32.mrf.mxu0
        %v2532 = vadd.f32 0.0, %v2531
        %v2533 = vpop.f32.mrf.mxu0
        %2534 = vdwg.mxu0
        %2535 = vmatpush.bf16.msra.mxu0 0
        %2536 = vmatpush.bf16.msra.mxu0 0
        %2537 = vmatpush.bf16.msra.mxu0 0
        %2538 = vmatpush.bf16.msra.mxu0 0
        %2539 = vmatpush.bf16.msra.mxu0 0
        %2540 = vmatpush.bf16.msra.mxu0 0
        %2541 = vmatpush.bf16.msra.mxu0 0
        %2542 = vmatpush.bf16.msra.mxu0 %v2499
        %2543 = vmatmul.bf16.gmra.mxu0 %v2520
        %v2544 = vpop.f32.mrf.mxu0
        %v2545 = vadd.f32 %v2532, %v2544
        %v2546 = vpop.f32.mrf.mxu0
        %2547 = vdwg.mxu0
        %2548 = vmatpush.bf16.msra.mxu0 %v2498
        %2549 = vmatpush.bf16.msra.mxu0 %v2496
        %2550 = vmatpush.bf16.msra.mxu0 %v2494
        %2551 = vmatpush.bf16.msra.mxu0 %v2492
        %2552 = vmatpush.bf16.msra.mxu0 %v2490
        %2553 = vmatpush.bf16.msra.mxu0 %v2488
        %2554 = vmatpush.bf16.msra.mxu0 %v2486
        %2555 = vmatpush.bf16.msra.mxu0 %v2484
        %2556 = vmatmul.bf16.gmra.mxu0 %v2426
        %v2557 = vpop.f32.mrf.mxu0
        %v2558 = vadd.f32 0.0, %v2557
        %v2559 = vpop.f32.mrf.mxu0
        %2560 = vdwg.mxu0
        %2561 = vmatpush.bf16.msra.mxu0 0
        %2562 = vmatpush.bf16.msra.mxu0 0
        %2563 = vmatpush.bf16.msra.mxu0 0
        %2564 = vmatpush.bf16.msra.mxu0 0
        %2565 = vmatpush.bf16.msra.mxu0 0
        %2566 = vmatpush.bf16.msra.mxu0 0
        %2567 = vmatpush.bf16.msra.mxu0 0
        %2568 = vmatpush.bf16.msra.mxu0 %v2500
        %2569 = vmatmul.bf16.gmra.mxu0 %v2520
        %v2570 = vpop.f32.mrf.mxu0
        %v2571 = vadd.f32 %v2558, %v2570
        %v2572 = vpop.f32.mrf.mxu0
        %2573 = vdwg.mxu0
        %v2574 = vadd.f32 %v2405, %v2545
        %v2575 = vadd.f32 %v2406, %v2571
        %v2576 = vld [vmem:[%s6] sm:$0x3]
        %v2578 = vperm.slane %v2576, 0
        %v2579 = vperm.slane %v2576, 1
        %v2582 = vadd.f32 %v2574, %v2578
        %v2583 = vadd.f32 %v2575, %v2579
        %v2584 = vmax.f32 %v2582, 0.0
        %v2585 = vmax.f32 %v2583, 0.0
        %v2586 = vld [vmem:[%s7] sm:$0xf]
        %vm2587 = vcmask 64512
        %v2589 = vsel %vm2587, %v2586, 0
        %2591 = vmatpush.msra.mxu0 0.0
        %2592 = vmatpush.msra.mxu0 0.0
        %2593 = vmatpush.msra.mxu0 0.0
        %2594 = vmatpush.msra.mxu0 0.0
        %2595 = vmatpush.msra.mxu0 0.0
        %2596 = vmatpush.msra.mxu0 0.0
        %2597 = vmatpush.msra.mxu0 0.0
        %2598 = vmatpush.msra.mxu0 0.0
        %2599 = vmatpush.msra.mxu0 0.0
        %2600 = vmatpush.msra.mxu0 0.0
        %2601 = vmatpush.msra.mxu0 0.0
        %2602 = vmatpush.msra.mxu0 0.0
        %2603 = vmatpush.msra.mxu0 0.0
        %2604 = vmatpush.msra.mxu0 0.0
        %2605 = vmatpush.msra.mxu0 0.0
        %2606 = vmatpush.msra.mxu0 %v2584
        %2607 = vmatmul.f32.gmra.mxu0 %v2589
        %v2608 = vpop.f32.mrf.mxu0
        %v2609 = vadd.f32 0.0, %v2608
        %2610 = vdwg.mxu0
        %2611 = vmatpush.msra.mxu0 0.0
        %2612 = vmatpush.msra.mxu0 0.0
        %2613 = vmatpush.msra.mxu0 0.0
        %2614 = vmatpush.msra.mxu0 0.0
        %2615 = vmatpush.msra.mxu0 0.0
        %2616 = vmatpush.msra.mxu0 0.0
        %2617 = vmatpush.msra.mxu0 0.0
        %2618 = vmatpush.msra.mxu0 0.0
        %2619 = vmatpush.msra.mxu0 0.0
        %2620 = vmatpush.msra.mxu0 0.0
        %2621 = vmatpush.msra.mxu0 0.0
        %2622 = vmatpush.msra.mxu0 0.0
        %2623 = vmatpush.msra.mxu0 0.0
        %2624 = vmatpush.msra.mxu0 0.0
        %2625 = vmatpush.msra.mxu0 0.0
        %2626 = vmatpush.msra.mxu0 %v2585
        %2627 = vmatmul.f32.gmra.mxu0 %v2589
        %v2628 = vpop.f32.mrf.mxu0
        %v2629 = vadd.f32 0.0, %v2628
        %2630 = vdwg.mxu0
        %s2631 = scalar_lea.vmem %s7, 4
        %v2632 = vld [vmem:[%s2631] sm:$0xf]
        %v2634 = vsel %vm2587, %v2632, 0
        %2636 = vmatpush.msra.mxu0 0.0
        %2637 = vmatpush.msra.mxu0 0.0
        %2638 = vmatpush.msra.mxu0 0.0
        %2639 = vmatpush.msra.mxu0 0.0
        %2640 = vmatpush.msra.mxu0 0.0
        %2641 = vmatpush.msra.mxu0 0.0
        %2642 = vmatpush.msra.mxu0 0.0
        %2643 = vmatpush.msra.mxu0 0.0
        %2644 = vmatpush.msra.mxu0 0.0
        %2645 = vmatpush.msra.mxu0 0.0
        %2646 = vmatpush.msra.mxu0 0.0
        %2647 = vmatpush.msra.mxu0 0.0
        %2648 = vmatpush.msra.mxu0 0.0
        %2649 = vmatpush.msra.mxu0 0.0
        %2650 = vmatpush.msra.mxu0 0.0
        %2651 = vmatpush.msra.mxu0 %v2584
        %2652 = vmatmul.f32.gmra.mxu0 %v2634
        %v2653 = vpop.f32.mrf.mxu0
        %v2654 = vadd.f32 0.0, %v2653
        %2655 = vdwg.mxu0
        %2656 = vmatpush.msra.mxu0 0.0
        %2657 = vmatpush.msra.mxu0 0.0
        %2658 = vmatpush.msra.mxu0 0.0
        %2659 = vmatpush.msra.mxu0 0.0
        %2660 = vmatpush.msra.mxu0 0.0
        %2661 = vmatpush.msra.mxu0 0.0
        %2662 = vmatpush.msra.mxu0 0.0
        %2663 = vmatpush.msra.mxu0 0.0
        %2664 = vmatpush.msra.mxu0 0.0
        %2665 = vmatpush.msra.mxu0 0.0
        %2666 = vmatpush.msra.mxu0 0.0
        %2667 = vmatpush.msra.mxu0 0.0
        %2668 = vmatpush.msra.mxu0 0.0
        %2669 = vmatpush.msra.mxu0 0.0
        %2670 = vmatpush.msra.mxu0 0.0
        %2671 = vmatpush.msra.mxu0 %v2585
        %2672 = vmatmul.f32.gmra.mxu0 %v2634
        %v2673 = vpop.f32.mrf.mxu0
        %v2674 = vadd.f32 0.0, %v2673
        %2675 = vdwg.mxu0
        %v2676 = vmax.f32 %v2609, %v2654
        %v2677 = vmax.f32 %v2629, %v2674
        %v2678 = vld [vmem:[%s8] sm:$0xff]
        %v2679 = vld [vmem:[%s8 + $0x8] sm:$0xff]
        %v2680 = vld [vmem:[%s8 + $0x10] sm:$0xff]
        %v2681 = vld [vmem:[%s8 + $0x18] sm:$0xff]
        %v2682 = vld [vmem:[%s8 + $0x20] sm:$0xff]
        %v2683 = vld [vmem:[%s8 + $0x28] sm:$0xff]
        %v2684 = vld [vmem:[%s8 + $0x30] sm:$0xff]
        %v2685 = vld [vmem:[%s8 + $0x38] sm:$0xff]
        %v2686 = vld [vmem:[%s8 + $0x40] sm:$0xff]
        %v2687 = vld [vmem:[%s8 + $0x48] sm:$0xff]
        %v2688 = vld [vmem:[%s8 + $0x50] sm:$0xff]
        %v2689 = vld [vmem:[%s8 + $0x58] sm:$0xff]
        %v2690 = vld [vmem:[%s8 + $0x60] sm:$0xff]
        %v2691 = vld [vmem:[%s8 + $0x68] sm:$0xff]
        %v2692 = vld [vmem:[%s8 + $0x70] sm:$0xff]
        %v2693 = vld [vmem:[%s8 + $0x78] sm:$0xff]
        %v2694 = vld [vmem:[%s8 + $0x80] sm:$0xff]
        %v2695 = vld [vmem:[%s8 + $0x88] sm:$0xff]
        %v2696 = vld [vmem:[%s8 + $0x90] sm:$0xff]
        %v2697 = vld [vmem:[%s8 + $0x98] sm:$0xff]
        %v2698 = vld [vmem:[%s8 + $0xa0] sm:$0xff]
        %v2699 = vld [vmem:[%s8 + $0xa8] sm:$0xff]
        %v2700 = vld [vmem:[%s8 + $0xb0] sm:$0xff]
        %v2701 = vld [vmem:[%s8 + $0xb8] sm:$0xff]
        %v2702 = vld [vmem:[%s8 + $0xc0] sm:$0xff]
        %v2703 = vld [vmem:[%s8 + $0xc8] sm:$0xff]
        %v2704 = vld [vmem:[%s8 + $0xd0] sm:$0xff]
        %v2705 = vld [vmem:[%s8 + $0xd8] sm:$0xff]
        %vm2706 = vcmask 785408
        %v2708 = vsel %vm2706, %v2677, 0
        %2710 = vmatpush.msra.mxu0 %v2693
        %2711 = vmatpush.msra.mxu0 %v2692
        %2712 = vmatpush.msra.mxu0 %v2691
        %2713 = vmatpush.msra.mxu0 %v2690
        %2714 = vmatpush.msra.mxu0 %v2689
        %2715 = vmatpush.msra.mxu0 %v2688
        %2716 = vmatpush.msra.mxu0 %v2687
        %2717 = vmatpush.msra.mxu0 %v2686
        %2718 = vmatpush.msra.mxu0 %v2685
        %2719 = vmatpush.msra.mxu0 %v2684
        %2720 = vmatpush.msra.mxu0 %v2683
        %2721 = vmatpush.msra.mxu0 %v2682
        %2722 = vmatpush.msra.mxu0 %v2681
        %2723 = vmatpush.msra.mxu0 %v2680
        %2724 = vmatpush.msra.mxu0 %v2679
        %2725 = vmatpush.msra.mxu0 %v2678
        %2726 = vmatmul.f32.gmra.mxu0 %v2676
        %v2727 = vpop.f32.mrf.mxu0
        %v2728 = vadd.f32 0.0, %v2727
        %2729 = vdwg.mxu0
        %2730 = vmatpush.msra.mxu0 0.0
        %2731 = vmatpush.msra.mxu0 0.0
        %2732 = vmatpush.msra.mxu0 0.0
        %2733 = vmatpush.msra.mxu0 0.0
        %2734 = vmatpush.msra.mxu0 %v2705
        %2735 = vmatpush.msra.mxu0 %v2704
        %2736 = vmatpush.msra.mxu0 %v2703
        %2737 = vmatpush.msra.mxu0 %v2702
        %2738 = vmatpush.msra.mxu0 %v2701
        %2739 = vmatpush.msra.mxu0 %v2700
        %2740 = vmatpush.msra.mxu0 %v2699
        %2741 = vmatpush.msra.mxu0 %v2698
        %2742 = vmatpush.msra.mxu0 %v2697
        %2743 = vmatpush.msra.mxu0 %v2696
        %2744 = vmatpush.msra.mxu0 %v2695
        %2745 = vmatpush.msra.mxu0 %v2694
        %2746 = vmatmul.f32.gmra.mxu0 %v2708
        %v2747 = vpop.f32.mrf.mxu0
        %v2748 = vadd.f32 %v2728, %v2747
        %2749 = vdwg.mxu0
        %s2750 = scalar_lea.vmem %s8, 224
        %v2751 = vld [vmem:[%s2750] sm:$0xff]
        %v2752 = vld [vmem:[%s2750 + $0x8] sm:$0xff]
        %v2753 = vld [vmem:[%s2750 + $0x10] sm:$0xff]
        %v2754 = vld [vmem:[%s2750 + $0x18] sm:$0xff]
        %v2755 = vld [vmem:[%s2750 + $0x20] sm:$0xff]
        %v2756 = vld [vmem:[%s2750 + $0x28] sm:$0xff]
        %v2757 = vld [vmem:[%s2750 + $0x30] sm:$0xff]
        %v2758 = vld [vmem:[%s2750 + $0x38] sm:$0xff]
        %v2759 = vld [vmem:[%s2750 + $0x40] sm:$0xff]
        %v2760 = vld [vmem:[%s2750 + $0x48] sm:$0xff]
        %v2761 = vld [vmem:[%s2750 + $0x50] sm:$0xff]
        %v2762 = vld [vmem:[%s2750 + $0x58] sm:$0xff]
        %v2763 = vld [vmem:[%s2750 + $0x60] sm:$0xff]
        %v2764 = vld [vmem:[%s2750 + $0x68] sm:$0xff]
        %v2765 = vld [vmem:[%s2750 + $0x70] sm:$0xff]
        %v2766 = vld [vmem:[%s2750 + $0x78] sm:$0xff]
        %v2767 = vld [vmem:[%s2750 + $0x80] sm:$0xff]
        %v2768 = vld [vmem:[%s2750 + $0x88] sm:$0xff]
        %v2769 = vld [vmem:[%s2750 + $0x90] sm:$0xff]
        %v2770 = vld [vmem:[%s2750 + $0x98] sm:$0xff]
        %v2771 = vld [vmem:[%s2750 + $0xa0] sm:$0xff]
        %v2772 = vld [vmem:[%s2750 + $0xa8] sm:$0xff]
        %v2773 = vld [vmem:[%s2750 + $0xb0] sm:$0xff]
        %v2774 = vld [vmem:[%s2750 + $0xb8] sm:$0xff]
        %v2775 = vld [vmem:[%s2750 + $0xc0] sm:$0xff]
        %v2776 = vld [vmem:[%s2750 + $0xc8] sm:$0xff]
        %v2777 = vld [vmem:[%s2750 + $0xd0] sm:$0xff]
        %v2778 = vld [vmem:[%s2750 + $0xd8] sm:$0xff]
        %2779 = vmatpush.msra.mxu0 %v2766
        %2780 = vmatpush.msra.mxu0 %v2765
        %2781 = vmatpush.msra.mxu0 %v2764
        %2782 = vmatpush.msra.mxu0 %v2763
        %2783 = vmatpush.msra.mxu0 %v2762
        %2784 = vmatpush.msra.mxu0 %v2761
        %2785 = vmatpush.msra.mxu0 %v2760
        %2786 = vmatpush.msra.mxu0 %v2759
        %2787 = vmatpush.msra.mxu0 %v2758
        %2788 = vmatpush.msra.mxu0 %v2757
        %2789 = vmatpush.msra.mxu0 %v2756
        %2790 = vmatpush.msra.mxu0 %v2755
        %2791 = vmatpush.msra.mxu0 %v2754
        %2792 = vmatpush.msra.mxu0 %v2753
        %2793 = vmatpush.msra.mxu0 %v2752
        %2794 = vmatpush.msra.mxu0 %v2751
        %2795 = vmatmul.f32.gmra.mxu0 %v2676
        %v2796 = vpop.f32.mrf.mxu0
        %v2797 = vadd.f32 0.0, %v2796
        %2798 = vdwg.mxu0
        %2799 = vmatpush.msra.mxu0 0.0
        %2800 = vmatpush.msra.mxu0 0.0
        %2801 = vmatpush.msra.mxu0 0.0
        %2802 = vmatpush.msra.mxu0 0.0
        %2803 = vmatpush.msra.mxu0 %v2778
        %2804 = vmatpush.msra.mxu0 %v2777
        %2805 = vmatpush.msra.mxu0 %v2776
        %2806 = vmatpush.msra.mxu0 %v2775
        %2807 = vmatpush.msra.mxu0 %v2774
        %2808 = vmatpush.msra.mxu0 %v2773
        %2809 = vmatpush.msra.mxu0 %v2772
        %2810 = vmatpush.msra.mxu0 %v2771
        %2811 = vmatpush.msra.mxu0 %v2770
        %2812 = vmatpush.msra.mxu0 %v2769
        %2813 = vmatpush.msra.mxu0 %v2768
        %2814 = vmatpush.msra.mxu0 %v2767
        %2815 = vmatmul.f32.gmra.mxu0 %v2708
        %v2816 = vpop.f32.mrf.mxu0
        %v2817 = vadd.f32 %v2797, %v2816
        %2818 = vdwg.mxu0
        %v2819 = vmax.f32 %v2748, %v2817
        %v2820 = vpack.c.bf16 %v2819, %v2819
        %v2821 = vld [vmem:[%s9] sm:$0xf]
        %v2822 = vld [vmem:[%s9 + $0x4] sm:$0xf]
        %v2823 = vld [vmem:[%s9 + $0x8] sm:$0xf]
        %v2824 = vld [vmem:[%s9 + $0xc] sm:$0xf]
        %v2825 = vld [vmem:[%s9 + $0x10] sm:$0xf]
        %v2826 = vld [vmem:[%s9 + $0x14] sm:$0xf]
        %v2827 = vld [vmem:[%s9 + $0x18] sm:$0xf]
        %v2828 = vld [vmem:[%s9 + $0x1c] sm:$0xf]
        %v2829 = vld [vmem:[%s9 + $0x20] sm:$0xf]
        %v2830 = vld [vmem:[%s9 + $0x24] sm:$0xf]
        %v2831 = vld [vmem:[%s9 + $0x28] sm:$0xf]
        %v2832 = vld [vmem:[%s9 + $0x2c] sm:$0xf]
        %v2833 = vld [vmem:[%s9 + $0x30] sm:$0xf]
        %v2834 = vld [vmem:[%s9 + $0x34] sm:$0xf]
        %s2835 = scalar_lea.vmem %s9, 56
        %v2836 = vld [vmem:[%s2835] sm:$0xf]
        %v2837 = vld [vmem:[%s2835 + $0x4] sm:$0xf]
        %v2838 = vld [vmem:[%s2835 + $0x8] sm:$0xf]
        %v2839 = vld [vmem:[%s2835 + $0xc] sm:$0xf]
        %v2840 = vld [vmem:[%s2835 + $0x10] sm:$0xf]
        %v2841 = vld [vmem:[%s2835 + $0x14] sm:$0xf]
        %v2842 = vld [vmem:[%s2835 + $0x18] sm:$0xf]
        %v2843 = vld [vmem:[%s2835 + $0x1c] sm:$0xf]
        %v2844 = vld [vmem:[%s2835 + $0x20] sm:$0xf]
        %v2845 = vld [vmem:[%s2835 + $0x24] sm:$0xf]
        %v2846 = vld [vmem:[%s2835 + $0x28] sm:$0xf]
        %v2847 = vld [vmem:[%s2835 + $0x2c] sm:$0xf]
        %v2848 = vld [vmem:[%s2835 + $0x30] sm:$0xf]
        %v2849 = vld [vmem:[%s2835 + $0x34] sm:$0xf]
        %v2851 = vshrl.u32 %v2820, 16
        %v2867 = vunpack.c.l.b16 %v2836
        %v2868 = vunpack.c.l.b16 %v2837
        %v2869 = vunpack.c.l.b16 %v2838
        %v2870 = vunpack.c.l.b16 %v2839
        %v2871 = vunpack.c.l.b16 %v2840
        %v2872 = vunpack.c.l.b16 %v2841
        %v2873 = vunpack.c.l.b16 %v2842
        %v2874 = vunpack.c.l.b16 %v2843
        %v2875 = vunpack.c.l.b16 %v2844
        %v2876 = vunpack.c.l.b16 %v2845
        %v2877 = vunpack.c.l.b16 %v2846
        %v2878 = vunpack.c.l.b16 %v2847
        %v2879 = vunpack.c.l.b16 %v2848
        %v2880 = vunpack.c.l.b16 %v2849
        %v2881 = vpack.c.b16 %v2868, %v2867
        %v2882 = vpack.c.b16 %v2870, %v2869
        %v2883 = vpack.c.b16 %v2872, %v2871
        %v2884 = vpack.c.b16 %v2874, %v2873
        %v2885 = vpack.c.b16 %v2876, %v2875
        %v2886 = vpack.c.b16 %v2878, %v2877
        %v2887 = vpack.c.b16 %v2880, %v2879
        %vm2895 = vcmask 916480
        %v2897 = vsel %vm2895, %v2851, 0
        %2899 = vmatpush.bf16.msra.mxu0 0
        %2900 = vmatpush.bf16.msra.mxu0 %v2887
        %2901 = vmatpush.bf16.msra.mxu0 %v2886
        %2902 = vmatpush.bf16.msra.mxu0 %v2885
        %2903 = vmatpush.bf16.msra.mxu0 %v2884
        %2904 = vmatpush.bf16.msra.mxu0 %v2883
        %2905 = vmatpush.bf16.msra.mxu0 %v2882
        %2906 = vmatpush.bf16.msra.mxu0 %v2881
        %2907 = vmatmul.bf16.gmra.mxu0 %v2897
        %v2908 = vpop.f32.mrf.mxu0
        %v2909 = vadd.f32 0.0, %v2908
        %v2910 = vpop.f32.mrf.mxu0
        %2911 = vdwg.mxu0
        %v2926 = vunpack.c.l.b16 %v2821
        %v2927 = vunpack.c.l.b16 %v2822
        %v2928 = vunpack.c.l.b16 %v2823
        %v2929 = vunpack.c.l.b16 %v2824
        %v2930 = vunpack.c.l.b16 %v2825
        %v2931 = vunpack.c.l.b16 %v2826
        %v2932 = vunpack.c.l.b16 %v2827
        %v2933 = vunpack.c.l.b16 %v2828
        %v2934 = vunpack.c.l.b16 %v2829
        %v2935 = vunpack.c.l.b16 %v2830
        %v2936 = vunpack.c.l.b16 %v2831
        %v2937 = vunpack.c.l.b16 %v2832
        %v2938 = vunpack.c.l.b16 %v2833
        %v2939 = vunpack.c.l.b16 %v2834
        %v2940 = vpack.c.b16 %v2927, %v2926
        %v2941 = vpack.c.b16 %v2929, %v2928
        %v2942 = vpack.c.b16 %v2931, %v2930
        %v2943 = vpack.c.b16 %v2933, %v2932
        %v2944 = vpack.c.b16 %v2935, %v2934
        %v2945 = vpack.c.b16 %v2937, %v2936
        %v2946 = vpack.c.b16 %v2939, %v2938
        %v2954 = vsel %vm2895, %v2820, 0
        %2956 = vmatpush.bf16.msra.mxu0 0
        %2957 = vmatpush.bf16.msra.mxu0 %v2946
        %2958 = vmatpush.bf16.msra.mxu0 %v2945
        %2959 = vmatpush.bf16.msra.mxu0 %v2944
        %2960 = vmatpush.bf16.msra.mxu0 %v2943
        %2961 = vmatpush.bf16.msra.mxu0 %v2942
        %2962 = vmatpush.bf16.msra.mxu0 %v2941
        %2963 = vmatpush.bf16.msra.mxu0 %v2940
        %2964 = vmatmul.bf16.gmra.mxu0 %v2954
        %v2965 = vpop.f32.mrf.mxu0
        %v2966 = vadd.f32 %v2909, %v2965
        %v2967 = vpop.f32.mrf.mxu0
        %2968 = vdwg.mxu0
        %s2969 = scalar_lea.vmem %s9, 112
        %v2970 = vld [vmem:[%s2969] sm:$0xf]
        %v2971 = vld [vmem:[%s2969 + $0x4] sm:$0xf]
        %v2972 = vld [vmem:[%s2969 + $0x8] sm:$0xf]
        %v2973 = vld [vmem:[%s2969 + $0xc] sm:$0xf]
        %v2974 = vld [vmem:[%s2969 + $0x10] sm:$0xf]
        %v2975 = vld [vmem:[%s2969 + $0x14] sm:$0xf]
        %v2976 = vld [vmem:[%s2969 + $0x18] sm:$0xf]
        %v2977 = vld [vmem:[%s2969 + $0x1c] sm:$0xf]
        %v2978 = vld [vmem:[%s2969 + $0x20] sm:$0xf]
        %v2979 = vld [vmem:[%s2969 + $0x24] sm:$0xf]
        %v2980 = vld [vmem:[%s2969 + $0x28] sm:$0xf]
        %v2981 = vld [vmem:[%s2969 + $0x2c] sm:$0xf]
        %v2982 = vld [vmem:[%s2969 + $0x30] sm:$0xf]
        %v2983 = vld [vmem:[%s2969 + $0x34] sm:$0xf]
        %v2985 = vrot.slane %v2820, 1
        %v3000 = vunpack.c.l.b16 %v2970
        %v3001 = vunpack.c.l.b16 %v2971
        %v3002 = vunpack.c.l.b16 %v2972
        %v3003 = vunpack.c.l.b16 %v2973
        %v3004 = vunpack.c.l.b16 %v2974
        %v3005 = vunpack.c.l.b16 %v2975
        %v3006 = vunpack.c.l.b16 %v2976
        %v3007 = vunpack.c.l.b16 %v2977
        %v3008 = vunpack.c.l.b16 %v2978
        %v3009 = vunpack.c.l.b16 %v2979
        %v3010 = vunpack.c.l.b16 %v2980
        %v3011 = vunpack.c.l.b16 %v2981
        %v3012 = vunpack.c.l.b16 %v2982
        %v3013 = vunpack.c.l.b16 %v2983
        %v3014 = vpack.c.b16 %v3001, %v3000
        %v3015 = vpack.c.b16 %v3003, %v3002
        %v3016 = vpack.c.b16 %v3005, %v3004
        %v3017 = vpack.c.b16 %v3007, %v3006
        %v3018 = vpack.c.b16 %v3009, %v3008
        %v3019 = vpack.c.b16 %v3011, %v3010
        %v3020 = vpack.c.b16 %v3013, %v3012
        %v3029 = vsel %vm2895, %v2985, 0
        %3031 = vmatpush.bf16.msra.mxu0 0
        %3032 = vmatpush.bf16.msra.mxu0 %v3020
        %3033 = vmatpush.bf16.msra.mxu0 %v3019
        %3034 = vmatpush.bf16.msra.mxu0 %v3018
        %3035 = vmatpush.bf16.msra.mxu0 %v3017
        %3036 = vmatpush.bf16.msra.mxu0 %v3016
        %3037 = vmatpush.bf16.msra.mxu0 %v3015
        %3038 = vmatpush.bf16.msra.mxu0 %v3014
        %3039 = vmatmul.bf16.gmra.mxu0 %v3029
        %v3040 = vpop.f32.mrf.mxu0
        %v3041 = vadd.f32 0.0, %v3040
        %v3042 = vpop.f32.mrf.mxu0
        %3043 = vdwg.mxu0
        %v3044 = vadd.f32 %v2966, %v3041
        %s3045 = scalar_lea.vmem %s9, 168
        %v3046 = vld [vmem:[%s3045] sm:$0xf]
        %v3047 = vld [vmem:[%s3045 + $0x4] sm:$0xf]
        %v3048 = vld [vmem:[%s3045 + $0x8] sm:$0xf]
        %v3049 = vld [vmem:[%s3045 + $0xc] sm:$0xf]
        %v3050 = vld [vmem:[%s3045 + $0x10] sm:$0xf]
        %v3051 = vld [vmem:[%s3045 + $0x14] sm:$0xf]
        %v3052 = vld [vmem:[%s3045 + $0x18] sm:$0xf]
        %v3053 = vld [vmem:[%s3045 + $0x1c] sm:$0xf]
        %v3054 = vld [vmem:[%s3045 + $0x20] sm:$0xf]
        %v3055 = vld [vmem:[%s3045 + $0x24] sm:$0xf]
        %v3056 = vld [vmem:[%s3045 + $0x28] sm:$0xf]
        %v3057 = vld [vmem:[%s3045 + $0x2c] sm:$0xf]
        %v3058 = vld [vmem:[%s3045 + $0x30] sm:$0xf]
        %v3059 = vld [vmem:[%s3045 + $0x34] sm:$0xf]
        %v3060 = vrot.slane %v2851, 1
        %v3075 = vunpack.c.l.b16 %v3046
        %v3076 = vunpack.c.l.b16 %v3047
        %v3077 = vunpack.c.l.b16 %v3048
        %v3078 = vunpack.c.l.b16 %v3049
        %v3079 = vunpack.c.l.b16 %v3050
        %v3080 = vunpack.c.l.b16 %v3051
        %v3081 = vunpack.c.l.b16 %v3052
        %v3082 = vunpack.c.l.b16 %v3053
        %v3083 = vunpack.c.l.b16 %v3054
        %v3084 = vunpack.c.l.b16 %v3055
        %v3085 = vunpack.c.l.b16 %v3056
        %v3086 = vunpack.c.l.b16 %v3057
        %v3087 = vunpack.c.l.b16 %v3058
        %v3088 = vunpack.c.l.b16 %v3059
        %v3089 = vpack.c.b16 %v3076, %v3075
        %v3090 = vpack.c.b16 %v3078, %v3077
        %v3091 = vpack.c.b16 %v3080, %v3079
        %v3092 = vpack.c.b16 %v3082, %v3081
        %v3093 = vpack.c.b16 %v3084, %v3083
        %v3094 = vpack.c.b16 %v3086, %v3085
        %v3095 = vpack.c.b16 %v3088, %v3087
        %v3104 = vsel %vm2895, %v3060, 0
        %3106 = vmatpush.bf16.msra.mxu0 0
        %3107 = vmatpush.bf16.msra.mxu0 %v3095
        %3108 = vmatpush.bf16.msra.mxu0 %v3094
        %3109 = vmatpush.bf16.msra.mxu0 %v3093
        %3110 = vmatpush.bf16.msra.mxu0 %v3092
        %3111 = vmatpush.bf16.msra.mxu0 %v3091
        %3112 = vmatpush.bf16.msra.mxu0 %v3090
        %3113 = vmatpush.bf16.msra.mxu0 %v3089
        %3114 = vmatmul.bf16.gmra.mxu0 %v3104
        %v3115 = vpop.f32.mrf.mxu0
        %v3116 = vadd.f32 0.0, %v3115
        %v3117 = vpop.f32.mrf.mxu0
        %3118 = vdwg.mxu0
        %v3119 = vadd.f32 %v3044, %v3116
        %v3120 = vld [vmem:[%s10] sm:$0x1]
        %v3121 = vadd.f32 %v3119, %v3120
        %v3122 = vmax.f32 %v3121, 0.0
        %v3123 = vpack.c.bf16 %v3122, %v3122
        %v3124 = vld [vmem:[%s11] sm:$0xf]
        %v3125 = vld [vmem:[%s11 + $0x4] sm:$0xf]
        %v3126 = vld [vmem:[%s11 + $0x8] sm:$0xf]
        %v3127 = vld [vmem:[%s11 + $0xc] sm:$0xf]
        %v3128 = vld [vmem:[%s11 + $0x10] sm:$0xf]
        %v3129 = vld [vmem:[%s11 + $0x14] sm:$0xf]
        %v3130 = vld [vmem:[%s11 + $0x18] sm:$0xf]
        %v3131 = vld [vmem:[%s11 + $0x1c] sm:$0xf]
        %v3132 = vld [vmem:[%s11 + $0x20] sm:$0xf]
        %v3133 = vld [vmem:[%s11 + $0x24] sm:$0xf]
        %v3134 = vld [vmem:[%s11 + $0x28] sm:$0xf]
        %v3135 = vld [vmem:[%s11 + $0x2c] sm:$0xf]
        %v3136 = vld [vmem:[%s11 + $0x30] sm:$0xf]
        %v3137 = vld [vmem:[%s11 + $0x34] sm:$0xf]
        %v3138 = vld [vmem:[%s11 + $0x38] sm:$0xf]
        %v3139 = vld [vmem:[%s11 + $0x3c] sm:$0xf]
        %v3140 = vld [vmem:[%s12] sm:$0x1]
        %v3157 = vunpack.c.l.b16 %v3124
        %v3158 = vunpack.c.l.b16 %v3125
        %v3159 = vunpack.c.l.b16 %v3126
        %v3160 = vunpack.c.l.b16 %v3127
        %v3161 = vunpack.c.l.b16 %v3128
        %v3162 = vunpack.c.l.b16 %v3129
        %v3163 = vunpack.c.l.b16 %v3130
        %v3164 = vunpack.c.l.b16 %v3131
        %v3165 = vunpack.c.l.b16 %v3132
        %v3166 = vunpack.c.l.b16 %v3133
        %v3167 = vunpack.c.l.b16 %v3134
        %v3168 = vunpack.c.l.b16 %v3135
        %v3169 = vunpack.c.l.b16 %v3136
        %v3170 = vunpack.c.l.b16 %v3137
        %v3171 = vunpack.c.l.b16 %v3138
        %v3172 = vunpack.c.l.b16 %v3139
        %v3173 = vpack.c.b16 %v3158, %v3157
        %v3174 = vpack.c.b16 %v3160, %v3159
        %v3175 = vpack.c.b16 %v3162, %v3161
        %v3176 = vpack.c.b16 %v3164, %v3163
        %v3177 = vpack.c.b16 %v3166, %v3165
        %v3178 = vpack.c.b16 %v3168, %v3167
        %v3179 = vpack.c.b16 %v3170, %v3169
        %v3180 = vpack.c.b16 %v3172, %v3171
        %3189 = vmatpush.bf16.msra.mxu0 %v3180
        %3190 = vmatpush.bf16.msra.mxu0 %v3179
        %3191 = vmatpush.bf16.msra.mxu0 %v3178
        %3192 = vmatpush.bf16.msra.mxu0 %v3177
        %3193 = vmatpush.bf16.msra.mxu0 %v3176
        %3194 = vmatpush.bf16.msra.mxu0 %v3175
        %3195 = vmatpush.bf16.msra.mxu0 %v3174
        %3196 = vmatpush.bf16.msra.mxu0 %v3173
        %3197 = vmatmul.bf16.gmra.mxu0 %v3123
        %v3198 = vpop.f32.mrf.mxu0
        %v3199 = vadd.f32 %v3140, %v3198
        %v3200 = vpop.f32.mrf.mxu0
        %3201 = vdwg.mxu0
        %v3202 = vmax.f32 %v3199, 0.0
        %v3203 = vpack.c.bf16 %v3202, %v3202
        %v3204 = vld [vmem:[%s13] sm:$0xf]
        %v3205 = vld [vmem:[%s13 + $0x4] sm:$0xf]
        %v3206 = vld [vmem:[%s13 + $0x8] sm:$0xf]
        %v3207 = vld [vmem:[%s13 + $0xc] sm:$0xf]
        %v3208 = vld [vmem:[%s13 + $0x10] sm:$0xf]
        %v3209 = vld [vmem:[%s13 + $0x14] sm:$0xf]
        %v3210 = vld [vmem:[%s13 + $0x18] sm:$0xf]
        %v3211 = vld [vmem:[%s13 + $0x1c] sm:$0xf]
        %v3212 = vld [vmem:[%s13 + $0x20] sm:$0xf]
        %v3213 = vld [vmem:[%s13 + $0x24] sm:$0xf]
        %v3214 = vld [vmem:[%s13 + $0x28] sm:$0xf]
        %v3215 = vld [vmem:[%s13 + $0x2c] sm:$0xf]
        %v3216 = vld [vmem:[%s13 + $0x30] sm:$0xf]
        %v3217 = vld [vmem:[%s13 + $0x34] sm:$0xf]
        %v3218 = vld [vmem:[%s13 + $0x38] sm:$0xf]
        %v3219 = vld [vmem:[%s13 + $0x3c] sm:$0xf]
        %v3220 = vld [vmem:[%s14] sm:$0x1]
        %v3237 = vunpack.c.l.b16 %v3204
        %v3238 = vunpack.c.l.b16 %v3205
        %v3239 = vunpack.c.l.b16 %v3206
        %v3240 = vunpack.c.l.b16 %v3207
        %v3241 = vunpack.c.l.b16 %v3208
        %v3242 = vunpack.c.l.b16 %v3209
        %v3243 = vunpack.c.l.b16 %v3210
        %v3244 = vunpack.c.l.b16 %v3211
        %v3245 = vunpack.c.l.b16 %v3212
        %v3246 = vunpack.c.l.b16 %v3213
        %v3247 = vunpack.c.l.b16 %v3214
        %v3248 = vunpack.c.l.b16 %v3215
        %v3249 = vunpack.c.l.b16 %v3216
        %v3250 = vunpack.c.l.b16 %v3217
        %v3251 = vunpack.c.l.b16 %v3218
        %v3252 = vunpack.c.l.b16 %v3219
        %v3253 = vpack.c.b16 %v3238, %v3237
        %v3254 = vpack.c.b16 %v3240, %v3239
        %v3255 = vpack.c.b16 %v3242, %v3241
        %v3256 = vpack.c.b16 %v3244, %v3243
        %v3257 = vpack.c.b16 %v3246, %v3245
        %v3258 = vpack.c.b16 %v3248, %v3247
        %v3259 = vpack.c.b16 %v3250, %v3249
        %v3260 = vpack.c.b16 %v3252, %v3251
        %3269 = vmatpush.bf16.msra.mxu0 %v3260
        %3270 = vmatpush.bf16.msra.mxu0 %v3259
        %3271 = vmatpush.bf16.msra.mxu0 %v3258
        %3272 = vmatpush.bf16.msra.mxu0 %v3257
        %3273 = vmatpush.bf16.msra.mxu0 %v3256
        %3274 = vmatpush.bf16.msra.mxu0 %v3255
        %3275 = vmatpush.bf16.msra.mxu0 %v3254
        %3276 = vmatpush.bf16.msra.mxu0 %v3253
        %3277 = vmatmul.bf16.gmra.mxu0 %v3203
        %v3278 = vpop.f32.mrf.mxu0
        %v3279 = vadd.f32 %v3220, %v3278
        %v3280 = vpop.f32.mrf.mxu0
        %3281 = vdwg.mxu0
        %3282 = vst [vmem:[%s486] sm:$0x1] %v3279
        %s3283 = sand.u32 %s357, 1
        %s3284 = scalar_lea.sflag [#allocation3], %s3283
        %s3285 = sand.u32 %s357, 1
        %s3286 = scalar_lea.vmem [#allocation2], %s3285
        // Predicated region
        $region81: #{neuralnet_forward.1} parent=79 // pred_check
          %p3287 = pneg %p367
        $region82: #{neuralnet_forward.1} parent=79 // pred_check_branch
          %3289 = sbr.rel (%p3287) target = $region84
        $region83: #{neuralnet_forward.1} parent=79 // pred_region
          %3291 = vsyncadd %s3284, 0
          %s3292 = scalar_lea.hbm %s15, %s29
          %s3294 = sshll.u32 %s3286, 4
          %s3295 = int_to_ptr.vmem [resolvable:$true] %s3294
          %s3296 = sshll.u32 %s3292, 4
          %s3297 = int_to_ptr.hbm [resolvable:$true] %s3296
          %3299 = dma.vmem_to_hbm [thread:$0]  %s3295, 16, %s3297, %s3284
        $region84: #{neuralnet_forward.1} parent=79 // pred_fallthru
          _
      $region80: #{neuralnet_forward.1} parent=5 // pred_fallthru
        _
      %p3300 = scmp.le.s32.totalorder 2, %s24
      // Predicated region
      $region85: #{neuralnet_forward.1} parent=5 // pred_check
        %p3301 = pneg %p3300
      $region86: #{neuralnet_forward.1} parent=5 // pred_check_branch
        %3303 = sbr.rel (%p3301) target = $region88
      $region87: #{neuralnet_forward.1} parent=5 // pred_region
        %s3304 = ssub.s32 %s24, 2
        // Predicated region
        $region89: #{neuralnet_forward.1} parent=87 // pred_check
          %p3305 = pneg %p373
        $region90: #{neuralnet_forward.1} parent=87 // pred_check_branch
          %3307 = sbr.rel (%p3305) target = $region92
        $region91: #{neuralnet_forward.1} parent=87 // pred_region
          %s3308 = sand.u32 %s358, 1
          %s3309 = scalar_lea.sflag [#allocation3], %s3308
          %s3310 = sand.u32 %s358, 1
          %s3311 = scalar_lea.vmem [#allocation2], %s3310
          %3313 = dma.done %s3309, 16
        $region92: #{neuralnet_forward.1} parent=87 // pred_fallthru
          _
      $region88: #{neuralnet_forward.1} parent=5 // pred_fallthru
        _
    $region6: #{neuralnet_forward.1} parent=1 // loop_footer
      %s28 = sadd.s32 1, %s24
    $region7: #{neuralnet_forward.1} parent=1 // loop_footer_branch
      %23 = sbr.rel target = $region3
    $region8: #{neuralnet_forward.1} parent=1 // loop_exit
      _
    %3314 = vsyncpa [#allocation3], 1
    %s3315 = scalar_lea.sflag [#allocation3], 1
    %3316 = vsyncpa %s3315, 1

</llo_original>
